<compile_context>
chip_gen: v6e
topology: v6e:2x2x1
jax: 0.10.0
libtpu: 0.0.40
codegen_flags: <defaults>
</compile_context>

<pallas_src>
import functools
import math

import numpy as np
import jax
import jax.numpy as jnp
from jax.experimental import pallas as pl
from jax.experimental.pallas import tpu as pltpu

LN_EPS = 1e-5  # nn.LayerNorm default


# ---------------------------------------------------------------------------
# In-kernel math helpers
# ---------------------------------------------------------------------------
def _erf(x):
    # Abramowitz & Stegun 7.1.26 polynomial erf (|err| < 1.5e-7 in f32), built
    # only from ops guaranteed to lower on the TPU VPU/EUP (abs/exp/mul/add).
    a1, a2, a3, a4, a5 = (0.254829592, -0.284496736, 1.421413741,
                          -1.453152027, 1.061405429)
    p = 0.3275911
    ax = jnp.abs(x)
    t = 1.0 / (1.0 + p * ax)
    poly = ((((a5 * t + a4) * t + a3) * t + a2) * t + a1) * t
    y = 1.0 - poly * jnp.exp(-ax * ax)
    return jnp.where(x >= 0, y, -y)


def _gelu_exact(x):
    # nn.GELU() default is the exact erf-based GELU.
    return 0.5 * x * (1.0 + _erf(x * (1.0 / math.sqrt(2.0))))


def _layernorm(x, w, b):
    mu = jnp.mean(x, axis=-1, keepdims=True)
    var = jnp.mean((x - mu) ** 2, axis=-1, keepdims=True)
    return (x - mu) * jax.lax.rsqrt(var + LN_EPS) * w + b


# ---------------------------------------------------------------------------
# Fully fused GPT kernel: all layers + final LN + tied logits, one invocation.
# Activations: (N, D) with N = B*T. Weights are stacked over layers (leading L
# dim) and pre-transposed as (in_features, out_features).
# ---------------------------------------------------------------------------
def _gpt_kernel(n_heads, seq_len,
                x_ref, bias_ref,
                ln1w, ln1b, wqkv, bqkv, wo, bo, ln2w, ln2b,
                w1, b1, w2, b2, lnfw, lnfb, emb_ref, o_ref):
    del seq_len  # mask already encodes the per-sequence block structure
    f32 = jnp.float32
    x = x_ref[...]                        # (N, D)
    bias = bias_ref[...]                  # (N, N) block-diagonal causal additive mask
    N, D = x.shape
    H = n_heads
    hd = D // H
    L = wqkv.shape[0]
    scale = 1.0 / math.sqrt(hd)

    for l in range(L):                    # static layer loop, all resident in VMEM
        # --- pre-LN + fused QKV: single (N,D)@(D,3D) MXU matmul ------------
        h = _layernorm(x, ln1w[l], ln1b[l])
        qkv = jnp.dot(h, wqkv[l], preferred_element_type=f32) + bqkv[l]   # (N, 3D)

        # --- head-major tensors (H, N, hd); batched attention over heads ---
        qh = jnp.stack([qkv[:, i * hd:(i + 1) * hd] for i in range(H)], axis=0)
        kh = jnp.stack([qkv[:, D + i * hd:D + (i + 1) * hd] for i in range(H)], axis=0)
        vh = jnp.stack([qkv[:, 2 * D + i * hd:2 * D + (i + 1) * hd] for i in range(H)], axis=0)

        s = jnp.einsum('hqd,hkd->hqk', qh, kh, preferred_element_type=f32) * scale
        s = s + bias                      # broadcast (N,N) over heads
        m = jnp.max(s, axis=-1, keepdims=True)
        e = jnp.exp(s - m)
        # exact reciprocal keeps the tight f32 check; approx=True would move it
        # to the (idle) EUP slot at larger T.
        p = e * pl.reciprocal(jnp.sum(e, axis=-1, keepdims=True), approx=False)
        o = jnp.einsum('hqk,hkd->hqd', p, vh, preferred_element_type=f32)  # (H, N, hd)
        attn = jnp.concatenate([o[i] for i in range(H)], axis=-1)           # (N, D)

        x = x + jnp.dot(attn, wo[l], preferred_element_type=f32) + bo[l]    # residual 1

        # --- pre-LN + GELU FFN ---------------------------------------------
        h2 = _layernorm(x, ln2w[l], ln2b[l])
        f = jnp.dot(h2, w1[l], preferred_element_type=f32) + b1[l]
        f = _gelu_exact(f)
        x = x + jnp.dot(f, w2[l], preferred_element_type=f32) + b2[l]       # residual 2

    # --- final LN + tied logits: contract against padded embedding's last axis
    # (trans_b semantics; no wrapper-side transpose). Output is lane-dense (Vpad).
    xn = _layernorm(x, lnfw[...], lnfb[...])
    o_ref[...] = jax.lax.dot_general(xn, emb_ref[...], (((1,), (1,)), ((), ())),
                                     preferred_element_type=f32)


# ---------------------------------------------------------------------------
# Full model forward (embedding gather is JAX glue; everything else is Pallas)
# ---------------------------------------------------------------------------
def gpt_forward(idx, params, n_heads):
    B, T = idx.shape
    V, D = params['tok_emb'].shape
    N = B * T
    Vpad = ((V + 127) // 128) * 128       # lane-dense logits output width

    # Embedding gather + positional add (JAX glue; gather has no hot Pallas path).
    x = jnp.take(params['tok_emb'], idx, axis=0) + params['pos_emb'][:T]
    x2 = x.reshape(N, D)

    # Block-diagonal causal additive bias over the flattened (B*T) sequence,
    # built once at trace time with numpy (shapes are static under jit).
    r = np.arange(N)
    allowed = (r[:, None] // T == r[None, :] // T) & (r[:, None] >= r[None, :])
    attn_bias = jnp.asarray(np.where(allowed, 0.0, -1e30), dtype=jnp.float32)

    # Zero-pad the tied embedding to Vpad rows so the logits store is lane-dense.
    emb_pad = jnp.pad(params['tok_emb'], ((0, Vpad - V), (0, 0)))

    weights = (params['ln1_w'], params['ln1_b'], params['wqkv'], params['bqkv'],
               params['wo'], params['bo'], params['ln2_w'], params['ln2_b'],
               params['w1'], params['b1'], params['w2'], params['b2'],
               params['lnf_w'], params['lnf_b'])

    n_inputs = 2 + len(weights) + 1
    logits = pl.pallas_call(
        functools.partial(_gpt_kernel, n_heads, T),
        out_shape=jax.ShapeDtypeStruct((N, Vpad), jnp.float32),
        in_specs=[pl.BlockSpec(memory_space=pltpu.MemorySpace.VMEM)
                  for _ in range(n_inputs)],
        out_specs=pl.BlockSpec(memory_space=pltpu.MemorySpace.VMEM),
    )(x2, attn_bias, *weights, emb_pad)

    return logits.reshape(B, T, Vpad)[:, :, :V]


# ---------------------------------------------------------------------------
# Deterministic synthetic parameter init (weights packed/stacked ONCE here)
# ---------------------------------------------------------------------------
def _init_block(key, d):
    ks = jax.random.split(key, 16)
    n = lambda k, shp, s: s * jax.random.normal(k, shp, jnp.float32)
    wq, wk, wv = n(ks[2], (d, d), 0.05), n(ks[4], (d, d), 0.05), n(ks[6], (d, d), 0.05)
    bq, bk, bv = n(ks[3], (1, d), 0.02), n(ks[5], (1, d), 0.02), n(ks[7], (1, d), 0.02)
    return {
        'ln1_w': 1.0 + n(ks[0], (1, d), 0.05),
        'ln1_b': n(ks[1], (1, d), 0.05),
        'wqkv': jnp.concatenate([wq, wk, wv], axis=1),     # (D, 3D)
        'bqkv': jnp.concatenate([bq, bk, bv], axis=1),     # (1, 3D)
        'wo': n(ks[8], (d, d), 0.05), 'bo': n(ks[9], (1, d), 0.02),
        'ln2_w': 1.0 + n(ks[10], (1, d), 0.05),
        'ln2_b': n(ks[11], (1, d), 0.05),
        'w1': n(ks[12], (d, 2 * d), 0.05), 'b1': n(ks[13], (1, 2 * d), 0.02),
        'w2': n(ks[14], (2 * d, d), 0.05), 'b2': n(ks[15], (1, d), 0.02),
    }


def init_params(key, vocab_size, context_size, d_model, n_layers):
    keys = jax.random.split(key, 4 + n_layers)
    blocks = [_init_block(keys[4 + i], d_model) for i in range(n_layers)]
    stacked = {k: jnp.stack([b[k] for b in blocks], axis=0) for k in blocks[0]}
    return {
        'tok_emb': 0.05 * jax.random.normal(keys[0], (vocab_size, d_model), jnp.float32),
        'pos_emb': 0.05 * jax.random.normal(keys[1], (context_size, d_model), jnp.float32),
        'lnf_w': 1.0 + 0.05 * jax.random.normal(keys[2], (1, d_model), jnp.float32),
        'lnf_b': 0.05 * jax.random.normal(keys[3], (1, d_model), jnp.float32),
        **stacked,
    }


# ---------------------------------------------------------------------------
# Pure-JAX reference (mirrors the PyTorch forward) for a correctness check
# ---------------------------------------------------------------------------
def reference_forward(idx, params, n_heads):
    B, T = idx.shape
    x = jnp.take(params['tok_emb'], idx, axis=0) + params['pos_emb'][:T]
    D = x.shape[-1]
    hd = D // n_heads
    causal = jnp.tril(jnp.ones((T, T), bool))
    L = params['wqkv'].shape[0]
    for l in range(L):
        h = _layernorm(x, params['ln1_w'][l], params['ln1_b'][l])
        qkv = h @ params['wqkv'][l] + params['bqkv'][l]
        q, k, v = qkv[..., :D], qkv[..., D:2 * D], qkv[..., 2 * D:]
        qh = q.reshape(B, T, n_heads, hd).transpose(0, 2, 1, 3)
        kh = k.reshape(B, T, n_heads, hd).transpose(0, 2, 1, 3)
        vh = v.reshape(B, T, n_heads, hd).transpose(0, 2, 1, 3)
        s = jnp.einsum('bhqd,bhkd->bhqk', qh, kh) / math.sqrt(hd)
        s = jnp.where(causal, s, -jnp.inf)
        a = jax.nn.softmax(s, axis=-1)
        o = jnp.einsum('bhqk,bhkd->bhqd', a, vh)
        o = o.transpose(0, 2, 1, 3).reshape(B, T, D)
        x = x + o @ params['wo'][l] + params['bo'][l]
        h2 = _layernorm(x, params['ln2_w'][l], params['ln2_b'][l])
        f = jax.nn.gelu(h2 @ params['w1'][l] + params['b1'][l], approximate=False)
        x = x + f @ params['w2'][l] + params['b2'][l]
    x = _layernorm(x, params['lnf_w'], params['lnf_b'])
    return x @ params['tok_emb'].T


# ---------------------------------------------------------------------------
if __name__ == "__main__":
    # Small shapes consistent with the module (module defaults: d_model=128,
    # n_heads=4; we shrink vocab / context / layers / batch / seq).
    vocab_size, context_size, d_model, n_layers, n_heads = 32, 16, 128, 2, 4
    B, T = 2, 8

    key = jax.random.PRNGKey(0)
    pkey, ikey = jax.random.split(key)
    params = init_params(pkey, vocab_size, context_size, d_model, n_layers)
    idx = jax.random.randint(ikey, (B, T), 0, vocab_size, dtype=jnp.int32)

    fwd = jax.jit(gpt_forward, static_argnums=(2,))
    logits = jax.block_until_ready(fwd(idx, params, n_heads))
    assert logits.shape == (B, T, vocab_size)

    ref = reference_forward(idx, params, n_heads)
    max_err = float(jnp.max(jnp.abs(logits - ref)))
    assert max_err < 2e-3, f"mismatch vs reference: {max_err}"

    print("KERNEL_OK")
</pallas_src>

<mosaic_0001>
module attributes {stable_mosaic.version = 11 : i64} {
  func.func @_gpt_kernel(%arg0: memref<16x128xf32, #tpu.memory_space<vmem>>, %arg1: memref<16x16xf32, #tpu.memory_space<vmem>>, %arg2: memref<2x1x128xf32, #tpu.memory_space<vmem>>, %arg3: memref<2x1x128xf32, #tpu.memory_space<vmem>>, %arg4: memref<2x128x384xf32, #tpu.memory_space<vmem>>, %arg5: memref<2x1x384xf32, #tpu.memory_space<vmem>>, %arg6: memref<2x128x128xf32, #tpu.memory_space<vmem>>, %arg7: memref<2x1x128xf32, #tpu.memory_space<vmem>>, %arg8: memref<2x1x128xf32, #tpu.memory_space<vmem>>, %arg9: memref<2x1x128xf32, #tpu.memory_space<vmem>>, %arg10: memref<2x128x256xf32, #tpu.memory_space<vmem>>, %arg11: memref<2x1x256xf32, #tpu.memory_space<vmem>>, %arg12: memref<2x256x128xf32, #tpu.memory_space<vmem>>, %arg13: memref<2x1x128xf32, #tpu.memory_space<vmem>>, %arg14: memref<1x128xf32, #tpu.memory_space<vmem>>, %arg15: memref<1x128xf32, #tpu.memory_space<vmem>>, %arg16: memref<128x128xf32, #tpu.memory_space<vmem>>, %arg17: memref<16x128xf32, #tpu.memory_space<vmem>>) attributes {dimension_semantics = [], scalar_prefetch = 0 : i64, scratch_operands = 0 : i64, tpu.core_type = #tpu.core_type<tc>} {
    %c0 = arith.constant 0 : index
    %c0_0 = arith.constant 0 : index
    %0 = vector.load %arg0[%c0, %c0_0] : memref<16x128xf32, #tpu.memory_space<vmem>>, vector<16x128xf32>
    %c0_1 = arith.constant 0 : index
    %c0_2 = arith.constant 0 : index
    %1 = vector.load %arg1[%c0_1, %c0_2] : memref<16x16xf32, #tpu.memory_space<vmem>>, vector<16x16xf32>
    %c0_3 = arith.constant 0 : index
    %c0_4 = arith.constant 0 : index
    %c0_5 = arith.constant 0 : index
    %2 = vector.load %arg2[%c0_3, %c0_4, %c0_5] : memref<2x1x128xf32, #tpu.memory_space<vmem>>, vector<1x1x128xf32>
    %3 = vector.shape_cast %2 : vector<1x1x128xf32> to vector<1x128xf32>
    %c0_6 = arith.constant 0 : index
    %c0_7 = arith.constant 0 : index
    %c0_8 = arith.constant 0 : index
    %4 = vector.load %arg3[%c0_6, %c0_7, %c0_8] : memref<2x1x128xf32, #tpu.memory_space<vmem>>, vector<1x1x128xf32>
    %5 = vector.shape_cast %4 : vector<1x1x128xf32> to vector<1x128xf32>
    %cst = arith.constant dense<0.000000e+00> : vector<16xf32>
    %6 = vector.multi_reduction <add>, %0, %cst [1] : vector<16x128xf32> to vector<16xf32>
    %7 = vector.shape_cast %6 : vector<16xf32> to vector<16x1xf32>
    %cst_9 = arith.constant 1.280000e+02 : f32
    %8 = vector.broadcast %cst_9 : f32 to vector<16x1xf32>
    %9 = arith.divf %7, %8 : vector<16x1xf32>
    %10 = vector.broadcast %9 : vector<16x1xf32> to vector<16x128xf32>
    %11 = arith.subf %0, %10 : vector<16x128xf32>
    %12 = arith.mulf %11, %11 : vector<16x128xf32>
    %cst_10 = arith.constant dense<0.000000e+00> : vector<16xf32>
    %13 = vector.multi_reduction <add>, %12, %cst_10 [1] : vector<16x128xf32> to vector<16xf32>
    %14 = vector.shape_cast %13 : vector<16xf32> to vector<16x1xf32>
    %cst_11 = arith.constant 1.280000e+02 : f32
    %15 = vector.broadcast %cst_11 : f32 to vector<16x1xf32>
    %16 = arith.divf %14, %15 : vector<16x1xf32>
    %17 = vector.broadcast %9 : vector<16x1xf32> to vector<16x128xf32>
    %18 = arith.subf %0, %17 : vector<16x128xf32>
    %cst_12 = arith.constant 9.99999974E-6 : f32
    %19 = vector.broadcast %cst_12 : f32 to vector<16x1xf32>
    %20 = arith.addf %16, %19 : vector<16x1xf32>
    %21 = math.rsqrt %20 : vector<16x1xf32>
    %22 = vector.broadcast %21 : vector<16x1xf32> to vector<16x128xf32>
    %23 = arith.mulf %18, %22 : vector<16x128xf32>
    %24 = vector.broadcast %3 : vector<1x128xf32> to vector<16x128xf32>
    %25 = arith.mulf %23, %24 : vector<16x128xf32>
    %26 = vector.broadcast %5 : vector<1x128xf32> to vector<16x128xf32>
    %27 = arith.addf %25, %26 : vector<16x128xf32>
    %c0_13 = arith.constant 0 : index
    %c0_14 = arith.constant 0 : index
    %c0_15 = arith.constant 0 : index
    %28 = vector.load %arg4[%c0_13, %c0_14, %c0_15] : memref<2x128x384xf32, #tpu.memory_space<vmem>>, vector<1x128x384xf32>
    %29 = vector.shape_cast %28 : vector<1x128x384xf32> to vector<128x384xf32>
    %cst_16 = arith.constant dense<0.000000e+00> : vector<16x384xf32>
    %30 = tpu.matmul %27, %29, %cst_16 {dimension_numbers = #tpu.dot_dimension_numbers<[1], [0], [0], [1], [0, 0, 1, 1], [], []>} : vector<16x128xf32>, vector<128x384xf32>, vector<16x384xf32> -> vector<16x384xf32>
    %c0_17 = arith.constant 0 : index
    %c0_18 = arith.constant 0 : index
    %c0_19 = arith.constant 0 : index
    %31 = vector.load %arg5[%c0_17, %c0_18, %c0_19] : memref<2x1x384xf32, #tpu.memory_space<vmem>>, vector<1x1x384xf32>
    %32 = vector.shape_cast %31 : vector<1x1x384xf32> to vector<1x384xf32>
    %33 = vector.broadcast %32 : vector<1x384xf32> to vector<16x384xf32>
    %34 = arith.addf %30, %33 : vector<16x384xf32>
    %35 = vector.extract_strided_slice %34 {offsets = [0, 0], sizes = [16, 32], strides = [1, 1]} : vector<16x384xf32> to vector<16x32xf32>
    %36 = vector.extract_strided_slice %34 {offsets = [0, 32], sizes = [16, 32], strides = [1, 1]} : vector<16x384xf32> to vector<16x32xf32>
    %37 = vector.extract_strided_slice %34 {offsets = [0, 64], sizes = [16, 32], strides = [1, 1]} : vector<16x384xf32> to vector<16x32xf32>
    %38 = vector.extract_strided_slice %34 {offsets = [0, 96], sizes = [16, 32], strides = [1, 1]} : vector<16x384xf32> to vector<16x32xf32>
    %39 = vector.shape_cast %35 : vector<16x32xf32> to vector<1x16x32xf32>
    %40 = vector.shape_cast %36 : vector<16x32xf32> to vector<1x16x32xf32>
    %41 = vector.shape_cast %37 : vector<16x32xf32> to vector<1x16x32xf32>
    %42 = vector.shape_cast %38 : vector<16x32xf32> to vector<1x16x32xf32>
    %43 = tpu.concatenate %39, %40, %41, %42 in 0 : vector<1x16x32xf32>, vector<1x16x32xf32>, vector<1x16x32xf32>, vector<1x16x32xf32> -> vector<4x16x32xf32>
    %44 = vector.extract_strided_slice %34 {offsets = [0, 128], sizes = [16, 32], strides = [1, 1]} : vector<16x384xf32> to vector<16x32xf32>
    %45 = vector.extract_strided_slice %34 {offsets = [0, 160], sizes = [16, 32], strides = [1, 1]} : vector<16x384xf32> to vector<16x32xf32>
    %46 = vector.extract_strided_slice %34 {offsets = [0, 192], sizes = [16, 32], strides = [1, 1]} : vector<16x384xf32> to vector<16x32xf32>
    %47 = vector.extract_strided_slice %34 {offsets = [0, 224], sizes = [16, 32], strides = [1, 1]} : vector<16x384xf32> to vector<16x32xf32>
    %48 = vector.shape_cast %44 : vector<16x32xf32> to vector<1x16x32xf32>
    %49 = vector.shape_cast %45 : vector<16x32xf32> to vector<1x16x32xf32>
    %50 = vector.shape_cast %46 : vector<16x32xf32> to vector<1x16x32xf32>
    %51 = vector.shape_cast %47 : vector<16x32xf32> to vector<1x16x32xf32>
    %52 = tpu.concatenate %48, %49, %50, %51 in 0 : vector<1x16x32xf32>, vector<1x16x32xf32>, vector<1x16x32xf32>, vector<1x16x32xf32> -> vector<4x16x32xf32>
    %53 = vector.extract_strided_slice %34 {offsets = [0, 256], sizes = [16, 32], strides = [1, 1]} : vector<16x384xf32> to vector<16x32xf32>
    %54 = vector.extract_strided_slice %34 {offsets = [0, 288], sizes = [16, 32], strides = [1, 1]} : vector<16x384xf32> to vector<16x32xf32>
    %55 = vector.extract_strided_slice %34 {offsets = [0, 320], sizes = [16, 32], strides = [1, 1]} : vector<16x384xf32> to vector<16x32xf32>
    %56 = vector.extract_strided_slice %34 {offsets = [0, 352], sizes = [16, 32], strides = [1, 1]} : vector<16x384xf32> to vector<16x32xf32>
    %57 = vector.shape_cast %53 : vector<16x32xf32> to vector<1x16x32xf32>
    %58 = vector.shape_cast %54 : vector<16x32xf32> to vector<1x16x32xf32>
    %59 = vector.shape_cast %55 : vector<16x32xf32> to vector<1x16x32xf32>
    %60 = vector.shape_cast %56 : vector<16x32xf32> to vector<1x16x32xf32>
    %61 = tpu.concatenate %57, %58, %59, %60 in 0 : vector<1x16x32xf32>, vector<1x16x32xf32>, vector<1x16x32xf32>, vector<1x16x32xf32> -> vector<4x16x32xf32>
    "tpu.trace_start"() <{level = 10 : i32, message = "hqd,hkd->hqk"}> : () -> ()
    %cst_20 = arith.constant dense<0.000000e+00> : vector<4x16x16xf32>
    %62 = tpu.matmul %43, %52, %cst_20 {dimension_numbers = #tpu.dot_dimension_numbers<[2], [2], [1], [1], [0, 0, 0, 1, 1, 1], [0], [0]>} : vector<4x16x32xf32>, vector<4x16x32xf32>, vector<4x16x16xf32> -> vector<4x16x16xf32>
    "tpu.trace_stop"() : () -> ()
    %cst_21 = arith.constant 0.176776692 : f32
    %63 = vector.broadcast %cst_21 : f32 to vector<4x16x16xf32>
    %64 = arith.mulf %62, %63 : vector<4x16x16xf32>
    %65 = vector.shape_cast %1 : vector<16x16xf32> to vector<1x16x16xf32>
    %66 = vector.broadcast %65 : vector<1x16x16xf32> to vector<4x16x16xf32>
    %67 = arith.addf %64, %66 : vector<4x16x16xf32>
    %cst_22 = arith.constant dense<0xFF800000> : vector<4x16xf32>
    %68 = vector.multi_reduction <maximumf>, %67, %cst_22 [2] : vector<4x16x16xf32> to vector<4x16xf32>
    %69 = vector.shape_cast %68 : vector<4x16xf32> to vector<4x16x1xf32>
    %70 = vector.broadcast %69 : vector<4x16x1xf32> to vector<4x16x16xf32>
    %71 = arith.subf %67, %70 : vector<4x16x16xf32>
    %72 = math.exp %71 : vector<4x16x16xf32>
    %cst_23 = arith.constant dense<0.000000e+00> : vector<4x16xf32>
    %73 = vector.multi_reduction <add>, %72, %cst_23 [2] : vector<4x16x16xf32> to vector<4x16xf32>
    %74 = vector.shape_cast %73 : vector<4x16xf32> to vector<4x16x1xf32>
    %75 = tpu.reciprocal %74 : vector<4x16x1xf32> -> vector<4x16x1xf32>
    %76 = vector.broadcast %75 : vector<4x16x1xf32> to vector<4x16x16xf32>
    %77 = arith.mulf %72, %76 : vector<4x16x16xf32>
    "tpu.trace_start"() <{level = 10 : i32, message = "hqk,hkd->hqd"}> : () -> ()
    %cst_24 = arith.constant dense<0.000000e+00> : vector<4x16x32xf32>
    %78 = tpu.matmul %77, %61, %cst_24 {dimension_numbers = #tpu.dot_dimension_numbers<[2], [1], [1], [2], [0, 0, 0, 1, 1, 2], [0], [0]>} : vector<4x16x16xf32>, vector<4x16x32xf32>, vector<4x16x32xf32> -> vector<4x16x32xf32>
    "tpu.trace_stop"() : () -> ()
    %79 = vector.extract_strided_slice %78 {offsets = [0, 0, 0], sizes = [1, 16, 32], strides = [1, 1, 1]} : vector<4x16x32xf32> to vector<1x16x32xf32>
    %80 = vector.shape_cast %79 : vector<1x16x32xf32> to vector<16x32xf32>
    %81 = vector.extract_strided_slice %78 {offsets = [1, 0, 0], sizes = [1, 16, 32], strides = [1, 1, 1]} : vector<4x16x32xf32> to vector<1x16x32xf32>
    %82 = vector.shape_cast %81 : vector<1x16x32xf32> to vector<16x32xf32>
    %83 = vector.extract_strided_slice %78 {offsets = [2, 0, 0], sizes = [1, 16, 32], strides = [1, 1, 1]} : vector<4x16x32xf32> to vector<1x16x32xf32>
    %84 = vector.shape_cast %83 : vector<1x16x32xf32> to vector<16x32xf32>
    %85 = vector.extract_strided_slice %78 {offsets = [3, 0, 0], sizes = [1, 16, 32], strides = [1, 1, 1]} : vector<4x16x32xf32> to vector<1x16x32xf32>
    %86 = vector.shape_cast %85 : vector<1x16x32xf32> to vector<16x32xf32>
    %87 = tpu.concatenate %80, %82, %84, %86 in 1 : vector<16x32xf32>, vector<16x32xf32>, vector<16x32xf32>, vector<16x32xf32> -> vector<16x128xf32>
    %c0_25 = arith.constant 0 : index
    %c0_26 = arith.constant 0 : index
    %c0_27 = arith.constant 0 : index
    %88 = vector.load %arg6[%c0_25, %c0_26, %c0_27] : memref<2x128x128xf32, #tpu.memory_space<vmem>>, vector<1x128x128xf32>
    %89 = vector.shape_cast %88 : vector<1x128x128xf32> to vector<128x128xf32>
    %cst_28 = arith.constant dense<0.000000e+00> : vector<16x128xf32>
    %90 = tpu.matmul %87, %89, %cst_28 {dimension_numbers = #tpu.dot_dimension_numbers<[1], [0], [0], [1], [0, 0, 1, 1], [], []>} : vector<16x128xf32>, vector<128x128xf32>, vector<16x128xf32> -> vector<16x128xf32>
    %91 = arith.addf %0, %90 : vector<16x128xf32>
    %c0_29 = arith.constant 0 : index
    %c0_30 = arith.constant 0 : index
    %c0_31 = arith.constant 0 : index
    %92 = vector.load %arg7[%c0_29, %c0_30, %c0_31] : memref<2x1x128xf32, #tpu.memory_space<vmem>>, vector<1x1x128xf32>
    %93 = vector.shape_cast %92 : vector<1x1x128xf32> to vector<1x128xf32>
    %94 = vector.broadcast %93 : vector<1x128xf32> to vector<16x128xf32>
    %95 = arith.addf %91, %94 : vector<16x128xf32>
    %c0_32 = arith.constant 0 : index
    %c0_33 = arith.constant 0 : index
    %c0_34 = arith.constant 0 : index
    %96 = vector.load %arg8[%c0_32, %c0_33, %c0_34] : memref<2x1x128xf32, #tpu.memory_space<vmem>>, vector<1x1x128xf32>
    %97 = vector.shape_cast %96 : vector<1x1x128xf32> to vector<1x128xf32>
    %c0_35 = arith.constant 0 : index
    %c0_36 = arith.constant 0 : index
    %c0_37 = arith.constant 0 : index
    %98 = vector.load %arg9[%c0_35, %c0_36, %c0_37] : memref<2x1x128xf32, #tpu.memory_space<vmem>>, vector<1x1x128xf32>
    %99 = vector.shape_cast %98 : vector<1x1x128xf32> to vector<1x128xf32>
    %cst_38 = arith.constant dense<0.000000e+00> : vector<16xf32>
    %100 = vector.multi_reduction <add>, %95, %cst_38 [1] : vector<16x128xf32> to vector<16xf32>
    %101 = vector.shape_cast %100 : vector<16xf32> to vector<16x1xf32>
    %cst_39 = arith.constant 1.280000e+02 : f32
    %102 = vector.broadcast %cst_39 : f32 to vector<16x1xf32>
    %103 = arith.divf %101, %102 : vector<16x1xf32>
    %104 = vector.broadcast %103 : vector<16x1xf32> to vector<16x128xf32>
    %105 = arith.subf %95, %104 : vector<16x128xf32>
    %106 = arith.mulf %105, %105 : vector<16x128xf32>
    %cst_40 = arith.constant dense<0.000000e+00> : vector<16xf32>
    %107 = vector.multi_reduction <add>, %106, %cst_40 [1] : vector<16x128xf32> to vector<16xf32>
    %108 = vector.shape_cast %107 : vector<16xf32> to vector<16x1xf32>
    %cst_41 = arith.constant 1.280000e+02 : f32
    %109 = vector.broadcast %cst_41 : f32 to vector<16x1xf32>
    %110 = arith.divf %108, %109 : vector<16x1xf32>
    %111 = vector.broadcast %103 : vector<16x1xf32> to vector<16x128xf32>
    %112 = arith.subf %95, %111 : vector<16x128xf32>
    %cst_42 = arith.constant 9.99999974E-6 : f32
    %113 = vector.broadcast %cst_42 : f32 to vector<16x1xf32>
    %114 = arith.addf %110, %113 : vector<16x1xf32>
    %115 = math.rsqrt %114 : vector<16x1xf32>
    %116 = vector.broadcast %115 : vector<16x1xf32> to vector<16x128xf32>
    %117 = arith.mulf %112, %116 : vector<16x128xf32>
    %118 = vector.broadcast %97 : vector<1x128xf32> to vector<16x128xf32>
    %119 = arith.mulf %117, %118 : vector<16x128xf32>
    %120 = vector.broadcast %99 : vector<1x128xf32> to vector<16x128xf32>
    %121 = arith.addf %119, %120 : vector<16x128xf32>
    %c0_43 = arith.constant 0 : index
    %c0_44 = arith.constant 0 : index
    %c0_45 = arith.constant 0 : index
    %122 = vector.load %arg10[%c0_43, %c0_44, %c0_45] : memref<2x128x256xf32, #tpu.memory_space<vmem>>, vector<1x128x256xf32>
    %123 = vector.shape_cast %122 : vector<1x128x256xf32> to vector<128x256xf32>
    %cst_46 = arith.constant dense<0.000000e+00> : vector<16x256xf32>
    %124 = tpu.matmul %121, %123, %cst_46 {dimension_numbers = #tpu.dot_dimension_numbers<[1], [0], [0], [1], [0, 0, 1, 1], [], []>} : vector<16x128xf32>, vector<128x256xf32>, vector<16x256xf32> -> vector<16x256xf32>
    %c0_47 = arith.constant 0 : index
    %c0_48 = arith.constant 0 : index
    %c0_49 = arith.constant 0 : index
    %125 = vector.load %arg11[%c0_47, %c0_48, %c0_49] : memref<2x1x256xf32, #tpu.memory_space<vmem>>, vector<1x1x256xf32>
    %126 = vector.shape_cast %125 : vector<1x1x256xf32> to vector<1x256xf32>
    %127 = vector.broadcast %126 : vector<1x256xf32> to vector<16x256xf32>
    %128 = arith.addf %124, %127 : vector<16x256xf32>
    %cst_50 = arith.constant 5.000000e-01 : f32
    %129 = vector.broadcast %cst_50 : f32 to vector<16x256xf32>
    %130 = arith.mulf %129, %128 : vector<16x256xf32>
    %cst_51 = arith.constant 0.707106769 : f32
    %131 = vector.broadcast %cst_51 : f32 to vector<16x256xf32>
    %132 = arith.mulf %128, %131 : vector<16x256xf32>
    %133 = math.absf %132 : vector<16x256xf32>
    %cst_52 = arith.constant 0.327591091 : f32
    %134 = vector.broadcast %cst_52 : f32 to vector<16x256xf32>
    %135 = arith.mulf %134, %133 : vector<16x256xf32>
    %cst_53 = arith.constant 1.000000e+00 : f32
    %136 = vector.broadcast %cst_53 : f32 to vector<16x256xf32>
    %137 = arith.addf %136, %135 : vector<16x256xf32>
    %cst_54 = arith.constant 1.000000e+00 : f32
    %138 = vector.broadcast %cst_54 : f32 to vector<16x256xf32>
    %139 = arith.divf %138, %137 : vector<16x256xf32>
    %cst_55 = arith.constant 1.06140542 : f32
    %140 = vector.broadcast %cst_55 : f32 to vector<16x256xf32>
    %141 = arith.mulf %140, %139 : vector<16x256xf32>
    %cst_56 = arith.constant -1.45315206 : f32
    %142 = vector.broadcast %cst_56 : f32 to vector<16x256xf32>
    %143 = arith.addf %141, %142 : vector<16x256xf32>
    %144 = arith.mulf %143, %139 : vector<16x256xf32>
    %cst_57 = arith.constant 1.42141378 : f32
    %145 = vector.broadcast %cst_57 : f32 to vector<16x256xf32>
    %146 = arith.addf %144, %145 : vector<16x256xf32>
    %147 = arith.mulf %146, %139 : vector<16x256xf32>
    %cst_58 = arith.constant -0.284496725 : f32
    %148 = vector.broadcast %cst_58 : f32 to vector<16x256xf32>
    %149 = arith.addf %147, %148 : vector<16x256xf32>
    %150 = arith.mulf %149, %139 : vector<16x256xf32>
    %cst_59 = arith.constant 0.254829586 : f32
    %151 = vector.broadcast %cst_59 : f32 to vector<16x256xf32>
    %152 = arith.addf %150, %151 : vector<16x256xf32>
    %153 = arith.mulf %152, %139 : vector<16x256xf32>
    %cst_60 = arith.constant 0.000000e+00 : f32
    %154 = vector.broadcast %cst_60 : f32 to vector<16x256xf32>
    %155 = arith.subf %154, %133 : vector<16x256xf32>
    %156 = arith.mulf %155, %133 : vector<16x256xf32>
    %157 = math.exp %156 : vector<16x256xf32>
    %158 = arith.mulf %153, %157 : vector<16x256xf32>
    %cst_61 = arith.constant 1.000000e+00 : f32
    %159 = vector.broadcast %cst_61 : f32 to vector<16x256xf32>
    %160 = arith.subf %159, %158 : vector<16x256xf32>
    %cst_62 = arith.constant 0.000000e+00 : f32
    %161 = vector.broadcast %cst_62 : f32 to vector<16x256xf32>
    %162 = arith.cmpf oge, %132, %161 : vector<16x256xf32>
    %cst_63 = arith.constant 0.000000e+00 : f32
    %163 = vector.broadcast %cst_63 : f32 to vector<16x256xf32>
    %164 = arith.subf %163, %160 : vector<16x256xf32>
    %165 = arith.select %162, %160, %164 : vector<16x256xi1>, vector<16x256xf32>
    %cst_64 = arith.constant 1.000000e+00 : f32
    %166 = vector.broadcast %cst_64 : f32 to vector<16x256xf32>
    %167 = arith.addf %166, %165 : vector<16x256xf32>
    %168 = arith.mulf %130, %167 : vector<16x256xf32>
    %c0_65 = arith.constant 0 : index
    %c0_66 = arith.constant 0 : index
    %c0_67 = arith.constant 0 : index
    %169 = vector.load %arg12[%c0_65, %c0_66, %c0_67] : memref<2x256x128xf32, #tpu.memory_space<vmem>>, vector<1x256x128xf32>
    %170 = vector.shape_cast %169 : vector<1x256x128xf32> to vector<256x128xf32>
    %cst_68 = arith.constant dense<0.000000e+00> : vector<16x128xf32>
    %171 = tpu.matmul %168, %170, %cst_68 {dimension_numbers = #tpu.dot_dimension_numbers<[1], [0], [0], [1], [0, 0, 1, 1], [], []>} : vector<16x256xf32>, vector<256x128xf32>, vector<16x128xf32> -> vector<16x128xf32>
    %172 = arith.addf %95, %171 : vector<16x128xf32>
    %c0_69 = arith.constant 0 : index
    %c0_70 = arith.constant 0 : index
    %c0_71 = arith.constant 0 : index
    %173 = vector.load %arg13[%c0_69, %c0_70, %c0_71] : memref<2x1x128xf32, #tpu.memory_space<vmem>>, vector<1x1x128xf32>
    %174 = vector.shape_cast %173 : vector<1x1x128xf32> to vector<1x128xf32>
    %175 = vector.broadcast %174 : vector<1x128xf32> to vector<16x128xf32>
    %176 = arith.addf %172, %175 : vector<16x128xf32>
    %c1 = arith.constant 1 : index
    %c0_72 = arith.constant 0 : index
    %c0_73 = arith.constant 0 : index
    %177 = vector.load %arg2[%c1, %c0_72, %c0_73] : memref<2x1x128xf32, #tpu.memory_space<vmem>>, vector<1x1x128xf32>
    %178 = vector.shape_cast %177 : vector<1x1x128xf32> to vector<1x128xf32>
    %c1_74 = arith.constant 1 : index
    %c0_75 = arith.constant 0 : index
    %c0_76 = arith.constant 0 : index
    %179 = vector.load %arg3[%c1_74, %c0_75, %c0_76] : memref<2x1x128xf32, #tpu.memory_space<vmem>>, vector<1x1x128xf32>
    %180 = vector.shape_cast %179 : vector<1x1x128xf32> to vector<1x128xf32>
    %cst_77 = arith.constant dense<0.000000e+00> : vector<16xf32>
    %181 = vector.multi_reduction <add>, %176, %cst_77 [1] : vector<16x128xf32> to vector<16xf32>
    %182 = vector.shape_cast %181 : vector<16xf32> to vector<16x1xf32>
    %cst_78 = arith.constant 1.280000e+02 : f32
    %183 = vector.broadcast %cst_78 : f32 to vector<16x1xf32>
    %184 = arith.divf %182, %183 : vector<16x1xf32>
    %185 = vector.broadcast %184 : vector<16x1xf32> to vector<16x128xf32>
    %186 = arith.subf %176, %185 : vector<16x128xf32>
    %187 = arith.mulf %186, %186 : vector<16x128xf32>
    %cst_79 = arith.constant dense<0.000000e+00> : vector<16xf32>
    %188 = vector.multi_reduction <add>, %187, %cst_79 [1] : vector<16x128xf32> to vector<16xf32>
    %189 = vector.shape_cast %188 : vector<16xf32> to vector<16x1xf32>
    %cst_80 = arith.constant 1.280000e+02 : f32
    %190 = vector.broadcast %cst_80 : f32 to vector<16x1xf32>
    %191 = arith.divf %189, %190 : vector<16x1xf32>
    %192 = vector.broadcast %184 : vector<16x1xf32> to vector<16x128xf32>
    %193 = arith.subf %176, %192 : vector<16x128xf32>
    %cst_81 = arith.constant 9.99999974E-6 : f32
    %194 = vector.broadcast %cst_81 : f32 to vector<16x1xf32>
    %195 = arith.addf %191, %194 : vector<16x1xf32>
    %196 = math.rsqrt %195 : vector<16x1xf32>
    %197 = vector.broadcast %196 : vector<16x1xf32> to vector<16x128xf32>
    %198 = arith.mulf %193, %197 : vector<16x128xf32>
    %199 = vector.broadcast %178 : vector<1x128xf32> to vector<16x128xf32>
    %200 = arith.mulf %198, %199 : vector<16x128xf32>
    %201 = vector.broadcast %180 : vector<1x128xf32> to vector<16x128xf32>
    %202 = arith.addf %200, %201 : vector<16x128xf32>
    %c1_82 = arith.constant 1 : index
    %c0_83 = arith.constant 0 : index
    %c0_84 = arith.constant 0 : index
    %203 = vector.load %arg4[%c1_82, %c0_83, %c0_84] : memref<2x128x384xf32, #tpu.memory_space<vmem>>, vector<1x128x384xf32>
    %204 = vector.shape_cast %203 : vector<1x128x384xf32> to vector<128x384xf32>
    %cst_85 = arith.constant dense<0.000000e+00> : vector<16x384xf32>
    %205 = tpu.matmul %202, %204, %cst_85 {dimension_numbers = #tpu.dot_dimension_numbers<[1], [0], [0], [1], [0, 0, 1, 1], [], []>} : vector<16x128xf32>, vector<128x384xf32>, vector<16x384xf32> -> vector<16x384xf32>
    %c1_86 = arith.constant 1 : index
    %c0_87 = arith.constant 0 : index
    %c0_88 = arith.constant 0 : index
    %206 = vector.load %arg5[%c1_86, %c0_87, %c0_88] : memref<2x1x384xf32, #tpu.memory_space<vmem>>, vector<1x1x384xf32>
    %207 = vector.shape_cast %206 : vector<1x1x384xf32> to vector<1x384xf32>
    %208 = vector.broadcast %207 : vector<1x384xf32> to vector<16x384xf32>
    %209 = arith.addf %205, %208 : vector<16x384xf32>
    %210 = vector.extract_strided_slice %209 {offsets = [0, 0], sizes = [16, 32], strides = [1, 1]} : vector<16x384xf32> to vector<16x32xf32>
    %211 = vector.extract_strided_slice %209 {offsets = [0, 32], sizes = [16, 32], strides = [1, 1]} : vector<16x384xf32> to vector<16x32xf32>
    %212 = vector.extract_strided_slice %209 {offsets = [0, 64], sizes = [16, 32], strides = [1, 1]} : vector<16x384xf32> to vector<16x32xf32>
    %213 = vector.extract_strided_slice %209 {offsets = [0, 96], sizes = [16, 32], strides = [1, 1]} : vector<16x384xf32> to vector<16x32xf32>
    %214 = vector.shape_cast %210 : vector<16x32xf32> to vector<1x16x32xf32>
    %215 = vector.shape_cast %211 : vector<16x32xf32> to vector<1x16x32xf32>
    %216 = vector.shape_cast %212 : vector<16x32xf32> to vector<1x16x32xf32>
    %217 = vector.shape_cast %213 : vector<16x32xf32> to vector<1x16x32xf32>
    %218 = tpu.concatenate %214, %215, %216, %217 in 0 : vector<1x16x32xf32>, vector<1x16x32xf32>, vector<1x16x32xf32>, vector<1x16x32xf32> -> vector<4x16x32xf32>
    %219 = vector.extract_strided_slice %209 {offsets = [0, 128], sizes = [16, 32], strides = [1, 1]} : vector<16x384xf32> to vector<16x32xf32>
    %220 = vector.extract_strided_slice %209 {offsets = [0, 160], sizes = [16, 32], strides = [1, 1]} : vector<16x384xf32> to vector<16x32xf32>
    %221 = vector.extract_strided_slice %209 {offsets = [0, 192], sizes = [16, 32], strides = [1, 1]} : vector<16x384xf32> to vector<16x32xf32>
    %222 = vector.extract_strided_slice %209 {offsets = [0, 224], sizes = [16, 32], strides = [1, 1]} : vector<16x384xf32> to vector<16x32xf32>
    %223 = vector.shape_cast %219 : vector<16x32xf32> to vector<1x16x32xf32>
    %224 = vector.shape_cast %220 : vector<16x32xf32> to vector<1x16x32xf32>
    %225 = vector.shape_cast %221 : vector<16x32xf32> to vector<1x16x32xf32>
    %226 = vector.shape_cast %222 : vector<16x32xf32> to vector<1x16x32xf32>
    %227 = tpu.concatenate %223, %224, %225, %226 in 0 : vector<1x16x32xf32>, vector<1x16x32xf32>, vector<1x16x32xf32>, vector<1x16x32xf32> -> vector<4x16x32xf32>
    %228 = vector.extract_strided_slice %209 {offsets = [0, 256], sizes = [16, 32], strides = [1, 1]} : vector<16x384xf32> to vector<16x32xf32>
    %229 = vector.extract_strided_slice %209 {offsets = [0, 288], sizes = [16, 32], strides = [1, 1]} : vector<16x384xf32> to vector<16x32xf32>
    %230 = vector.extract_strided_slice %209 {offsets = [0, 320], sizes = [16, 32], strides = [1, 1]} : vector<16x384xf32> to vector<16x32xf32>
    %231 = vector.extract_strided_slice %209 {offsets = [0, 352], sizes = [16, 32], strides = [1, 1]} : vector<16x384xf32> to vector<16x32xf32>
    %232 = vector.shape_cast %228 : vector<16x32xf32> to vector<1x16x32xf32>
    %233 = vector.shape_cast %229 : vector<16x32xf32> to vector<1x16x32xf32>
    %234 = vector.shape_cast %230 : vector<16x32xf32> to vector<1x16x32xf32>
    %235 = vector.shape_cast %231 : vector<16x32xf32> to vector<1x16x32xf32>
    %236 = tpu.concatenate %232, %233, %234, %235 in 0 : vector<1x16x32xf32>, vector<1x16x32xf32>, vector<1x16x32xf32>, vector<1x16x32xf32> -> vector<4x16x32xf32>
    "tpu.trace_start"() <{level = 10 : i32, message = "hqd,hkd->hqk"}> : () -> ()
    %cst_89 = arith.constant dense<0.000000e+00> : vector<4x16x16xf32>
    %237 = tpu.matmul %218, %227, %cst_89 {dimension_numbers = #tpu.dot_dimension_numbers<[2], [2], [1], [1], [0, 0, 0, 1, 1, 1], [0], [0]>} : vector<4x16x32xf32>, vector<4x16x32xf32>, vector<4x16x16xf32> -> vector<4x16x16xf32>
    "tpu.trace_stop"() : () -> ()
    %cst_90 = arith.constant 0.176776692 : f32
    %238 = vector.broadcast %cst_90 : f32 to vector<4x16x16xf32>
    %239 = arith.mulf %237, %238 : vector<4x16x16xf32>
    %240 = vector.shape_cast %1 : vector<16x16xf32> to vector<1x16x16xf32>
    %241 = vector.broadcast %240 : vector<1x16x16xf32> to vector<4x16x16xf32>
    %242 = arith.addf %239, %241 : vector<4x16x16xf32>
    %cst_91 = arith.constant dense<0xFF800000> : vector<4x16xf32>
    %243 = vector.multi_reduction <maximumf>, %242, %cst_91 [2] : vector<4x16x16xf32> to vector<4x16xf32>
    %244 = vector.shape_cast %243 : vector<4x16xf32> to vector<4x16x1xf32>
    %245 = vector.broadcast %244 : vector<4x16x1xf32> to vector<4x16x16xf32>
    %246 = arith.subf %242, %245 : vector<4x16x16xf32>
    %247 = math.exp %246 : vector<4x16x16xf32>
    %cst_92 = arith.constant dense<0.000000e+00> : vector<4x16xf32>
    %248 = vector.multi_reduction <add>, %247, %cst_92 [2] : vector<4x16x16xf32> to vector<4x16xf32>
    %249 = vector.shape_cast %248 : vector<4x16xf32> to vector<4x16x1xf32>
    %250 = tpu.reciprocal %249 : vector<4x16x1xf32> -> vector<4x16x1xf32>
    %251 = vector.broadcast %250 : vector<4x16x1xf32> to vector<4x16x16xf32>
    %252 = arith.mulf %247, %251 : vector<4x16x16xf32>
    "tpu.trace_start"() <{level = 10 : i32, message = "hqk,hkd->hqd"}> : () -> ()
    %cst_93 = arith.constant dense<0.000000e+00> : vector<4x16x32xf32>
    %253 = tpu.matmul %252, %236, %cst_93 {dimension_numbers = #tpu.dot_dimension_numbers<[2], [1], [1], [2], [0, 0, 0, 1, 1, 2], [0], [0]>} : vector<4x16x16xf32>, vector<4x16x32xf32>, vector<4x16x32xf32> -> vector<4x16x32xf32>
    "tpu.trace_stop"() : () -> ()
    %254 = vector.extract_strided_slice %253 {offsets = [0, 0, 0], sizes = [1, 16, 32], strides = [1, 1, 1]} : vector<4x16x32xf32> to vector<1x16x32xf32>
    %255 = vector.shape_cast %254 : vector<1x16x32xf32> to vector<16x32xf32>
    %256 = vector.extract_strided_slice %253 {offsets = [1, 0, 0], sizes = [1, 16, 32], strides = [1, 1, 1]} : vector<4x16x32xf32> to vector<1x16x32xf32>
    %257 = vector.shape_cast %256 : vector<1x16x32xf32> to vector<16x32xf32>
    %258 = vector.extract_strided_slice %253 {offsets = [2, 0, 0], sizes = [1, 16, 32], strides = [1, 1, 1]} : vector<4x16x32xf32> to vector<1x16x32xf32>
    %259 = vector.shape_cast %258 : vector<1x16x32xf32> to vector<16x32xf32>
    %260 = vector.extract_strided_slice %253 {offsets = [3, 0, 0], sizes = [1, 16, 32], strides = [1, 1, 1]} : vector<4x16x32xf32> to vector<1x16x32xf32>
    %261 = vector.shape_cast %260 : vector<1x16x32xf32> to vector<16x32xf32>
    %262 = tpu.concatenate %255, %257, %259, %261 in 1 : vector<16x32xf32>, vector<16x32xf32>, vector<16x32xf32>, vector<16x32xf32> -> vector<16x128xf32>
    %c1_94 = arith.constant 1 : index
    %c0_95 = arith.constant 0 : index
    %c0_96 = arith.constant 0 : index
    %263 = vector.load %arg6[%c1_94, %c0_95, %c0_96] : memref<2x128x128xf32, #tpu.memory_space<vmem>>, vector<1x128x128xf32>
    %264 = vector.shape_cast %263 : vector<1x128x128xf32> to vector<128x128xf32>
    %cst_97 = arith.constant dense<0.000000e+00> : vector<16x128xf32>
    %265 = tpu.matmul %262, %264, %cst_97 {dimension_numbers = #tpu.dot_dimension_numbers<[1], [0], [0], [1], [0, 0, 1, 1], [], []>} : vector<16x128xf32>, vector<128x128xf32>, vector<16x128xf32> -> vector<16x128xf32>
    %266 = arith.addf %176, %265 : vector<16x128xf32>
    %c1_98 = arith.constant 1 : index
    %c0_99 = arith.constant 0 : index
    %c0_100 = arith.constant 0 : index
    %267 = vector.load %arg7[%c1_98, %c0_99, %c0_100] : memref<2x1x128xf32, #tpu.memory_space<vmem>>, vector<1x1x128xf32>
    %268 = vector.shape_cast %267 : vector<1x1x128xf32> to vector<1x128xf32>
    %269 = vector.broadcast %268 : vector<1x128xf32> to vector<16x128xf32>
    %270 = arith.addf %266, %269 : vector<16x128xf32>
    %c1_101 = arith.constant 1 : index
    %c0_102 = arith.constant 0 : index
    %c0_103 = arith.constant 0 : index
    %271 = vector.load %arg8[%c1_101, %c0_102, %c0_103] : memref<2x1x128xf32, #tpu.memory_space<vmem>>, vector<1x1x128xf32>
    %272 = vector.shape_cast %271 : vector<1x1x128xf32> to vector<1x128xf32>
    %c1_104 = arith.constant 1 : index
    %c0_105 = arith.constant 0 : index
    %c0_106 = arith.constant 0 : index
    %273 = vector.load %arg9[%c1_104, %c0_105, %c0_106] : memref<2x1x128xf32, #tpu.memory_space<vmem>>, vector<1x1x128xf32>
    %274 = vector.shape_cast %273 : vector<1x1x128xf32> to vector<1x128xf32>
    %cst_107 = arith.constant dense<0.000000e+00> : vector<16xf32>
    %275 = vector.multi_reduction <add>, %270, %cst_107 [1] : vector<16x128xf32> to vector<16xf32>
    %276 = vector.shape_cast %275 : vector<16xf32> to vector<16x1xf32>
    %cst_108 = arith.constant 1.280000e+02 : f32
    %277 = vector.broadcast %cst_108 : f32 to vector<16x1xf32>
    %278 = arith.divf %276, %277 : vector<16x1xf32>
    %279 = vector.broadcast %278 : vector<16x1xf32> to vector<16x128xf32>
    %280 = arith.subf %270, %279 : vector<16x128xf32>
    %281 = arith.mulf %280, %280 : vector<16x128xf32>
    %cst_109 = arith.constant dense<0.000000e+00> : vector<16xf32>
    %282 = vector.multi_reduction <add>, %281, %cst_109 [1] : vector<16x128xf32> to vector<16xf32>
    %283 = vector.shape_cast %282 : vector<16xf32> to vector<16x1xf32>
    %cst_110 = arith.constant 1.280000e+02 : f32
    %284 = vector.broadcast %cst_110 : f32 to vector<16x1xf32>
    %285 = arith.divf %283, %284 : vector<16x1xf32>
    %286 = vector.broadcast %278 : vector<16x1xf32> to vector<16x128xf32>
    %287 = arith.subf %270, %286 : vector<16x128xf32>
    %cst_111 = arith.constant 9.99999974E-6 : f32
    %288 = vector.broadcast %cst_111 : f32 to vector<16x1xf32>
    %289 = arith.addf %285, %288 : vector<16x1xf32>
    %290 = math.rsqrt %289 : vector<16x1xf32>
    %291 = vector.broadcast %290 : vector<16x1xf32> to vector<16x128xf32>
    %292 = arith.mulf %287, %291 : vector<16x128xf32>
    %293 = vector.broadcast %272 : vector<1x128xf32> to vector<16x128xf32>
    %294 = arith.mulf %292, %293 : vector<16x128xf32>
    %295 = vector.broadcast %274 : vector<1x128xf32> to vector<16x128xf32>
    %296 = arith.addf %294, %295 : vector<16x128xf32>
    %c1_112 = arith.constant 1 : index
    %c0_113 = arith.constant 0 : index
    %c0_114 = arith.constant 0 : index
    %297 = vector.load %arg10[%c1_112, %c0_113, %c0_114] : memref<2x128x256xf32, #tpu.memory_space<vmem>>, vector<1x128x256xf32>
    %298 = vector.shape_cast %297 : vector<1x128x256xf32> to vector<128x256xf32>
    %cst_115 = arith.constant dense<0.000000e+00> : vector<16x256xf32>
    %299 = tpu.matmul %296, %298, %cst_115 {dimension_numbers = #tpu.dot_dimension_numbers<[1], [0], [0], [1], [0, 0, 1, 1], [], []>} : vector<16x128xf32>, vector<128x256xf32>, vector<16x256xf32> -> vector<16x256xf32>
    %c1_116 = arith.constant 1 : index
    %c0_117 = arith.constant 0 : index
    %c0_118 = arith.constant 0 : index
    %300 = vector.load %arg11[%c1_116, %c0_117, %c0_118] : memref<2x1x256xf32, #tpu.memory_space<vmem>>, vector<1x1x256xf32>
    %301 = vector.shape_cast %300 : vector<1x1x256xf32> to vector<1x256xf32>
    %302 = vector.broadcast %301 : vector<1x256xf32> to vector<16x256xf32>
    %303 = arith.addf %299, %302 : vector<16x256xf32>
    %cst_119 = arith.constant 5.000000e-01 : f32
    %304 = vector.broadcast %cst_119 : f32 to vector<16x256xf32>
    %305 = arith.mulf %304, %303 : vector<16x256xf32>
    %cst_120 = arith.constant 0.707106769 : f32
    %306 = vector.broadcast %cst_120 : f32 to vector<16x256xf32>
    %307 = arith.mulf %303, %306 : vector<16x256xf32>
    %308 = math.absf %307 : vector<16x256xf32>
    %cst_121 = arith.constant 0.327591091 : f32
    %309 = vector.broadcast %cst_121 : f32 to vector<16x256xf32>
    %310 = arith.mulf %309, %308 : vector<16x256xf32>
    %cst_122 = arith.constant 1.000000e+00 : f32
    %311 = vector.broadcast %cst_122 : f32 to vector<16x256xf32>
    %312 = arith.addf %311, %310 : vector<16x256xf32>
    %cst_123 = arith.constant 1.000000e+00 : f32
    %313 = vector.broadcast %cst_123 : f32 to vector<16x256xf32>
    %314 = arith.divf %313, %312 : vector<16x256xf32>
    %cst_124 = arith.constant 1.06140542 : f32
    %315 = vector.broadcast %cst_124 : f32 to vector<16x256xf32>
    %316 = arith.mulf %315, %314 : vector<16x256xf32>
    %cst_125 = arith.constant -1.45315206 : f32
    %317 = vector.broadcast %cst_125 : f32 to vector<16x256xf32>
    %318 = arith.addf %316, %317 : vector<16x256xf32>
    %319 = arith.mulf %318, %314 : vector<16x256xf32>
    %cst_126 = arith.constant 1.42141378 : f32
    %320 = vector.broadcast %cst_126 : f32 to vector<16x256xf32>
    %321 = arith.addf %319, %320 : vector<16x256xf32>
    %322 = arith.mulf %321, %314 : vector<16x256xf32>
    %cst_127 = arith.constant -0.284496725 : f32
    %323 = vector.broadcast %cst_127 : f32 to vector<16x256xf32>
    %324 = arith.addf %322, %323 : vector<16x256xf32>
    %325 = arith.mulf %324, %314 : vector<16x256xf32>
    %cst_128 = arith.constant 0.254829586 : f32
    %326 = vector.broadcast %cst_128 : f32 to vector<16x256xf32>
    %327 = arith.addf %325, %326 : vector<16x256xf32>
    %328 = arith.mulf %327, %314 : vector<16x256xf32>
    %cst_129 = arith.constant 0.000000e+00 : f32
    %329 = vector.broadcast %cst_129 : f32 to vector<16x256xf32>
    %330 = arith.subf %329, %308 : vector<16x256xf32>
    %331 = arith.mulf %330, %308 : vector<16x256xf32>
    %332 = math.exp %331 : vector<16x256xf32>
    %333 = arith.mulf %328, %332 : vector<16x256xf32>
    %cst_130 = arith.constant 1.000000e+00 : f32
    %334 = vector.broadcast %cst_130 : f32 to vector<16x256xf32>
    %335 = arith.subf %334, %333 : vector<16x256xf32>
    %cst_131 = arith.constant 0.000000e+00 : f32
    %336 = vector.broadcast %cst_131 : f32 to vector<16x256xf32>
    %337 = arith.cmpf oge, %307, %336 : vector<16x256xf32>
    %cst_132 = arith.constant 0.000000e+00 : f32
    %338 = vector.broadcast %cst_132 : f32 to vector<16x256xf32>
    %339 = arith.subf %338, %335 : vector<16x256xf32>
    %340 = arith.select %337, %335, %339 : vector<16x256xi1>, vector<16x256xf32>
    %cst_133 = arith.constant 1.000000e+00 : f32
    %341 = vector.broadcast %cst_133 : f32 to vector<16x256xf32>
    %342 = arith.addf %341, %340 : vector<16x256xf32>
    %343 = arith.mulf %305, %342 : vector<16x256xf32>
    %c1_134 = arith.constant 1 : index
    %c0_135 = arith.constant 0 : index
    %c0_136 = arith.constant 0 : index
    %344 = vector.load %arg12[%c1_134, %c0_135, %c0_136] : memref<2x256x128xf32, #tpu.memory_space<vmem>>, vector<1x256x128xf32>
    %345 = vector.shape_cast %344 : vector<1x256x128xf32> to vector<256x128xf32>
    %cst_137 = arith.constant dense<0.000000e+00> : vector<16x128xf32>
    %346 = tpu.matmul %343, %345, %cst_137 {dimension_numbers = #tpu.dot_dimension_numbers<[1], [0], [0], [1], [0, 0, 1, 1], [], []>} : vector<16x256xf32>, vector<256x128xf32>, vector<16x128xf32> -> vector<16x128xf32>
    %347 = arith.addf %270, %346 : vector<16x128xf32>
    %c1_138 = arith.constant 1 : index
    %c0_139 = arith.constant 0 : index
    %c0_140 = arith.constant 0 : index
    %348 = vector.load %arg13[%c1_138, %c0_139, %c0_140] : memref<2x1x128xf32, #tpu.memory_space<vmem>>, vector<1x1x128xf32>
    %349 = vector.shape_cast %348 : vector<1x1x128xf32> to vector<1x128xf32>
    %350 = vector.broadcast %349 : vector<1x128xf32> to vector<16x128xf32>
    %351 = arith.addf %347, %350 : vector<16x128xf32>
    %c0_141 = arith.constant 0 : index
    %c0_142 = arith.constant 0 : index
    %352 = vector.load %arg14[%c0_141, %c0_142] : memref<1x128xf32, #tpu.memory_space<vmem>>, vector<1x128xf32>
    %c0_143 = arith.constant 0 : index
    %c0_144 = arith.constant 0 : index
    %353 = vector.load %arg15[%c0_143, %c0_144] : memref<1x128xf32, #tpu.memory_space<vmem>>, vector<1x128xf32>
    %cst_145 = arith.constant dense<0.000000e+00> : vector<16xf32>
    %354 = vector.multi_reduction <add>, %351, %cst_145 [1] : vector<16x128xf32> to vector<16xf32>
    %355 = vector.shape_cast %354 : vector<16xf32> to vector<16x1xf32>
    %cst_146 = arith.constant 1.280000e+02 : f32
    %356 = vector.broadcast %cst_146 : f32 to vector<16x1xf32>
    %357 = arith.divf %355, %356 : vector<16x1xf32>
    %358 = vector.broadcast %357 : vector<16x1xf32> to vector<16x128xf32>
    %359 = arith.subf %351, %358 : vector<16x128xf32>
    %360 = arith.mulf %359, %359 : vector<16x128xf32>
    %cst_147 = arith.constant dense<0.000000e+00> : vector<16xf32>
    %361 = vector.multi_reduction <add>, %360, %cst_147 [1] : vector<16x128xf32> to vector<16xf32>
    %362 = vector.shape_cast %361 : vector<16xf32> to vector<16x1xf32>
    %cst_148 = arith.constant 1.280000e+02 : f32
    %363 = vector.broadcast %cst_148 : f32 to vector<16x1xf32>
    %364 = arith.divf %362, %363 : vector<16x1xf32>
    %365 = vector.broadcast %357 : vector<16x1xf32> to vector<16x128xf32>
    %366 = arith.subf %351, %365 : vector<16x128xf32>
    %cst_149 = arith.constant 9.99999974E-6 : f32
    %367 = vector.broadcast %cst_149 : f32 to vector<16x1xf32>
    %368 = arith.addf %364, %367 : vector<16x1xf32>
    %369 = math.rsqrt %368 : vector<16x1xf32>
    %370 = vector.broadcast %369 : vector<16x1xf32> to vector<16x128xf32>
    %371 = arith.mulf %366, %370 : vector<16x128xf32>
    %372 = vector.broadcast %352 : vector<1x128xf32> to vector<16x128xf32>
    %373 = arith.mulf %371, %372 : vector<16x128xf32>
    %374 = vector.broadcast %353 : vector<1x128xf32> to vector<16x128xf32>
    %375 = arith.addf %373, %374 : vector<16x128xf32>
    %c0_150 = arith.constant 0 : index
    %c0_151 = arith.constant 0 : index
    %376 = vector.load %arg16[%c0_150, %c0_151] : memref<128x128xf32, #tpu.memory_space<vmem>>, vector<128x128xf32>
    %cst_152 = arith.constant dense<0.000000e+00> : vector<16x128xf32>
    %377 = tpu.matmul %375, %376, %cst_152 {dimension_numbers = #tpu.dot_dimension_numbers<[1], [1], [0], [0], [0, 0, 1, 0], [], []>} : vector<16x128xf32>, vector<128x128xf32>, vector<16x128xf32> -> vector<16x128xf32>
    %c0_153 = arith.constant 0 : index
    %c0_154 = arith.constant 0 : index
    %378 = vector.load %arg17[%c0_153, %c0_154] : memref<16x128xf32, #tpu.memory_space<vmem>>, vector<16x128xf32>
    tpu.vector_store %arg17[%c0_153, %c0_154], %377 {strides = array<i32>} : memref<16x128xf32, #tpu.memory_space<vmem>>, vector<16x128xf32>,
    return
  }
}

</mosaic_0001>

<llo_original>
// kernel: gpt_forward.1
$region0: #{gpt_forward.1}
  #allocation0 [shape = 'u32[]', space=smem, size = 0x4, offset = 0x4, fixed_abs, tag = 'smem constant byte address 0x4 - core index']
  #allocation1 [shape = 'u32[144,128]{1,0:T(1,128)}', space=vmem, size = 0x12000, scoped, tag = 'internal scratch']
  %s0 = inlined_call_operand.vmem [shape: f32[16,128], index: 0, kind: input, shape index: {}]
  %s1 = inlined_call_operand.vmem [shape: f32[16,16], index: 1, kind: input, shape index: {}]
  %s2 = inlined_call_operand.vmem [shape: f32[2,1,128], index: 2, kind: input, shape index: {}]
  %s3 = inlined_call_operand.vmem [shape: f32[2,1,128], index: 3, kind: input, shape index: {}]
  %s4 = inlined_call_operand.hbm [shape: f32[2,128,384], index: 4, kind: input, shape index: {}]
  %s5 = inlined_call_operand.vmem [shape: f32[2,1,384], index: 5, kind: input, shape index: {}]
  %s6 = inlined_call_operand.vmem [shape: f32[2,128,128], index: 6, kind: input, shape index: {}]
  %s7 = inlined_call_operand.vmem [shape: f32[2,1,128], index: 7, kind: input, shape index: {}]
  %s8 = inlined_call_operand.vmem [shape: f32[2,1,128], index: 8, kind: input, shape index: {}]
  %s9 = inlined_call_operand.vmem [shape: f32[2,1,128], index: 9, kind: input, shape index: {}]
  %s10 = inlined_call_operand.hbm [shape: f32[2,128,256], index: 10, kind: input, shape index: {}]
  %s11 = inlined_call_operand.vmem [shape: f32[2,1,256], index: 11, kind: input, shape index: {}]
  %s12 = inlined_call_operand.hbm [shape: f32[2,256,128], index: 12, kind: input, shape index: {}]
  %s13 = inlined_call_operand.vmem [shape: f32[2,1,128], index: 13, kind: input, shape index: {}]
  %s14 = inlined_call_operand.vmem [shape: f32[1,128], index: 14, kind: input, shape index: {}]
  %s15 = inlined_call_operand.vmem [shape: f32[1,128], index: 15, kind: input, shape index: {}]
  %s16 = inlined_call_operand.vmem [shape: f32[128,128], index: 16, kind: input, shape index: {}]
  %s17 = inlined_call_operand.hbm [shape: f32[16,128], index: 17, kind: output, shape index: {}]
  %s18 = sld [smem:[#allocation0]]
  $region90: #{gpt_forward.1} parent=0
    _
  %s20 = ssub.s32 1, %s18
  %s21 = scalar_select 0, %s20, %s18
  $region1: #{gpt_forward.1} parent=0
    #allocation2 [shape = 'u8[393216]{0}', space=vmem, size = 0x60000, scoped, tag = 'input window, operand 4, single buffered']
    #allocation3 [shape = 's32[1]{0}', space=sflag, size = 0x4, scoped, tag = 'scoped memory for gpt_forward.1']
    #allocation4 [shape = 's32[1]{0}', space=sflag, size = 0x4, scoped, tag = 'scoped memory for gpt_forward.1']
    #allocation5 [shape = 'u8[262144]{0}', space=vmem, size = 0x40000, scoped, tag = 'input window, operand 10, single buffered']
    #allocation6 [shape = 's32[1]{0}', space=sflag, size = 0x4, scoped, tag = 'scoped memory for gpt_forward.1']
    #allocation7 [shape = 'u8[262144]{0}', space=vmem, size = 0x40000, scoped, tag = 'input window, operand 12, single buffered']
    #allocation8 [shape = 'u8[8192]{0}', space=vmem, size = 0x2000, scoped, tag = 'output window, operand 0, single buffered']
    %22 = vsyncpa [#allocation3], 0
    %23 = vsyncpa [#allocation6], 0
    %24 = vsyncpa [#allocation4], 0
    // Predicated region
    $region2: #{gpt_forward.1} parent=1 // pred_check
      _
    $region3: #{gpt_forward.1} parent=1 // pred_check_branch
      %26 = sbr.rel (0) target = $region5
    $region4: #{gpt_forward.1} parent=1 // pred_region
      _
    $region5: #{gpt_forward.1} parent=1 // pred_fallthru
      _
    // Predicated region
    $region6: #{gpt_forward.1} parent=1 // pred_check
      _
    $region7: #{gpt_forward.1} parent=1 // pred_check_branch
      %28 = sbr.rel (0) target = $region9
    $region8: #{gpt_forward.1} parent=1 // pred_region
      _
    $region9: #{gpt_forward.1} parent=1 // pred_fallthru
      _
    // Predicated region
    $region10: #{gpt_forward.1} parent=1 // pred_check
      _
    $region11: #{gpt_forward.1} parent=1 // pred_check_branch
      %30 = sbr.rel (0) target = $region13
    $region12: #{gpt_forward.1} parent=1 // pred_region
      _
    $region13: #{gpt_forward.1} parent=1 // pred_fallthru
      _
    // Predicated region
    $region14: #{gpt_forward.1} parent=1 // pred_check
      _
    $region15: #{gpt_forward.1} parent=1 // pred_check_branch
      %32 = sbr.rel (0) target = $region17
    $region16: #{gpt_forward.1} parent=1 // pred_region
      _
    $region17: #{gpt_forward.1} parent=1 // pred_fallthru
      _
    // Predicated region
    $region18: #{gpt_forward.1} parent=1 // pred_check
      _
    $region19: #{gpt_forward.1} parent=1 // pred_check_branch
      %34 = sbr.rel (0) target = $region21
    $region20: #{gpt_forward.1} parent=1 // pred_region
      %s36 = ssub.s32 12288, 12288
      %37 = vsyncadd [#allocation3], %s36
      %s38 = sshll.u32 [#allocation2], 4
      %s39 = int_to_ptr.vmem [resolvable:$true] %s38
      %44 = dma.hbm_to_vmem [thread:$0]  %s4, 12288, %s39, [#allocation3], 384, 384, 24
    $region21: #{gpt_forward.1} parent=1 // pred_fallthru
      _
    // Predicated region
    $region22: #{gpt_forward.1} parent=1 // pred_check
      _
    $region23: #{gpt_forward.1} parent=1 // pred_check_branch
      %46 = sbr.rel (0) target = $region25
    $region24: #{gpt_forward.1} parent=1 // pred_region
      _
    $region25: #{gpt_forward.1} parent=1 // pred_fallthru
      _
    // Predicated region
    $region26: #{gpt_forward.1} parent=1 // pred_check
      _
    $region27: #{gpt_forward.1} parent=1 // pred_check_branch
      %48 = sbr.rel (0) target = $region29
    $region28: #{gpt_forward.1} parent=1 // pred_region
      _
    $region29: #{gpt_forward.1} parent=1 // pred_fallthru
      _
    // Predicated region
    $region30: #{gpt_forward.1} parent=1 // pred_check
      _
    $region31: #{gpt_forward.1} parent=1 // pred_check_branch
      %50 = sbr.rel (0) target = $region33
    $region32: #{gpt_forward.1} parent=1 // pred_region
      _
    $region33: #{gpt_forward.1} parent=1 // pred_fallthru
      _
    // Predicated region
    $region34: #{gpt_forward.1} parent=1 // pred_check
      _
    $region35: #{gpt_forward.1} parent=1 // pred_check_branch
      %52 = sbr.rel (0) target = $region37
    $region36: #{gpt_forward.1} parent=1 // pred_region
      _
    $region37: #{gpt_forward.1} parent=1 // pred_fallthru
      _
    // Predicated region
    $region38: #{gpt_forward.1} parent=1 // pred_check
      _
    $region39: #{gpt_forward.1} parent=1 // pred_check_branch
      %54 = sbr.rel (0) target = $region41
    $region40: #{gpt_forward.1} parent=1 // pred_region
      _
    $region41: #{gpt_forward.1} parent=1 // pred_fallthru
      _
    // Predicated region
    $region42: #{gpt_forward.1} parent=1 // pred_check
      _
    $region43: #{gpt_forward.1} parent=1 // pred_check_branch
      %56 = sbr.rel (0) target = $region45
    $region44: #{gpt_forward.1} parent=1 // pred_region
      %s58 = ssub.s32 8192, 8192
      %59 = vsyncadd [#allocation6], %s58
      %s60 = sshll.u32 [#allocation5], 4
      %s61 = int_to_ptr.vmem [resolvable:$true] %s60
      %66 = dma.hbm_to_vmem [thread:$0]  %s10, 8192, %s61, [#allocation6], 256, 256, 16
    $region45: #{gpt_forward.1} parent=1 // pred_fallthru
      _
    // Predicated region
    $region46: #{gpt_forward.1} parent=1 // pred_check
      _
    $region47: #{gpt_forward.1} parent=1 // pred_check_branch
      %68 = sbr.rel (0) target = $region49
    $region48: #{gpt_forward.1} parent=1 // pred_region
      _
    $region49: #{gpt_forward.1} parent=1 // pred_fallthru
      _
    // Predicated region
    $region50: #{gpt_forward.1} parent=1 // pred_check
      _
    $region51: #{gpt_forward.1} parent=1 // pred_check_branch
      %70 = sbr.rel (0) target = $region53
    $region52: #{gpt_forward.1} parent=1 // pred_region
      %s72 = ssub.s32 8192, 8192
      %73 = vsyncadd [#allocation6], %s72
      %s74 = sshll.u32 [#allocation7], 4
      %s75 = int_to_ptr.vmem [resolvable:$true] %s74
      %80 = dma.hbm_to_vmem [thread:$0]  %s12, 8192, %s75, [#allocation6], 128, 128, 8
    $region53: #{gpt_forward.1} parent=1 // pred_fallthru
      _
    // Predicated region
    $region54: #{gpt_forward.1} parent=1 // pred_check
      _
    $region55: #{gpt_forward.1} parent=1 // pred_check_branch
      %82 = sbr.rel (0) target = $region57
    $region56: #{gpt_forward.1} parent=1 // pred_region
      _
    $region57: #{gpt_forward.1} parent=1 // pred_fallthru
      _
    // Predicated region
    $region58: #{gpt_forward.1} parent=1 // pred_check
      _
    $region59: #{gpt_forward.1} parent=1 // pred_check_branch
      %84 = sbr.rel (0) target = $region61
    $region60: #{gpt_forward.1} parent=1 // pred_region
      _
    $region61: #{gpt_forward.1} parent=1 // pred_fallthru
      _
    // Predicated region
    $region62: #{gpt_forward.1} parent=1 // pred_check
      _
    $region63: #{gpt_forward.1} parent=1 // pred_check_branch
      %86 = sbr.rel (0) target = $region65
    $region64: #{gpt_forward.1} parent=1 // pred_region
      _
    $region65: #{gpt_forward.1} parent=1 // pred_fallthru
      _
    // Predicated region
    $region66: #{gpt_forward.1} parent=1 // pred_check
      _
    $region67: #{gpt_forward.1} parent=1 // pred_check_branch
      %88 = sbr.rel (0) target = $region69
    $region68: #{gpt_forward.1} parent=1 // pred_region
      _
    $region69: #{gpt_forward.1} parent=1 // pred_fallthru
      _
    // Predicated region
    $region70: #{gpt_forward.1} parent=1 // pred_check
      _
    $region71: #{gpt_forward.1} parent=1 // pred_check_branch
      %90 = sbr.rel (0) target = $region73
    $region72: #{gpt_forward.1} parent=1 // pred_region
      %91 = dma.done [#allocation3], 12288
    $region73: #{gpt_forward.1} parent=1 // pred_fallthru
      _
    // Predicated region
    $region74: #{gpt_forward.1} parent=1 // pred_check
      _
    $region75: #{gpt_forward.1} parent=1 // pred_check_branch
      %93 = sbr.rel (0) target = $region77
    $region76: #{gpt_forward.1} parent=1 // pred_region
      %94 = dma.done [#allocation6], 8192
    $region77: #{gpt_forward.1} parent=1 // pred_fallthru
      _
    // Predicated region
    $region78: #{gpt_forward.1} parent=1 // pred_check
      _
    $region79: #{gpt_forward.1} parent=1 // pred_check_branch
      %96 = sbr.rel (0) target = $region81
    $region80: #{gpt_forward.1} parent=1 // pred_region
      %97 = dma.done [#allocation6], 8192
    $region81: #{gpt_forward.1} parent=1 // pred_fallthru
      _
    %v98 = vld [vmem:[%s0] sm:$0xff]
    %v99 = vld [vmem:[%s0 + $0x8] sm:$0xff]
    %v100 = vld [vmem:[%s1] sm:$0xff]
    %v101 = vld [vmem:[%s1 + $0x8] sm:$0xff]
    %v102 = vld [vmem:[%s2] sm:$0x1]
    %v103 = vld [vmem:[%s3] sm:$0x1]
    %104 = vadd.xlane.f32.xlu0 %v98
    %v105 = vpop.xlane.xlu0 %104
    %106 = vadd.xlane.f32.xlu0 %v99
    %v107 = vpop.xlane.xlu0 %106
    %v108 = vrcp.pop 128.0
    %v109 = vmul.f32 %v105, %v108
    %v110 = vmul.f32 %v107, %v108
    %v111 = vsub.f32 %v98, %v109
    %v112 = vsub.f32 %v99, %v110
    %v113 = vmul.f32 %v111, %v111
    %v114 = vmul.f32 %v112, %v112
    %115 = vadd.xlane.f32.xlu0 %v113
    %v116 = vpop.xlane.xlu0 %115
    %117 = vadd.xlane.f32.xlu0 %v114
    %v118 = vpop.xlane.xlu0 %117
    %v119 = vmul.f32 %v116, %v108
    %v120 = vmul.f32 %v118, %v108
    %v121 = vadd.f32 %v119, 1e-05
    %v122 = vadd.f32 %v120, 1e-05
    %v123 = vrsqrt.pop %v121
    %v124 = vrsqrt.pop %v122
    %v125 = vmul.f32 %v111, %v123
    %v126 = vmul.f32 %v112, %v124
    %v128 = vlaneseq
    %v129 = vshrl.u32 %v128, 7
    %v130 = vsub.s32 0, %v129
    %v131 = vrot.slane %v102, %v130
    %v133 = vmul.f32 %v125, %v131
    %v134 = vmul.f32 %v126, %v131
    %v136 = vlaneseq
    %v137 = vshrl.u32 %v136, 7
    %v138 = vsub.s32 0, %v137
    %v139 = vrot.slane %v103, %v138
    %v141 = vadd.f32 %v133, %v139
    %v142 = vadd.f32 %v134, %v139
    %v143 = vld [vmem:[#allocation2] sm:$0xff]
    %v144 = vld [vmem:[#allocation2 + $0x8] sm:$0xff]
    %v145 = vld [vmem:[#allocation2 + $0x10] sm:$0xff]
    %v146 = vld [vmem:[#allocation2 + $0x18] sm:$0xff]
    %v147 = vld [vmem:[#allocation2 + $0x20] sm:$0xff]
    %v148 = vld [vmem:[#allocation2 + $0x28] sm:$0xff]
    %v149 = vld [vmem:[#allocation2 + $0x30] sm:$0xff]
    %v150 = vld [vmem:[#allocation2 + $0x38] sm:$0xff]
    %v151 = vld [vmem:[#allocation2 + $0x40] sm:$0xff]
    %v152 = vld [vmem:[#allocation2 + $0x48] sm:$0xff]
    %v153 = vld [vmem:[#allocation2 + $0x50] sm:$0xff]
    %v154 = vld [vmem:[#allocation2 + $0x58] sm:$0xff]
    %v155 = vld [vmem:[#allocation2 + $0x60] sm:$0xff]
    %v156 = vld [vmem:[#allocation2 + $0x68] sm:$0xff]
    %v157 = vld [vmem:[#allocation2 + $0x70] sm:$0xff]
    %v158 = vld [vmem:[#allocation2 + $0x78] sm:$0xff]
    %v159 = vld [vmem:[#allocation2 + $0x80] sm:$0xff]
    %v160 = vld [vmem:[#allocation2 + $0x88] sm:$0xff]
    %v161 = vld [vmem:[#allocation2 + $0x90] sm:$0xff]
    %v162 = vld [vmem:[#allocation2 + $0x98] sm:$0xff]
    %v163 = vld [vmem:[#allocation2 + $0xa0] sm:$0xff]
    %v164 = vld [vmem:[#allocation2 + $0xa8] sm:$0xff]
    %v165 = vld [vmem:[#allocation2 + $0xb0] sm:$0xff]
    %v166 = vld [vmem:[#allocation2 + $0xb8] sm:$0xff]
    %v167 = vld [vmem:[#allocation2 + $0xc0] sm:$0xff]
    %v168 = vld [vmem:[#allocation2 + $0xc8] sm:$0xff]
    %v169 = vld [vmem:[#allocation2 + $0xd0] sm:$0xff]
    %v170 = vld [vmem:[#allocation2 + $0xd8] sm:$0xff]
    %v171 = vld [vmem:[#allocation2 + $0xe0] sm:$0xff]
    %v172 = vld [vmem:[#allocation2 + $0xe8] sm:$0xff]
    %v173 = vld [vmem:[#allocation2 + $0xf0] sm:$0xff]
    %v174 = vld [vmem:[#allocation2 + $0xf8] sm:$0xff]
    %v175 = vld [vmem:[#allocation2 + $0x100] sm:$0xff]
    %v176 = vld [vmem:[#allocation2 + $0x108] sm:$0xff]
    %v177 = vld [vmem:[#allocation2 + $0x110] sm:$0xff]
    %v178 = vld [vmem:[#allocation2 + $0x118] sm:$0xff]
    %v179 = vld [vmem:[#allocation2 + $0x120] sm:$0xff]
    %v180 = vld [vmem:[#allocation2 + $0x128] sm:$0xff]
    %v181 = vld [vmem:[#allocation2 + $0x130] sm:$0xff]
    %v182 = vld [vmem:[#allocation2 + $0x138] sm:$0xff]
    %v183 = vld [vmem:[#allocation2 + $0x140] sm:$0xff]
    %v184 = vld [vmem:[#allocation2 + $0x148] sm:$0xff]
    %v185 = vld [vmem:[#allocation2 + $0x150] sm:$0xff]
    %v186 = vld [vmem:[#allocation2 + $0x158] sm:$0xff]
    %v187 = vld [vmem:[#allocation2 + $0x160] sm:$0xff]
    %v188 = vld [vmem:[#allocation2 + $0x168] sm:$0xff]
    %v189 = vld [vmem:[#allocation2 + $0x170] sm:$0xff]
    %v190 = vld [vmem:[#allocation2 + $0x178] sm:$0xff]
    %v191 = vld [vmem:[%s5] sm:$0x7]
    %v193 = vlaneseq
    %v194 = vshrl.u32 %v193, 7
    %v195 = vsub.s32 0, %v194
    %v196 = vrot.slane %v191, %v195
    %v197 = vlaneseq
    %v198 = vshrl.u32 %v197, 7
    %v199 = vsub.s32 1, %v198
    %v200 = vrot.slane %v191, %v199
    %v201 = vlaneseq
    %v202 = vshrl.u32 %v201, 7
    %v203 = vsub.s32 2, %v202
    %v204 = vrot.slane %v191, %v203
    %208 = vmatprep.subr.mxu0 %v189
    %209 = vmatpush1.msra.mxu0 %v188
    %210 = vmatprep.subr.mxu0 %v186
    %211 = vmatpush1.msra.mxu0 %v185
    %212 = vmatprep.subr.mxu0 %v183
    %213 = vmatpush1.msra.mxu0 %v182
    %214 = vmatprep.subr.mxu0 %v180
    %215 = vmatpush1.msra.mxu0 %v179
    %216 = vmatprep.subr.mxu0 %v177
    %217 = vmatpush1.msra.mxu0 %v176
    %218 = vmatprep.subr.mxu0 %v174
    %219 = vmatpush1.msra.mxu0 %v173
    %220 = vmatprep.subr.mxu0 %v171
    %221 = vmatpush1.msra.mxu0 %v170
    %222 = vmatprep.subr.mxu0 %v168
    %223 = vmatpush1.msra.mxu0 %v167
    %224 = vmatprep.subr.mxu0 %v165
    %225 = vmatpush1.msra.mxu0 %v164
    %226 = vmatprep.subr.mxu0 %v162
    %227 = vmatpush1.msra.mxu0 %v161
    %228 = vmatprep.subr.mxu0 %v159
    %229 = vmatpush1.msra.mxu0 %v158
    %230 = vmatprep.subr.mxu0 %v156
    %231 = vmatpush1.msra.mxu0 %v155
    %232 = vmatprep.subr.mxu0 %v153
    %233 = vmatpush1.msra.mxu0 %v152
    %234 = vmatprep.subr.mxu0 %v150
    %235 = vmatpush1.msra.mxu0 %v149
    %236 = vmatprep.subr.mxu0 %v147
    %237 = vmatpush1.msra.mxu0 %v146
    %238 = vmatprep.subr.mxu0 %v144
    %239 = vmatpush1.msra.mxu0 %v143
    %240 = vmatprep.subr.mxu0 0.0
    %241 = vmatpush2.msra.mxu0 0.0
    %242 = vmatprep.subr.mxu0 0.0
    %243 = vmatpush2.msra.mxu0 0.0
    %244 = vmatprep.subr.mxu0 0.0
    %245 = vmatpush2.msra.mxu0 0.0
    %246 = vmatprep.subr.mxu0 0.0
    %247 = vmatpush2.msra.mxu0 0.0
    %248 = vmatprep.subr.mxu0 0.0
    %249 = vmatpush2.msra.mxu0 0.0
    %250 = vmatprep.subr.mxu0 0.0
    %251 = vmatpush2.msra.mxu0 0.0
    %252 = vmatprep.subr.mxu0 0.0
    %253 = vmatpush2.msra.mxu0 0.0
    %254 = vmatprep.subr.mxu0 0.0
    %255 = vmatpush2.msra.mxu0 0.0
    %256 = vmatprep.subr.mxu0 0.0
    %257 = vmatpush2.msra.mxu0 0.0
    %258 = vmatprep.subr.mxu0 0.0
    %259 = vmatpush2.msra.mxu0 0.0
    %260 = vmatprep.subr.mxu0 0.0
    %261 = vmatpush2.msra.mxu0 0.0
    %262 = vmatprep.subr.mxu0 0.0
    %263 = vmatpush2.msra.mxu0 0.0
    %264 = vmatprep.subr.mxu0 0.0
    %265 = vmatpush2.msra.mxu0 0.0
    %266 = vmatprep.subr.mxu0 0.0
    %267 = vmatpush2.msra.mxu0 0.0
    %268 = vmatprep.subr.mxu0 0.0
    %269 = vmatpush2.msra.mxu0 0.0
    %270 = vmatprep.subr.mxu0 0.0
    %271 = vmatpush2.msra.mxu0 0.0
    %272 = vmatprep.mubr.f32.mxu0 0.0
    %273 = vmatmul.mubr.f32.gmra.mxu0 %v141
    %v274 = vpop.f32.mrf.mxu0
    %v275 = vadd.f32 %v196, %v274
    %v276 = vpop.f32.mrf.mxu0
    %v277 = vadd.f32 %v200, %v276
    %278 = vmatprep.mubr.f32.mxu0 0.0
    %279 = vmatmul.mubr.f32.gmra.mxu0 %v142
    %v280 = vpop.f32.mrf.mxu0
    %v281 = vadd.f32 %v196, %v280
    %v282 = vpop.f32.mrf.mxu0
    %v283 = vadd.f32 %v200, %v282
    %284 = vdwg.mxu0
    %285 = vmatprep.subr.mxu0 0.0
    %286 = vmatpush1.msra.mxu0 %v190
    %287 = vmatprep.subr.mxu0 0.0
    %288 = vmatpush1.msra.mxu0 %v187
    %289 = vmatprep.subr.mxu0 0.0
    %290 = vmatpush1.msra.mxu0 %v184
    %291 = vmatprep.subr.mxu0 0.0
    %292 = vmatpush1.msra.mxu0 %v181
    %293 = vmatprep.subr.mxu0 0.0
    %294 = vmatpush1.msra.mxu0 %v178
    %295 = vmatprep.subr.mxu0 0.0
    %296 = vmatpush1.msra.mxu0 %v175
    %297 = vmatprep.subr.mxu0 0.0
    %298 = vmatpush1.msra.mxu0 %v172
    %299 = vmatprep.subr.mxu0 0.0
    %300 = vmatpush1.msra.mxu0 %v169
    %301 = vmatprep.subr.mxu0 0.0
    %302 = vmatpush1.msra.mxu0 %v166
    %303 = vmatprep.subr.mxu0 0.0
    %304 = vmatpush1.msra.mxu0 %v163
    %305 = vmatprep.subr.mxu0 0.0
    %306 = vmatpush1.msra.mxu0 %v160
    %307 = vmatprep.subr.mxu0 0.0
    %308 = vmatpush1.msra.mxu0 %v157
    %309 = vmatprep.subr.mxu0 0.0
    %310 = vmatpush1.msra.mxu0 %v154
    %311 = vmatprep.subr.mxu0 0.0
    %312 = vmatpush1.msra.mxu0 %v151
    %313 = vmatprep.subr.mxu0 0.0
    %314 = vmatpush1.msra.mxu0 %v148
    %315 = vmatprep.subr.mxu0 0.0
    %316 = vmatpush1.msra.mxu0 %v145
    %317 = vmatprep.subr.mxu0 0.0
    %318 = vmatpush2.msra.mxu0 0.0
    %319 = vmatprep.subr.mxu0 0.0
    %320 = vmatpush2.msra.mxu0 0.0
    %321 = vmatprep.subr.mxu0 0.0
    %322 = vmatpush2.msra.mxu0 0.0
    %323 = vmatprep.subr.mxu0 0.0
    %324 = vmatpush2.msra.mxu0 0.0
    %325 = vmatprep.subr.mxu0 0.0
    %326 = vmatpush2.msra.mxu0 0.0
    %327 = vmatprep.subr.mxu0 0.0
    %328 = vmatpush2.msra.mxu0 0.0
    %329 = vmatprep.subr.mxu0 0.0
    %330 = vmatpush2.msra.mxu0 0.0
    %331 = vmatprep.subr.mxu0 0.0
    %332 = vmatpush2.msra.mxu0 0.0
    %333 = vmatprep.subr.mxu0 0.0
    %334 = vmatpush2.msra.mxu0 0.0
    %335 = vmatprep.subr.mxu0 0.0
    %336 = vmatpush2.msra.mxu0 0.0
    %337 = vmatprep.subr.mxu0 0.0
    %338 = vmatpush2.msra.mxu0 0.0
    %339 = vmatprep.subr.mxu0 0.0
    %340 = vmatpush2.msra.mxu0 0.0
    %341 = vmatprep.subr.mxu0 0.0
    %342 = vmatpush2.msra.mxu0 0.0
    %343 = vmatprep.subr.mxu0 0.0
    %344 = vmatpush2.msra.mxu0 0.0
    %345 = vmatprep.subr.mxu0 0.0
    %346 = vmatpush2.msra.mxu0 0.0
    %347 = vmatprep.subr.mxu0 0.0
    %348 = vmatpush2.msra.mxu0 0.0
    %349 = vmatprep.mubr.f32.mxu0 0.0
    %350 = vmatmul.mubr.f32.gmra.mxu0 %v141
    %v351 = vpop.f32.mrf.mxu0
    %v352 = vadd.f32 %v204, %v351
    %v353 = vpop.f32.mrf.mxu0
    %354 = vmatprep.mubr.f32.mxu0 0.0
    %355 = vmatmul.mubr.f32.gmra.mxu0 %v142
    %v356 = vpop.f32.mrf.mxu0
    %v357 = vadd.f32 %v204, %v356
    %v358 = vpop.f32.mrf.mxu0
    %359 = vdwg.mxu0
    %362 = vrot.lane.b32.xlu0 %v275, 96
    %v363 = vpop.permute.xlu0 %362
    %364 = vrot.lane.b32.xlu0 %v281, 96
    %v365 = vpop.permute.xlu0 %364
    %366 = vrot.lane.b32.xlu0 %v275, 64
    %v367 = vpop.permute.xlu0 %366
    %368 = vrot.lane.b32.xlu0 %v281, 64
    %v369 = vpop.permute.xlu0 %368
    %370 = vrot.lane.b32.xlu0 %v275, 32
    %v371 = vpop.permute.xlu0 %370
    %372 = vrot.lane.b32.xlu0 %v281, 32
    %v373 = vpop.permute.xlu0 %372
    %376 = vrot.lane.b32.xlu0 %v277, 96
    %v377 = vpop.permute.xlu0 %376
    %378 = vrot.lane.b32.xlu0 %v283, 96
    %v379 = vpop.permute.xlu0 %378
    %380 = vrot.lane.b32.xlu0 %v277, 64
    %v381 = vpop.permute.xlu0 %380
    %382 = vrot.lane.b32.xlu0 %v283, 64
    %v383 = vpop.permute.xlu0 %382
    %384 = vrot.lane.b32.xlu0 %v277, 32
    %v385 = vpop.permute.xlu0 %384
    %386 = vrot.lane.b32.xlu0 %v283, 32
    %v387 = vpop.permute.xlu0 %386
    %390 = vrot.lane.b32.xlu0 %v352, 96
    %v391 = vpop.permute.xlu0 %390
    %392 = vrot.lane.b32.xlu0 %v357, 96
    %v393 = vpop.permute.xlu0 %392
    %396 = vrot.lane.b32.xlu0 %v352, 64
    %v397 = vpop.permute.xlu0 %396
    %398 = vrot.lane.b32.xlu0 %v357, 64
    %v399 = vpop.permute.xlu0 %398
    %402 = vrot.lane.b32.xlu0 %v352, 32
    %v403 = vpop.permute.xlu0 %402
    %404 = vrot.lane.b32.xlu0 %v357, 32
    %v405 = vpop.permute.xlu0 %404
    %vm408 = vcmask 261120
    %v409 = vsel %vm408, %v275, 0
    %v411 = vsel %vm408, %v281, 0
    %v413 = vsel %vm408, %v277, 0
    %v415 = vsel %vm408, %v283, 0
    %417 = vmatprep.subr.mxu0 0.0
    %418 = vmatpush1.xpose.msra.mxu0 0.0
    %419 = vmatprep.subr.mxu0 0.0
    %420 = vmatpush1.xpose.msra.mxu0 0.0
    %421 = vmatprep.subr.mxu0 0.0
    %422 = vmatpush1.xpose.msra.mxu0 0.0
    %423 = vmatprep.subr.mxu0 0.0
    %424 = vmatpush1.xpose.msra.mxu0 0.0
    %425 = vmatprep.subr.mxu0 0.0
    %426 = vmatpush1.xpose.msra.mxu0 0.0
    %427 = vmatprep.subr.mxu0 0.0
    %428 = vmatpush1.xpose.msra.mxu0 0.0
    %429 = vmatprep.subr.mxu0 0.0
    %430 = vmatpush1.xpose.msra.mxu0 0.0
    %431 = vmatprep.subr.mxu0 0.0
    %432 = vmatpush1.xpose.msra.mxu0 0.0
    %433 = vmatprep.subr.mxu0 0.0
    %434 = vmatpush1.xpose.msra.mxu0 0.0
    %435 = vmatprep.subr.mxu0 0.0
    %436 = vmatpush1.xpose.msra.mxu0 0.0
    %437 = vmatprep.subr.mxu0 0.0
    %438 = vmatpush1.xpose.msra.mxu0 0.0
    %439 = vmatprep.subr.mxu0 0.0
    %440 = vmatpush1.xpose.msra.mxu0 0.0
    %441 = vmatprep.subr.mxu0 0.0
    %442 = vmatpush1.xpose.msra.mxu0 0.0
    %443 = vmatprep.subr.mxu0 0.0
    %444 = vmatpush1.xpose.msra.mxu0 0.0
    %445 = vmatprep.subr.mxu0 0.0
    %446 = vmatpush1.xpose.msra.mxu0 %v415
    %447 = vmatprep.subr.mxu0 0.0
    %448 = vmatpush1.xpose.msra.mxu0 %v413
    %449 = vmatprep.subr.mxu0 0.0
    %450 = vmatpush2.xpose.msra.mxu0 0.0
    %451 = vmatprep.subr.mxu0 0.0
    %452 = vmatpush2.xpose.msra.mxu0 0.0
    %453 = vmatprep.subr.mxu0 0.0
    %454 = vmatpush2.xpose.msra.mxu0 0.0
    %455 = vmatprep.subr.mxu0 0.0
    %456 = vmatpush2.xpose.msra.mxu0 0.0
    %457 = vmatprep.subr.mxu0 0.0
    %458 = vmatpush2.xpose.msra.mxu0 0.0
    %459 = vmatprep.subr.mxu0 0.0
    %460 = vmatpush2.xpose.msra.mxu0 0.0
    %461 = vmatprep.subr.mxu0 0.0
    %462 = vmatpush2.xpose.msra.mxu0 0.0
    %463 = vmatprep.subr.mxu0 0.0
    %464 = vmatpush2.xpose.msra.mxu0 0.0
    %465 = vmatprep.subr.mxu0 0.0
    %466 = vmatpush2.xpose.msra.mxu0 0.0
    %467 = vmatprep.subr.mxu0 0.0
    %468 = vmatpush2.xpose.msra.mxu0 0.0
    %469 = vmatprep.subr.mxu0 0.0
    %470 = vmatpush2.xpose.msra.mxu0 0.0
    %471 = vmatprep.subr.mxu0 0.0
    %472 = vmatpush2.xpose.msra.mxu0 0.0
    %473 = vmatprep.subr.mxu0 0.0
    %474 = vmatpush2.xpose.msra.mxu0 0.0
    %475 = vmatprep.subr.mxu0 0.0
    %476 = vmatpush2.xpose.msra.mxu0 0.0
    %477 = vmatprep.subr.mxu0 0.0
    %478 = vmatpush2.xpose.msra.mxu0 0.0
    %479 = vmatprep.subr.mxu0 0.0
    %480 = vmatpush2.xpose.msra.mxu0 0.0
    %481 = vmatprep.mubr.f32.mxu0 0.0
    %482 = vmatmul.mubr.f32.gmra.mxu0 %v409
    %v483 = vpop.f32.mrf.mxu0
    %v484 = vadd.f32 0.0, %v483
    %v485 = vpop.f32.mrf.mxu0
    %486 = vmatprep.mubr.f32.mxu0 0.0
    %487 = vmatmul.mubr.f32.gmra.mxu0 %v411
    %v488 = vpop.f32.mrf.mxu0
    %v489 = vadd.f32 0.0, %v488
    %v490 = vpop.f32.mrf.mxu0
    %491 = vdwg.mxu0
    %v492 = vsel %vm408, %v363, 0
    %v494 = vsel %vm408, %v365, 0
    %v496 = vsel %vm408, %v377, 0
    %v498 = vsel %vm408, %v379, 0
    %500 = vmatprep.subr.mxu0 0.0
    %501 = vmatpush1.xpose.msra.mxu0 0.0
    %502 = vmatprep.subr.mxu0 0.0
    %503 = vmatpush1.xpose.msra.mxu0 0.0
    %504 = vmatprep.subr.mxu0 0.0
    %505 = vmatpush1.xpose.msra.mxu0 0.0
    %506 = vmatprep.subr.mxu0 0.0
    %507 = vmatpush1.xpose.msra.mxu0 0.0
    %508 = vmatprep.subr.mxu0 0.0
    %509 = vmatpush1.xpose.msra.mxu0 0.0
    %510 = vmatprep.subr.mxu0 0.0
    %511 = vmatpush1.xpose.msra.mxu0 0.0
    %512 = vmatprep.subr.mxu0 0.0
    %513 = vmatpush1.xpose.msra.mxu0 0.0
    %514 = vmatprep.subr.mxu0 0.0
    %515 = vmatpush1.xpose.msra.mxu0 0.0
    %516 = vmatprep.subr.mxu0 0.0
    %517 = vmatpush1.xpose.msra.mxu0 0.0
    %518 = vmatprep.subr.mxu0 0.0
    %519 = vmatpush1.xpose.msra.mxu0 0.0
    %520 = vmatprep.subr.mxu0 0.0
    %521 = vmatpush1.xpose.msra.mxu0 0.0
    %522 = vmatprep.subr.mxu0 0.0
    %523 = vmatpush1.xpose.msra.mxu0 0.0
    %524 = vmatprep.subr.mxu0 0.0
    %525 = vmatpush1.xpose.msra.mxu0 0.0
    %526 = vmatprep.subr.mxu0 0.0
    %527 = vmatpush1.xpose.msra.mxu0 0.0
    %528 = vmatprep.subr.mxu0 0.0
    %529 = vmatpush1.xpose.msra.mxu0 %v498
    %530 = vmatprep.subr.mxu0 0.0
    %531 = vmatpush1.xpose.msra.mxu0 %v496
    %532 = vmatprep.subr.mxu0 0.0
    %533 = vmatpush2.xpose.msra.mxu0 0.0
    %534 = vmatprep.subr.mxu0 0.0
    %535 = vmatpush2.xpose.msra.mxu0 0.0
    %536 = vmatprep.subr.mxu0 0.0
    %537 = vmatpush2.xpose.msra.mxu0 0.0
    %538 = vmatprep.subr.mxu0 0.0
    %539 = vmatpush2.xpose.msra.mxu0 0.0
    %540 = vmatprep.subr.mxu0 0.0
    %541 = vmatpush2.xpose.msra.mxu0 0.0
    %542 = vmatprep.subr.mxu0 0.0
    %543 = vmatpush2.xpose.msra.mxu0 0.0
    %544 = vmatprep.subr.mxu0 0.0
    %545 = vmatpush2.xpose.msra.mxu0 0.0
    %546 = vmatprep.subr.mxu0 0.0
    %547 = vmatpush2.xpose.msra.mxu0 0.0
    %548 = vmatprep.subr.mxu0 0.0
    %549 = vmatpush2.xpose.msra.mxu0 0.0
    %550 = vmatprep.subr.mxu0 0.0
    %551 = vmatpush2.xpose.msra.mxu0 0.0
    %552 = vmatprep.subr.mxu0 0.0
    %553 = vmatpush2.xpose.msra.mxu0 0.0
    %554 = vmatprep.subr.mxu0 0.0
    %555 = vmatpush2.xpose.msra.mxu0 0.0
    %556 = vmatprep.subr.mxu0 0.0
    %557 = vmatpush2.xpose.msra.mxu0 0.0
    %558 = vmatprep.subr.mxu0 0.0
    %559 = vmatpush2.xpose.msra.mxu0 0.0
    %560 = vmatprep.subr.mxu0 0.0
    %561 = vmatpush2.xpose.msra.mxu0 0.0
    %562 = vmatprep.subr.mxu0 0.0
    %563 = vmatpush2.xpose.msra.mxu0 0.0
    %564 = vmatprep.mubr.f32.mxu0 0.0
    %565 = vmatmul.mubr.f32.gmra.mxu0 %v492
    %v566 = vpop.f32.mrf.mxu0
    %v567 = vadd.f32 0.0, %v566
    %v568 = vpop.f32.mrf.mxu0
    %569 = vmatprep.mubr.f32.mxu0 0.0
    %570 = vmatmul.mubr.f32.gmra.mxu0 %v494
    %v571 = vpop.f32.mrf.mxu0
    %v572 = vadd.f32 0.0, %v571
    %v573 = vpop.f32.mrf.mxu0
    %574 = vdwg.mxu0
    %v575 = vsel %vm408, %v367, 0
    %v577 = vsel %vm408, %v369, 0
    %v579 = vsel %vm408, %v381, 0
    %v581 = vsel %vm408, %v383, 0
    %583 = vmatprep.subr.mxu0 0.0
    %584 = vmatpush1.xpose.msra.mxu0 0.0
    %585 = vmatprep.subr.mxu0 0.0
    %586 = vmatpush1.xpose.msra.mxu0 0.0
    %587 = vmatprep.subr.mxu0 0.0
    %588 = vmatpush1.xpose.msra.mxu0 0.0
    %589 = vmatprep.subr.mxu0 0.0
    %590 = vmatpush1.xpose.msra.mxu0 0.0
    %591 = vmatprep.subr.mxu0 0.0
    %592 = vmatpush1.xpose.msra.mxu0 0.0
    %593 = vmatprep.subr.mxu0 0.0
    %594 = vmatpush1.xpose.msra.mxu0 0.0
    %595 = vmatprep.subr.mxu0 0.0
    %596 = vmatpush1.xpose.msra.mxu0 0.0
    %597 = vmatprep.subr.mxu0 0.0
    %598 = vmatpush1.xpose.msra.mxu0 0.0
    %599 = vmatprep.subr.mxu0 0.0
    %600 = vmatpush1.xpose.msra.mxu0 0.0
    %601 = vmatprep.subr.mxu0 0.0
    %602 = vmatpush1.xpose.msra.mxu0 0.0
    %603 = vmatprep.subr.mxu0 0.0
    %604 = vmatpush1.xpose.msra.mxu0 0.0
    %605 = vmatprep.subr.mxu0 0.0
    %606 = vmatpush1.xpose.msra.mxu0 0.0
    %607 = vmatprep.subr.mxu0 0.0
    %608 = vmatpush1.xpose.msra.mxu0 0.0
    %609 = vmatprep.subr.mxu0 0.0
    %610 = vmatpush1.xpose.msra.mxu0 0.0
    %611 = vmatprep.subr.mxu0 0.0
    %612 = vmatpush1.xpose.msra.mxu0 %v581
    %613 = vmatprep.subr.mxu0 0.0
    %614 = vmatpush1.xpose.msra.mxu0 %v579
    %615 = vmatprep.subr.mxu0 0.0
    %616 = vmatpush2.xpose.msra.mxu0 0.0
    %617 = vmatprep.subr.mxu0 0.0
    %618 = vmatpush2.xpose.msra.mxu0 0.0
    %619 = vmatprep.subr.mxu0 0.0
    %620 = vmatpush2.xpose.msra.mxu0 0.0
    %621 = vmatprep.subr.mxu0 0.0
    %622 = vmatpush2.xpose.msra.mxu0 0.0
    %623 = vmatprep.subr.mxu0 0.0
    %624 = vmatpush2.xpose.msra.mxu0 0.0
    %625 = vmatprep.subr.mxu0 0.0
    %626 = vmatpush2.xpose.msra.mxu0 0.0
    %627 = vmatprep.subr.mxu0 0.0
    %628 = vmatpush2.xpose.msra.mxu0 0.0
    %629 = vmatprep.subr.mxu0 0.0
    %630 = vmatpush2.xpose.msra.mxu0 0.0
    %631 = vmatprep.subr.mxu0 0.0
    %632 = vmatpush2.xpose.msra.mxu0 0.0
    %633 = vmatprep.subr.mxu0 0.0
    %634 = vmatpush2.xpose.msra.mxu0 0.0
    %635 = vmatprep.subr.mxu0 0.0
    %636 = vmatpush2.xpose.msra.mxu0 0.0
    %637 = vmatprep.subr.mxu0 0.0
    %638 = vmatpush2.xpose.msra.mxu0 0.0
    %639 = vmatprep.subr.mxu0 0.0
    %640 = vmatpush2.xpose.msra.mxu0 0.0
    %641 = vmatprep.subr.mxu0 0.0
    %642 = vmatpush2.xpose.msra.mxu0 0.0
    %643 = vmatprep.subr.mxu0 0.0
    %644 = vmatpush2.xpose.msra.mxu0 0.0
    %645 = vmatprep.subr.mxu0 0.0
    %646 = vmatpush2.xpose.msra.mxu0 0.0
    %647 = vmatprep.mubr.f32.mxu0 0.0
    %648 = vmatmul.mubr.f32.gmra.mxu0 %v575
    %v649 = vpop.f32.mrf.mxu0
    %v650 = vadd.f32 0.0, %v649
    %v651 = vpop.f32.mrf.mxu0
    %652 = vmatprep.mubr.f32.mxu0 0.0
    %653 = vmatmul.mubr.f32.gmra.mxu0 %v577
    %v654 = vpop.f32.mrf.mxu0
    %v655 = vadd.f32 0.0, %v654
    %v656 = vpop.f32.mrf.mxu0
    %657 = vdwg.mxu0
    %v658 = vsel %vm408, %v371, 0
    %v660 = vsel %vm408, %v373, 0
    %v662 = vsel %vm408, %v385, 0
    %v664 = vsel %vm408, %v387, 0
    %666 = vmatprep.subr.mxu0 0.0
    %667 = vmatpush1.xpose.msra.mxu0 0.0
    %668 = vmatprep.subr.mxu0 0.0
    %669 = vmatpush1.xpose.msra.mxu0 0.0
    %670 = vmatprep.subr.mxu0 0.0
    %671 = vmatpush1.xpose.msra.mxu0 0.0
    %672 = vmatprep.subr.mxu0 0.0
    %673 = vmatpush1.xpose.msra.mxu0 0.0
    %674 = vmatprep.subr.mxu0 0.0
    %675 = vmatpush1.xpose.msra.mxu0 0.0
    %676 = vmatprep.subr.mxu0 0.0
    %677 = vmatpush1.xpose.msra.mxu0 0.0
    %678 = vmatprep.subr.mxu0 0.0
    %679 = vmatpush1.xpose.msra.mxu0 0.0
    %680 = vmatprep.subr.mxu0 0.0
    %681 = vmatpush1.xpose.msra.mxu0 0.0
    %682 = vmatprep.subr.mxu0 0.0
    %683 = vmatpush1.xpose.msra.mxu0 0.0
    %684 = vmatprep.subr.mxu0 0.0
    %685 = vmatpush1.xpose.msra.mxu0 0.0
    %686 = vmatprep.subr.mxu0 0.0
    %687 = vmatpush1.xpose.msra.mxu0 0.0
    %688 = vmatprep.subr.mxu0 0.0
    %689 = vmatpush1.xpose.msra.mxu0 0.0
    %690 = vmatprep.subr.mxu0 0.0
    %691 = vmatpush1.xpose.msra.mxu0 0.0
    %692 = vmatprep.subr.mxu0 0.0
    %693 = vmatpush1.xpose.msra.mxu0 0.0
    %694 = vmatprep.subr.mxu0 0.0
    %695 = vmatpush1.xpose.msra.mxu0 %v664
    %696 = vmatprep.subr.mxu0 0.0
    %697 = vmatpush1.xpose.msra.mxu0 %v662
    %698 = vmatprep.subr.mxu0 0.0
    %699 = vmatpush2.xpose.msra.mxu0 0.0
    %700 = vmatprep.subr.mxu0 0.0
    %701 = vmatpush2.xpose.msra.mxu0 0.0
    %702 = vmatprep.subr.mxu0 0.0
    %703 = vmatpush2.xpose.msra.mxu0 0.0
    %704 = vmatprep.subr.mxu0 0.0
    %705 = vmatpush2.xpose.msra.mxu0 0.0
    %706 = vmatprep.subr.mxu0 0.0
    %707 = vmatpush2.xpose.msra.mxu0 0.0
    %708 = vmatprep.subr.mxu0 0.0
    %709 = vmatpush2.xpose.msra.mxu0 0.0
    %710 = vmatprep.subr.mxu0 0.0
    %711 = vmatpush2.xpose.msra.mxu0 0.0
    %712 = vmatprep.subr.mxu0 0.0
    %713 = vmatpush2.xpose.msra.mxu0 0.0
    %714 = vmatprep.subr.mxu0 0.0
    %715 = vmatpush2.xpose.msra.mxu0 0.0
    %716 = vmatprep.subr.mxu0 0.0
    %717 = vmatpush2.xpose.msra.mxu0 0.0
    %718 = vmatprep.subr.mxu0 0.0
    %719 = vmatpush2.xpose.msra.mxu0 0.0
    %720 = vmatprep.subr.mxu0 0.0
    %721 = vmatpush2.xpose.msra.mxu0 0.0
    %722 = vmatprep.subr.mxu0 0.0
    %723 = vmatpush2.xpose.msra.mxu0 0.0
    %724 = vmatprep.subr.mxu0 0.0
    %725 = vmatpush2.xpose.msra.mxu0 0.0
    %726 = vmatprep.subr.mxu0 0.0
    %727 = vmatpush2.xpose.msra.mxu0 0.0
    %728 = vmatprep.subr.mxu0 0.0
    %729 = vmatpush2.xpose.msra.mxu0 0.0
    %730 = vmatprep.mubr.f32.mxu0 0.0
    %731 = vmatmul.mubr.f32.gmra.mxu0 %v658
    %v732 = vpop.f32.mrf.mxu0
    %v733 = vadd.f32 0.0, %v732
    %v734 = vpop.f32.mrf.mxu0
    %735 = vmatprep.mubr.f32.mxu0 0.0
    %736 = vmatmul.mubr.f32.gmra.mxu0 %v660
    %v737 = vpop.f32.mrf.mxu0
    %v738 = vadd.f32 0.0, %v737
    %v739 = vpop.f32.mrf.mxu0
    %740 = vdwg.mxu0
    %v741 = vmul.f32 %v484, 0.17677669
    %v742 = vmul.f32 %v489, 0.17677669
    %v743 = vmul.f32 %v567, 0.17677669
    %v744 = vmul.f32 %v572, 0.17677669
    %v745 = vmul.f32 %v650, 0.17677669
    %v746 = vmul.f32 %v655, 0.17677669
    %v747 = vmul.f32 %v733, 0.17677669
    %v748 = vmul.f32 %v738, 0.17677669
    %v749 = vadd.f32 %v741, %v100
    %v750 = vadd.f32 %v742, %v101
    %v751 = vadd.f32 %v743, %v100
    %v752 = vadd.f32 %v744, %v101
    %v753 = vadd.f32 %v745, %v100
    %v754 = vadd.f32 %v746, %v101
    %v755 = vadd.f32 %v747, %v100
    %v756 = vadd.f32 %v748, %v101
    %vm757 = vcmask 130048
    %v758 = vsel %vm757, %v749, -inf
    %759 = vmax.xlane.f32.xlu0 %v758
    %v760 = vpop.xlane.xlu0 %759
    %v761 = vsel %vm757, %v750, -inf
    %762 = vmax.xlane.f32.xlu0 %v761
    %v763 = vpop.xlane.xlu0 %762
    %v764 = vsel %vm757, %v751, -inf
    %765 = vmax.xlane.f32.xlu0 %v764
    %v766 = vpop.xlane.xlu0 %765
    %v767 = vsel %vm757, %v752, -inf
    %768 = vmax.xlane.f32.xlu0 %v767
    %v769 = vpop.xlane.xlu0 %768
    %v770 = vsel %vm757, %v753, -inf
    %771 = vmax.xlane.f32.xlu0 %v770
    %v772 = vpop.xlane.xlu0 %771
    %v773 = vsel %vm757, %v754, -inf
    %774 = vmax.xlane.f32.xlu0 %v773
    %v775 = vpop.xlane.xlu0 %774
    %v776 = vsel %vm757, %v755, -inf
    %777 = vmax.xlane.f32.xlu0 %v776
    %v778 = vpop.xlane.xlu0 %777
    %v779 = vsel %vm757, %v756, -inf
    %780 = vmax.xlane.f32.xlu0 %v779
    %v781 = vpop.xlane.xlu0 %780
    %v782 = vsub.f32 %v749, %v760
    %v783 = vsub.f32 %v750, %v763
    %v784 = vsub.f32 %v751, %v766
    %v785 = vsub.f32 %v752, %v769
    %v786 = vsub.f32 %v753, %v772
    %v787 = vsub.f32 %v754, %v775
    %v788 = vsub.f32 %v755, %v778
    %v789 = vsub.f32 %v756, %v781
    %v790 = vmul.f32 %v782, 1.442695
    %v791 = vpow.pop %v790
    %v792 = vmul.f32 %v783, 1.442695
    %v793 = vpow.pop %v792
    %v794 = vmul.f32 %v784, 1.442695
    %v795 = vpow.pop %v794
    %v796 = vmul.f32 %v785, 1.442695
    %v797 = vpow.pop %v796
    %v798 = vmul.f32 %v786, 1.442695
    %v799 = vpow.pop %v798
    %v800 = vmul.f32 %v787, 1.442695
    %v801 = vpow.pop %v800
    %v802 = vmul.f32 %v788, 1.442695
    %v803 = vpow.pop %v802
    %v804 = vmul.f32 %v789, 1.442695
    %v805 = vpow.pop %v804
    %v806 = vsel %vm757, %v791, 0.0
    %807 = vadd.xlane.f32.xlu0 %v806
    %v808 = vpop.xlane.xlu0 %807
    %v809 = vsel %vm757, %v793, 0.0
    %810 = vadd.xlane.f32.xlu0 %v809
    %v811 = vpop.xlane.xlu0 %810
    %v812 = vsel %vm757, %v795, 0.0
    %813 = vadd.xlane.f32.xlu0 %v812
    %v814 = vpop.xlane.xlu0 %813
    %v815 = vsel %vm757, %v797, 0.0
    %816 = vadd.xlane.f32.xlu0 %v815
    %v817 = vpop.xlane.xlu0 %816
    %v818 = vsel %vm757, %v799, 0.0
    %819 = vadd.xlane.f32.xlu0 %v818
    %v820 = vpop.xlane.xlu0 %819
    %v821 = vsel %vm757, %v801, 0.0
    %822 = vadd.xlane.f32.xlu0 %v821
    %v823 = vpop.xlane.xlu0 %822
    %v824 = vsel %vm757, %v803, 0.0
    %825 = vadd.xlane.f32.xlu0 %v824
    %v826 = vpop.xlane.xlu0 %825
    %v827 = vsel %vm757, %v805, 0.0
    %828 = vadd.xlane.f32.xlu0 %v827
    %v829 = vpop.xlane.xlu0 %828
    %v830 = vrcp.pop %v808
    %v831 = vrcp.pop %v811
    %v832 = vrcp.pop %v814
    %v833 = vrcp.pop %v817
    %v834 = vrcp.pop %v820
    %v835 = vrcp.pop %v823
    %v836 = vrcp.pop %v826
    %v837 = vrcp.pop %v829
    %v838 = vmul.f32 %v791, %v830
    %v839 = vmul.f32 %v793, %v831
    %v840 = vmul.f32 %v795, %v832
    %v841 = vmul.f32 %v797, %v833
    %v842 = vmul.f32 %v799, %v834
    %v843 = vmul.f32 %v801, %v835
    %v844 = vmul.f32 %v803, %v836
    %v845 = vmul.f32 %v805, %v837
    %v847 = vsel %vm757, %v838, 0
    %v850 = vsel %vm757, %v839, 0
    %852 = vmatprep.subr.mxu0 0.0
    %853 = vmatpush1.msra.mxu0 0.0
    %854 = vmatprep.subr.mxu0 0.0
    %855 = vmatpush1.msra.mxu0 0.0
    %856 = vmatprep.subr.mxu0 0.0
    %857 = vmatpush1.msra.mxu0 0.0
    %858 = vmatprep.subr.mxu0 0.0
    %859 = vmatpush1.msra.mxu0 0.0
    %860 = vmatprep.subr.mxu0 0.0
    %861 = vmatpush1.msra.mxu0 0.0
    %862 = vmatprep.subr.mxu0 0.0
    %863 = vmatpush1.msra.mxu0 0.0
    %864 = vmatprep.subr.mxu0 0.0
    %865 = vmatpush1.msra.mxu0 0.0
    %866 = vmatprep.subr.mxu0 0.0
    %867 = vmatpush1.msra.mxu0 0.0
    %868 = vmatprep.subr.mxu0 0.0
    %869 = vmatpush1.msra.mxu0 0.0
    %870 = vmatprep.subr.mxu0 0.0
    %871 = vmatpush1.msra.mxu0 0.0
    %872 = vmatprep.subr.mxu0 0.0
    %873 = vmatpush1.msra.mxu0 0.0
    %874 = vmatprep.subr.mxu0 0.0
    %875 = vmatpush1.msra.mxu0 0.0
    %876 = vmatprep.subr.mxu0 0.0
    %877 = vmatpush1.msra.mxu0 0.0
    %878 = vmatprep.subr.mxu0 0.0
    %879 = vmatpush1.msra.mxu0 0.0
    %880 = vmatprep.subr.mxu0 0.0
    %881 = vmatpush1.msra.mxu0 %v357
    %882 = vmatprep.subr.mxu0 0.0
    %883 = vmatpush1.msra.mxu0 %v352
    %884 = vmatprep.subr.mxu0 0.0
    %885 = vmatpush2.msra.mxu0 0.0
    %886 = vmatprep.subr.mxu0 0.0
    %887 = vmatpush2.msra.mxu0 0.0
    %888 = vmatprep.subr.mxu0 0.0
    %889 = vmatpush2.msra.mxu0 0.0
    %890 = vmatprep.subr.mxu0 0.0
    %891 = vmatpush2.msra.mxu0 0.0
    %892 = vmatprep.subr.mxu0 0.0
    %893 = vmatpush2.msra.mxu0 0.0
    %894 = vmatprep.subr.mxu0 0.0
    %895 = vmatpush2.msra.mxu0 0.0
    %896 = vmatprep.subr.mxu0 0.0
    %897 = vmatpush2.msra.mxu0 0.0
    %898 = vmatprep.subr.mxu0 0.0
    %899 = vmatpush2.msra.mxu0 0.0
    %900 = vmatprep.subr.mxu0 0.0
    %901 = vmatpush2.msra.mxu0 0.0
    %902 = vmatprep.subr.mxu0 0.0
    %903 = vmatpush2.msra.mxu0 0.0
    %904 = vmatprep.subr.mxu0 0.0
    %905 = vmatpush2.msra.mxu0 0.0
    %906 = vmatprep.subr.mxu0 0.0
    %907 = vmatpush2.msra.mxu0 0.0
    %908 = vmatprep.subr.mxu0 0.0
    %909 = vmatpush2.msra.mxu0 0.0
    %910 = vmatprep.subr.mxu0 0.0
    %911 = vmatpush2.msra.mxu0 0.0
    %912 = vmatprep.subr.mxu0 0.0
    %913 = vmatpush2.msra.mxu0 0.0
    %914 = vmatprep.subr.mxu0 0.0
    %915 = vmatpush2.msra.mxu0 0.0
    %916 = vmatprep.mubr.f32.mxu0 0.0
    %917 = vmatmul.mubr.f32.gmra.mxu0 %v847
    %v918 = vpop.f32.mrf.mxu0
    %v919 = vadd.f32 0.0, %v918
    %v920 = vpop.f32.mrf.mxu0
    %921 = vmatprep.mubr.f32.mxu0 0.0
    %922 = vmatmul.mubr.f32.gmra.mxu0 %v850
    %v923 = vpop.f32.mrf.mxu0
    %v924 = vadd.f32 0.0, %v923
    %v925 = vpop.f32.mrf.mxu0
    %926 = vdwg.mxu0
    %v928 = vsel %vm757, %v840, 0
    %v931 = vsel %vm757, %v841, 0
    %933 = vmatprep.subr.mxu0 0.0
    %934 = vmatpush1.msra.mxu0 0.0
    %935 = vmatprep.subr.mxu0 0.0
    %936 = vmatpush1.msra.mxu0 0.0
    %937 = vmatprep.subr.mxu0 0.0
    %938 = vmatpush1.msra.mxu0 0.0
    %939 = vmatprep.subr.mxu0 0.0
    %940 = vmatpush1.msra.mxu0 0.0
    %941 = vmatprep.subr.mxu0 0.0
    %942 = vmatpush1.msra.mxu0 0.0
    %943 = vmatprep.subr.mxu0 0.0
    %944 = vmatpush1.msra.mxu0 0.0
    %945 = vmatprep.subr.mxu0 0.0
    %946 = vmatpush1.msra.mxu0 0.0
    %947 = vmatprep.subr.mxu0 0.0
    %948 = vmatpush1.msra.mxu0 0.0
    %949 = vmatprep.subr.mxu0 0.0
    %950 = vmatpush1.msra.mxu0 0.0
    %951 = vmatprep.subr.mxu0 0.0
    %952 = vmatpush1.msra.mxu0 0.0
    %953 = vmatprep.subr.mxu0 0.0
    %954 = vmatpush1.msra.mxu0 0.0
    %955 = vmatprep.subr.mxu0 0.0
    %956 = vmatpush1.msra.mxu0 0.0
    %957 = vmatprep.subr.mxu0 0.0
    %958 = vmatpush1.msra.mxu0 0.0
    %959 = vmatprep.subr.mxu0 0.0
    %960 = vmatpush1.msra.mxu0 0.0
    %961 = vmatprep.subr.mxu0 0.0
    %962 = vmatpush1.msra.mxu0 %v393
    %963 = vmatprep.subr.mxu0 0.0
    %964 = vmatpush1.msra.mxu0 %v391
    %965 = vmatprep.subr.mxu0 0.0
    %966 = vmatpush2.msra.mxu0 0.0
    %967 = vmatprep.subr.mxu0 0.0
    %968 = vmatpush2.msra.mxu0 0.0
    %969 = vmatprep.subr.mxu0 0.0
    %970 = vmatpush2.msra.mxu0 0.0
    %971 = vmatprep.subr.mxu0 0.0
    %972 = vmatpush2.msra.mxu0 0.0
    %973 = vmatprep.subr.mxu0 0.0
    %974 = vmatpush2.msra.mxu0 0.0
    %975 = vmatprep.subr.mxu0 0.0
    %976 = vmatpush2.msra.mxu0 0.0
    %977 = vmatprep.subr.mxu0 0.0
    %978 = vmatpush2.msra.mxu0 0.0
    %979 = vmatprep.subr.mxu0 0.0
    %980 = vmatpush2.msra.mxu0 0.0
    %981 = vmatprep.subr.mxu0 0.0
    %982 = vmatpush2.msra.mxu0 0.0
    %983 = vmatprep.subr.mxu0 0.0
    %984 = vmatpush2.msra.mxu0 0.0
    %985 = vmatprep.subr.mxu0 0.0
    %986 = vmatpush2.msra.mxu0 0.0
    %987 = vmatprep.subr.mxu0 0.0
    %988 = vmatpush2.msra.mxu0 0.0
    %989 = vmatprep.subr.mxu0 0.0
    %990 = vmatpush2.msra.mxu0 0.0
    %991 = vmatprep.subr.mxu0 0.0
    %992 = vmatpush2.msra.mxu0 0.0
    %993 = vmatprep.subr.mxu0 0.0
    %994 = vmatpush2.msra.mxu0 0.0
    %995 = vmatprep.subr.mxu0 0.0
    %996 = vmatpush2.msra.mxu0 0.0
    %997 = vmatprep.mubr.f32.mxu0 0.0
    %998 = vmatmul.mubr.f32.gmra.mxu0 %v928
    %v999 = vpop.f32.mrf.mxu0
    %v1000 = vadd.f32 0.0, %v999
    %v1001 = vpop.f32.mrf.mxu0
    %1002 = vmatprep.mubr.f32.mxu0 0.0
    %1003 = vmatmul.mubr.f32.gmra.mxu0 %v931
    %v1004 = vpop.f32.mrf.mxu0
    %v1005 = vadd.f32 0.0, %v1004
    %v1006 = vpop.f32.mrf.mxu0
    %1007 = vdwg.mxu0
    %v1009 = vsel %vm757, %v842, 0
    %v1012 = vsel %vm757, %v843, 0
    %1014 = vmatprep.subr.mxu0 0.0
    %1015 = vmatpush1.msra.mxu0 0.0
    %1016 = vmatprep.subr.mxu0 0.0
    %1017 = vmatpush1.msra.mxu0 0.0
    %1018 = vmatprep.subr.mxu0 0.0
    %1019 = vmatpush1.msra.mxu0 0.0
    %1020 = vmatprep.subr.mxu0 0.0
    %1021 = vmatpush1.msra.mxu0 0.0
    %1022 = vmatprep.subr.mxu0 0.0
    %1023 = vmatpush1.msra.mxu0 0.0
    %1024 = vmatprep.subr.mxu0 0.0
    %1025 = vmatpush1.msra.mxu0 0.0
    %1026 = vmatprep.subr.mxu0 0.0
    %1027 = vmatpush1.msra.mxu0 0.0
    %1028 = vmatprep.subr.mxu0 0.0
    %1029 = vmatpush1.msra.mxu0 0.0
    %1030 = vmatprep.subr.mxu0 0.0
    %1031 = vmatpush1.msra.mxu0 0.0
    %1032 = vmatprep.subr.mxu0 0.0
    %1033 = vmatpush1.msra.mxu0 0.0
    %1034 = vmatprep.subr.mxu0 0.0
    %1035 = vmatpush1.msra.mxu0 0.0
    %1036 = vmatprep.subr.mxu0 0.0
    %1037 = vmatpush1.msra.mxu0 0.0
    %1038 = vmatprep.subr.mxu0 0.0
    %1039 = vmatpush1.msra.mxu0 0.0
    %1040 = vmatprep.subr.mxu0 0.0
    %1041 = vmatpush1.msra.mxu0 0.0
    %1042 = vmatprep.subr.mxu0 0.0
    %1043 = vmatpush1.msra.mxu0 %v399
    %1044 = vmatprep.subr.mxu0 0.0
    %1045 = vmatpush1.msra.mxu0 %v397
    %1046 = vmatprep.subr.mxu0 0.0
    %1047 = vmatpush2.msra.mxu0 0.0
    %1048 = vmatprep.subr.mxu0 0.0
    %1049 = vmatpush2.msra.mxu0 0.0
    %1050 = vmatprep.subr.mxu0 0.0
    %1051 = vmatpush2.msra.mxu0 0.0
    %1052 = vmatprep.subr.mxu0 0.0
    %1053 = vmatpush2.msra.mxu0 0.0
    %1054 = vmatprep.subr.mxu0 0.0
    %1055 = vmatpush2.msra.mxu0 0.0
    %1056 = vmatprep.subr.mxu0 0.0
    %1057 = vmatpush2.msra.mxu0 0.0
    %1058 = vmatprep.subr.mxu0 0.0
    %1059 = vmatpush2.msra.mxu0 0.0
    %1060 = vmatprep.subr.mxu0 0.0
    %1061 = vmatpush2.msra.mxu0 0.0
    %1062 = vmatprep.subr.mxu0 0.0
    %1063 = vmatpush2.msra.mxu0 0.0
    %1064 = vmatprep.subr.mxu0 0.0
    %1065 = vmatpush2.msra.mxu0 0.0
    %1066 = vmatprep.subr.mxu0 0.0
    %1067 = vmatpush2.msra.mxu0 0.0
    %1068 = vmatprep.subr.mxu0 0.0
    %1069 = vmatpush2.msra.mxu0 0.0
    %1070 = vmatprep.subr.mxu0 0.0
    %1071 = vmatpush2.msra.mxu0 0.0
    %1072 = vmatprep.subr.mxu0 0.0
    %1073 = vmatpush2.msra.mxu0 0.0
    %1074 = vmatprep.subr.mxu0 0.0
    %1075 = vmatpush2.msra.mxu0 0.0
    %1076 = vmatprep.subr.mxu0 0.0
    %1077 = vmatpush2.msra.mxu0 0.0
    %1078 = vmatprep.mubr.f32.mxu0 0.0
    %1079 = vmatmul.mubr.f32.gmra.mxu0 %v1009
    %v1080 = vpop.f32.mrf.mxu0
    %v1081 = vadd.f32 0.0, %v1080
    %v1082 = vpop.f32.mrf.mxu0
    %1083 = vmatprep.mubr.f32.mxu0 0.0
    %1084 = vmatmul.mubr.f32.gmra.mxu0 %v1012
    %v1085 = vpop.f32.mrf.mxu0
    %v1086 = vadd.f32 0.0, %v1085
    %v1087 = vpop.f32.mrf.mxu0
    %1088 = vdwg.mxu0
    %v1090 = vsel %vm757, %v844, 0
    %v1093 = vsel %vm757, %v845, 0
    %1095 = vmatprep.subr.mxu0 0.0
    %1096 = vmatpush1.msra.mxu0 0.0
    %1097 = vmatprep.subr.mxu0 0.0
    %1098 = vmatpush1.msra.mxu0 0.0
    %1099 = vmatprep.subr.mxu0 0.0
    %1100 = vmatpush1.msra.mxu0 0.0
    %1101 = vmatprep.subr.mxu0 0.0
    %1102 = vmatpush1.msra.mxu0 0.0
    %1103 = vmatprep.subr.mxu0 0.0
    %1104 = vmatpush1.msra.mxu0 0.0
    %1105 = vmatprep.subr.mxu0 0.0
    %1106 = vmatpush1.msra.mxu0 0.0
    %1107 = vmatprep.subr.mxu0 0.0
    %1108 = vmatpush1.msra.mxu0 0.0
    %1109 = vmatprep.subr.mxu0 0.0
    %1110 = vmatpush1.msra.mxu0 0.0
    %1111 = vmatprep.subr.mxu0 0.0
    %1112 = vmatpush1.msra.mxu0 0.0
    %1113 = vmatprep.subr.mxu0 0.0
    %1114 = vmatpush1.msra.mxu0 0.0
    %1115 = vmatprep.subr.mxu0 0.0
    %1116 = vmatpush1.msra.mxu0 0.0
    %1117 = vmatprep.subr.mxu0 0.0
    %1118 = vmatpush1.msra.mxu0 0.0
    %1119 = vmatprep.subr.mxu0 0.0
    %1120 = vmatpush1.msra.mxu0 0.0
    %1121 = vmatprep.subr.mxu0 0.0
    %1122 = vmatpush1.msra.mxu0 0.0
    %1123 = vmatprep.subr.mxu0 0.0
    %1124 = vmatpush1.msra.mxu0 %v405
    %1125 = vmatprep.subr.mxu0 0.0
    %1126 = vmatpush1.msra.mxu0 %v403
    %1127 = vmatprep.subr.mxu0 0.0
    %1128 = vmatpush2.msra.mxu0 0.0
    %1129 = vmatprep.subr.mxu0 0.0
    %1130 = vmatpush2.msra.mxu0 0.0
    %1131 = vmatprep.subr.mxu0 0.0
    %1132 = vmatpush2.msra.mxu0 0.0
    %1133 = vmatprep.subr.mxu0 0.0
    %1134 = vmatpush2.msra.mxu0 0.0
    %1135 = vmatprep.subr.mxu0 0.0
    %1136 = vmatpush2.msra.mxu0 0.0
    %1137 = vmatprep.subr.mxu0 0.0
    %1138 = vmatpush2.msra.mxu0 0.0
    %1139 = vmatprep.subr.mxu0 0.0
    %1140 = vmatpush2.msra.mxu0 0.0
    %1141 = vmatprep.subr.mxu0 0.0
    %1142 = vmatpush2.msra.mxu0 0.0
    %1143 = vmatprep.subr.mxu0 0.0
    %1144 = vmatpush2.msra.mxu0 0.0
    %1145 = vmatprep.subr.mxu0 0.0
    %1146 = vmatpush2.msra.mxu0 0.0
    %1147 = vmatprep.subr.mxu0 0.0
    %1148 = vmatpush2.msra.mxu0 0.0
    %1149 = vmatprep.subr.mxu0 0.0
    %1150 = vmatpush2.msra.mxu0 0.0
    %1151 = vmatprep.subr.mxu0 0.0
    %1152 = vmatpush2.msra.mxu0 0.0
    %1153 = vmatprep.subr.mxu0 0.0
    %1154 = vmatpush2.msra.mxu0 0.0
    %1155 = vmatprep.subr.mxu0 0.0
    %1156 = vmatpush2.msra.mxu0 0.0
    %1157 = vmatprep.subr.mxu0 0.0
    %1158 = vmatpush2.msra.mxu0 0.0
    %1159 = vmatprep.mubr.f32.mxu0 0.0
    %1160 = vmatmul.mubr.f32.gmra.mxu0 %v1090
    %v1161 = vpop.f32.mrf.mxu0
    %v1162 = vadd.f32 0.0, %v1161
    %v1163 = vpop.f32.mrf.mxu0
    %1164 = vmatprep.mubr.f32.mxu0 0.0
    %1165 = vmatmul.mubr.f32.gmra.mxu0 %v1093
    %v1166 = vpop.f32.mrf.mxu0
    %v1167 = vadd.f32 0.0, %v1166
    %v1168 = vpop.f32.mrf.mxu0
    %1169 = vdwg.mxu0
    %1172 = vrot.lane.b32.xlu0 %v1000, 32
    %v1173 = vpop.permute.xlu0 %1172
    %1174 = vrot.lane.b32.xlu0 %v1005, 32
    %v1175 = vpop.permute.xlu0 %1174
    %1180 = vrot.lane.b32.xlu0 %v1081, 64
    %v1181 = vpop.permute.xlu0 %1180
    %1182 = vrot.lane.b32.xlu0 %v1086, 64
    %v1183 = vpop.permute.xlu0 %1182
    %1188 = vrot.lane.b32.xlu0 %v1162, 96
    %v1189 = vpop.permute.xlu0 %1188
    %1190 = vrot.lane.b32.xlu0 %v1167, 96
    %v1191 = vpop.permute.xlu0 %1190
    %v1194 = vsel %vm408, %v919, %v1173
    %v1195 = vsel %vm408, %v924, %v1175
    %vm1196 = vcmask 523264
    %v1197 = vsel %vm1196, %v1194, %v1181
    %v1198 = vsel %vm1196, %v1195, %v1183
    %vm1199 = vcmask 785408
    %v1200 = vsel %vm1199, %v1197, %v1189
    %v1201 = vsel %vm1199, %v1198, %v1191
    %v1202 = vld [vmem:[%s6] sm:$0xff]
    %v1203 = vld [vmem:[%s6 + $0x8] sm:$0xff]
    %v1204 = vld [vmem:[%s6 + $0x10] sm:$0xff]
    %v1205 = vld [vmem:[%s6 + $0x18] sm:$0xff]
    %v1206 = vld [vmem:[%s6 + $0x20] sm:$0xff]
    %v1207 = vld [vmem:[%s6 + $0x28] sm:$0xff]
    %v1208 = vld [vmem:[%s6 + $0x30] sm:$0xff]
    %v1209 = vld [vmem:[%s6 + $0x38] sm:$0xff]
    %v1210 = vld [vmem:[%s6 + $0x40] sm:$0xff]
    %v1211 = vld [vmem:[%s6 + $0x48] sm:$0xff]
    %v1212 = vld [vmem:[%s6 + $0x50] sm:$0xff]
    %v1213 = vld [vmem:[%s6 + $0x58] sm:$0xff]
    %v1214 = vld [vmem:[%s6 + $0x60] sm:$0xff]
    %v1215 = vld [vmem:[%s6 + $0x68] sm:$0xff]
    %v1216 = vld [vmem:[%s6 + $0x70] sm:$0xff]
    %v1217 = vld [vmem:[%s6 + $0x78] sm:$0xff]
    %1218 = vmatprep.subr.mxu0 0.0
    %1219 = vmatpush1.msra.mxu0 %v1217
    %1220 = vmatprep.subr.mxu0 0.0
    %1221 = vmatpush1.msra.mxu0 %v1216
    %1222 = vmatprep.subr.mxu0 0.0
    %1223 = vmatpush1.msra.mxu0 %v1215
    %1224 = vmatprep.subr.mxu0 0.0
    %1225 = vmatpush1.msra.mxu0 %v1214
    %1226 = vmatprep.subr.mxu0 0.0
    %1227 = vmatpush1.msra.mxu0 %v1213
    %1228 = vmatprep.subr.mxu0 0.0
    %1229 = vmatpush1.msra.mxu0 %v1212
    %1230 = vmatprep.subr.mxu0 0.0
    %1231 = vmatpush1.msra.mxu0 %v1211
    %1232 = vmatprep.subr.mxu0 0.0
    %1233 = vmatpush1.msra.mxu0 %v1210
    %1234 = vmatprep.subr.mxu0 0.0
    %1235 = vmatpush1.msra.mxu0 %v1209
    %1236 = vmatprep.subr.mxu0 0.0
    %1237 = vmatpush1.msra.mxu0 %v1208
    %1238 = vmatprep.subr.mxu0 0.0
    %1239 = vmatpush1.msra.mxu0 %v1207
    %1240 = vmatprep.subr.mxu0 0.0
    %1241 = vmatpush1.msra.mxu0 %v1206
    %1242 = vmatprep.subr.mxu0 0.0
    %1243 = vmatpush1.msra.mxu0 %v1205
    %1244 = vmatprep.subr.mxu0 0.0
    %1245 = vmatpush1.msra.mxu0 %v1204
    %1246 = vmatprep.subr.mxu0 0.0
    %1247 = vmatpush1.msra.mxu0 %v1203
    %1248 = vmatprep.subr.mxu0 0.0
    %1249 = vmatpush1.msra.mxu0 %v1202
    %1250 = vmatprep.subr.mxu0 0.0
    %1251 = vmatpush2.msra.mxu0 0.0
    %1252 = vmatprep.subr.mxu0 0.0
    %1253 = vmatpush2.msra.mxu0 0.0
    %1254 = vmatprep.subr.mxu0 0.0
    %1255 = vmatpush2.msra.mxu0 0.0
    %1256 = vmatprep.subr.mxu0 0.0
    %1257 = vmatpush2.msra.mxu0 0.0
    %1258 = vmatprep.subr.mxu0 0.0
    %1259 = vmatpush2.msra.mxu0 0.0
    %1260 = vmatprep.subr.mxu0 0.0
    %1261 = vmatpush2.msra.mxu0 0.0
    %1262 = vmatprep.subr.mxu0 0.0
    %1263 = vmatpush2.msra.mxu0 0.0
    %1264 = vmatprep.subr.mxu0 0.0
    %1265 = vmatpush2.msra.mxu0 0.0
    %1266 = vmatprep.subr.mxu0 0.0
    %1267 = vmatpush2.msra.mxu0 0.0
    %1268 = vmatprep.subr.mxu0 0.0
    %1269 = vmatpush2.msra.mxu0 0.0
    %1270 = vmatprep.subr.mxu0 0.0
    %1271 = vmatpush2.msra.mxu0 0.0
    %1272 = vmatprep.subr.mxu0 0.0
    %1273 = vmatpush2.msra.mxu0 0.0
    %1274 = vmatprep.subr.mxu0 0.0
    %1275 = vmatpush2.msra.mxu0 0.0
    %1276 = vmatprep.subr.mxu0 0.0
    %1277 = vmatpush2.msra.mxu0 0.0
    %1278 = vmatprep.subr.mxu0 0.0
    %1279 = vmatpush2.msra.mxu0 0.0
    %1280 = vmatprep.subr.mxu0 0.0
    %1281 = vmatpush2.msra.mxu0 0.0
    %1282 = vmatprep.mubr.f32.mxu0 0.0
    %1283 = vmatmul.mubr.f32.gmra.mxu0 %v1200
    %v1284 = vpop.f32.mrf.mxu0
    %v1285 = vadd.f32 0.0, %v1284
    %v1286 = vpop.f32.mrf.mxu0
    %1287 = vmatprep.mubr.f32.mxu0 0.0
    %1288 = vmatmul.mubr.f32.gmra.mxu0 %v1201
    %v1289 = vpop.f32.mrf.mxu0
    %v1290 = vadd.f32 0.0, %v1289
    %v1291 = vpop.f32.mrf.mxu0
    %1292 = vdwg.mxu0
    %v1293 = vadd.f32 %v98, %v1285
    %v1294 = vadd.f32 %v99, %v1290
    %v1295 = vld [vmem:[%s7] sm:$0x1]
    %v1297 = vlaneseq
    %v1298 = vshrl.u32 %v1297, 7
    %v1299 = vsub.s32 0, %v1298
    %v1300 = vrot.slane %v1295, %v1299
    %v1302 = vadd.f32 %v1293, %v1300
    %v1303 = vadd.f32 %v1294, %v1300
    %v1304 = vld [vmem:[%s8] sm:$0x1]
    %v1305 = vld [vmem:[%s9] sm:$0x1]
    %1306 = vadd.xlane.f32.xlu0 %v1302
    %v1307 = vpop.xlane.xlu0 %1306
    %1308 = vadd.xlane.f32.xlu0 %v1303
    %v1309 = vpop.xlane.xlu0 %1308
    %v1310 = vmul.f32 %v1307, %v108
    %v1311 = vmul.f32 %v1309, %v108
    %v1312 = vsub.f32 %v1302, %v1310
    %v1313 = vsub.f32 %v1303, %v1311
    %v1314 = vmul.f32 %v1312, %v1312
    %v1315 = vmul.f32 %v1313, %v1313
    %1316 = vadd.xlane.f32.xlu0 %v1314
    %v1317 = vpop.xlane.xlu0 %1316
    %1318 = vadd.xlane.f32.xlu0 %v1315
    %v1319 = vpop.xlane.xlu0 %1318
    %v1320 = vmul.f32 %v1317, %v108
    %v1321 = vmul.f32 %v1319, %v108
    %v1322 = vadd.f32 %v1320, 1e-05
    %v1323 = vadd.f32 %v1321, 1e-05
    %v1324 = vrsqrt.pop %v1322
    %v1325 = vrsqrt.pop %v1323
    %v1326 = vmul.f32 %v1312, %v1324
    %v1327 = vmul.f32 %v1313, %v1325
    %v1329 = vlaneseq
    %v1330 = vshrl.u32 %v1329, 7
    %v1331 = vsub.s32 0, %v1330
    %v1332 = vrot.slane %v1304, %v1331
    %v1334 = vmul.f32 %v1326, %v1332
    %v1335 = vmul.f32 %v1327, %v1332
    %v1337 = vlaneseq
    %v1338 = vshrl.u32 %v1337, 7
    %v1339 = vsub.s32 0, %v1338
    %v1340 = vrot.slane %v1305, %v1339
    %v1342 = vadd.f32 %v1334, %v1340
    %v1343 = vadd.f32 %v1335, %v1340
    %v1344 = vld [vmem:[#allocation5] sm:$0xff]
    %v1345 = vld [vmem:[#allocation5 + $0x8] sm:$0xff]
    %v1346 = vld [vmem:[#allocation5 + $0x10] sm:$0xff]
    %v1347 = vld [vmem:[#allocation5 + $0x18] sm:$0xff]
    %v1348 = vld [vmem:[#allocation5 + $0x20] sm:$0xff]
    %v1349 = vld [vmem:[#allocation5 + $0x28] sm:$0xff]
    %v1350 = vld [vmem:[#allocation5 + $0x30] sm:$0xff]
    %v1351 = vld [vmem:[#allocation5 + $0x38] sm:$0xff]
    %v1352 = vld [vmem:[#allocation5 + $0x40] sm:$0xff]
    %v1353 = vld [vmem:[#allocation5 + $0x48] sm:$0xff]
    %v1354 = vld [vmem:[#allocation5 + $0x50] sm:$0xff]
    %v1355 = vld [vmem:[#allocation5 + $0x58] sm:$0xff]
    %v1356 = vld [vmem:[#allocation5 + $0x60] sm:$0xff]
    %v1357 = vld [vmem:[#allocation5 + $0x68] sm:$0xff]
    %v1358 = vld [vmem:[#allocation5 + $0x70] sm:$0xff]
    %v1359 = vld [vmem:[#allocation5 + $0x78] sm:$0xff]
    %v1360 = vld [vmem:[#allocation5 + $0x80] sm:$0xff]
    %v1361 = vld [vmem:[#allocation5 + $0x88] sm:$0xff]
    %v1362 = vld [vmem:[#allocation5 + $0x90] sm:$0xff]
    %v1363 = vld [vmem:[#allocation5 + $0x98] sm:$0xff]
    %v1364 = vld [vmem:[#allocation5 + $0xa0] sm:$0xff]
    %v1365 = vld [vmem:[#allocation5 + $0xa8] sm:$0xff]
    %v1366 = vld [vmem:[#allocation5 + $0xb0] sm:$0xff]
    %v1367 = vld [vmem:[#allocation5 + $0xb8] sm:$0xff]
    %v1368 = vld [vmem:[#allocation5 + $0xc0] sm:$0xff]
    %v1369 = vld [vmem:[#allocation5 + $0xc8] sm:$0xff]
    %v1370 = vld [vmem:[#allocation5 + $0xd0] sm:$0xff]
    %v1371 = vld [vmem:[#allocation5 + $0xd8] sm:$0xff]
    %v1372 = vld [vmem:[#allocation5 + $0xe0] sm:$0xff]
    %v1373 = vld [vmem:[#allocation5 + $0xe8] sm:$0xff]
    %v1374 = vld [vmem:[#allocation5 + $0xf0] sm:$0xff]
    %v1375 = vld [vmem:[#allocation5 + $0xf8] sm:$0xff]
    %v1376 = vld [vmem:[%s11] sm:$0x3]
    %v1378 = vlaneseq
    %v1379 = vshrl.u32 %v1378, 7
    %v1380 = vsub.s32 0, %v1379
    %v1381 = vrot.slane %v1376, %v1380
    %v1382 = vlaneseq
    %v1383 = vshrl.u32 %v1382, 7
    %v1384 = vsub.s32 1, %v1383
    %v1385 = vrot.slane %v1376, %v1384
    %1388 = vmatprep.subr.mxu0 %v1375
    %1389 = vmatpush1.msra.mxu0 %v1374
    %1390 = vmatprep.subr.mxu0 %v1373
    %1391 = vmatpush1.msra.mxu0 %v1372
    %1392 = vmatprep.subr.mxu0 %v1371
    %1393 = vmatpush1.msra.mxu0 %v1370
    %1394 = vmatprep.subr.mxu0 %v1369
    %1395 = vmatpush1.msra.mxu0 %v1368
    %1396 = vmatprep.subr.mxu0 %v1367
    %1397 = vmatpush1.msra.mxu0 %v1366
    %1398 = vmatprep.subr.mxu0 %v1365
    %1399 = vmatpush1.msra.mxu0 %v1364
    %1400 = vmatprep.subr.mxu0 %v1363
    %1401 = vmatpush1.msra.mxu0 %v1362
    %1402 = vmatprep.subr.mxu0 %v1361
    %1403 = vmatpush1.msra.mxu0 %v1360
    %1404 = vmatprep.subr.mxu0 %v1359
    %1405 = vmatpush1.msra.mxu0 %v1358
    %1406 = vmatprep.subr.mxu0 %v1357
    %1407 = vmatpush1.msra.mxu0 %v1356
    %1408 = vmatprep.subr.mxu0 %v1355
    %1409 = vmatpush1.msra.mxu0 %v1354
    %1410 = vmatprep.subr.mxu0 %v1353
    %1411 = vmatpush1.msra.mxu0 %v1352
    %1412 = vmatprep.subr.mxu0 %v1351
    %1413 = vmatpush1.msra.mxu0 %v1350
    %1414 = vmatprep.subr.mxu0 %v1349
    %1415 = vmatpush1.msra.mxu0 %v1348
    %1416 = vmatprep.subr.mxu0 %v1347
    %1417 = vmatpush1.msra.mxu0 %v1346
    %1418 = vmatprep.subr.mxu0 %v1345
    %1419 = vmatpush1.msra.mxu0 %v1344
    %1420 = vmatprep.subr.mxu0 0.0
    %1421 = vmatpush2.msra.mxu0 0.0
    %1422 = vmatprep.subr.mxu0 0.0
    %1423 = vmatpush2.msra.mxu0 0.0
    %1424 = vmatprep.subr.mxu0 0.0
    %1425 = vmatpush2.msra.mxu0 0.0
    %1426 = vmatprep.subr.mxu0 0.0
    %1427 = vmatpush2.msra.mxu0 0.0
    %1428 = vmatprep.subr.mxu0 0.0
    %1429 = vmatpush2.msra.mxu0 0.0
    %1430 = vmatprep.subr.mxu0 0.0
    %1431 = vmatpush2.msra.mxu0 0.0
    %1432 = vmatprep.subr.mxu0 0.0
    %1433 = vmatpush2.msra.mxu0 0.0
    %1434 = vmatprep.subr.mxu0 0.0
    %1435 = vmatpush2.msra.mxu0 0.0
    %1436 = vmatprep.subr.mxu0 0.0
    %1437 = vmatpush2.msra.mxu0 0.0
    %1438 = vmatprep.subr.mxu0 0.0
    %1439 = vmatpush2.msra.mxu0 0.0
    %1440 = vmatprep.subr.mxu0 0.0
    %1441 = vmatpush2.msra.mxu0 0.0
    %1442 = vmatprep.subr.mxu0 0.0
    %1443 = vmatpush2.msra.mxu0 0.0
    %1444 = vmatprep.subr.mxu0 0.0
    %1445 = vmatpush2.msra.mxu0 0.0
    %1446 = vmatprep.subr.mxu0 0.0
    %1447 = vmatpush2.msra.mxu0 0.0
    %1448 = vmatprep.subr.mxu0 0.0
    %1449 = vmatpush2.msra.mxu0 0.0
    %1450 = vmatprep.subr.mxu0 0.0
    %1451 = vmatpush2.msra.mxu0 0.0
    %1452 = vmatprep.mubr.f32.mxu0 0.0
    %1453 = vmatmul.mubr.f32.gmra.mxu0 %v1342
    %v1454 = vpop.f32.mrf.mxu0
    %v1455 = vadd.f32 %v1381, %v1454
    %v1456 = vpop.f32.mrf.mxu0
    %v1457 = vadd.f32 %v1385, %v1456
    %1458 = vmatprep.mubr.f32.mxu0 0.0
    %1459 = vmatmul.mubr.f32.gmra.mxu0 %v1343
    %v1460 = vpop.f32.mrf.mxu0
    %v1461 = vadd.f32 %v1381, %v1460
    %v1462 = vpop.f32.mrf.mxu0
    %v1463 = vadd.f32 %v1385, %v1462
    %1464 = vdwg.mxu0
    %v1465 = vmul.f32 %v1455, 0.5
    %v1466 = vmul.f32 %v1457, 0.5
    %v1467 = vmul.f32 %v1461, 0.5
    %v1468 = vmul.f32 %v1463, 0.5
    %v1469 = vmul.f32 %v1455, 0.70710677
    %v1470 = vmul.f32 %v1457, 0.70710677
    %v1471 = vmul.f32 %v1461, 0.70710677
    %v1472 = vmul.f32 %v1463, 0.70710677
    %v1473 = vand.u32 2147483647, %v1469
    %v1474 = vand.u32 2147483647, %v1470
    %v1475 = vand.u32 2147483647, %v1471
    %v1476 = vand.u32 2147483647, %v1472
    %v1477 = vmul.f32 %v1473, 0.3275911
    %v1478 = vmul.f32 %v1474, 0.3275911
    %v1479 = vmul.f32 %v1475, 0.3275911
    %v1480 = vmul.f32 %v1476, 0.3275911
    %v1481 = vadd.f32 %v1477, 1.0
    %v1482 = vadd.f32 %v1478, 1.0
    %v1483 = vadd.f32 %v1479, 1.0
    %v1484 = vadd.f32 %v1480, 1.0
    %v1485 = vrcp.pop %v1481
    %v1486 = vmul.f32 1.0, %v1485
    %v1487 = vrcp.pop %v1482
    %v1488 = vmul.f32 1.0, %v1487
    %v1489 = vrcp.pop %v1483
    %v1490 = vmul.f32 1.0, %v1489
    %v1491 = vrcp.pop %v1484
    %v1492 = vmul.f32 1.0, %v1491
    %v1493 = vmul.f32 %v1486, 1.0614054
    %v1494 = vmul.f32 %v1488, 1.0614054
    %v1495 = vmul.f32 %v1490, 1.0614054
    %v1496 = vmul.f32 %v1492, 1.0614054
    %v1497 = vadd.f32 %v1493, -1.4531521
    %v1498 = vadd.f32 %v1494, -1.4531521
    %v1499 = vadd.f32 %v1495, -1.4531521
    %v1500 = vadd.f32 %v1496, -1.4531521
    %v1501 = vmul.f32 %v1497, %v1486
    %v1502 = vmul.f32 %v1498, %v1488
    %v1503 = vmul.f32 %v1499, %v1490
    %v1504 = vmul.f32 %v1500, %v1492
    %v1505 = vadd.f32 %v1501, 1.4214138
    %v1506 = vadd.f32 %v1502, 1.4214138
    %v1507 = vadd.f32 %v1503, 1.4214138
    %v1508 = vadd.f32 %v1504, 1.4214138
    %v1509 = vmul.f32 %v1505, %v1486
    %v1510 = vmul.f32 %v1506, %v1488
    %v1511 = vmul.f32 %v1507, %v1490
    %v1512 = vmul.f32 %v1508, %v1492
    %v1513 = vadd.f32 %v1509, -0.28449672
    %v1514 = vadd.f32 %v1510, -0.28449672
    %v1515 = vadd.f32 %v1511, -0.28449672
    %v1516 = vadd.f32 %v1512, -0.28449672
    %v1517 = vmul.f32 %v1513, %v1486
    %v1518 = vmul.f32 %v1514, %v1488
    %v1519 = vmul.f32 %v1515, %v1490
    %v1520 = vmul.f32 %v1516, %v1492
    %v1521 = vadd.f32 %v1517, 0.2548296
    %v1522 = vadd.f32 %v1518, 0.2548296
    %v1523 = vadd.f32 %v1519, 0.2548296
    %v1524 = vadd.f32 %v1520, 0.2548296
    %v1525 = vmul.f32 %v1521, %v1486
    %v1526 = vmul.f32 %v1522, %v1488
    %v1527 = vmul.f32 %v1523, %v1490
    %v1528 = vmul.f32 %v1524, %v1492
    %v1529 = vsub.f32 0.0, %v1473
    %v1530 = vsub.f32 0.0, %v1474
    %v1531 = vsub.f32 0.0, %v1475
    %v1532 = vsub.f32 0.0, %v1476
    %v1533 = vmul.f32 %v1529, %v1473
    %v1534 = vmul.f32 %v1530, %v1474
    %v1535 = vmul.f32 %v1531, %v1475
    %v1536 = vmul.f32 %v1532, %v1476
    %v1537 = vmul.f32 %v1533, 1.442695
    %v1538 = vpow.pop %v1537
    %v1539 = vmul.f32 %v1534, 1.442695
    %v1540 = vpow.pop %v1539
    %v1541 = vmul.f32 %v1535, 1.442695
    %v1542 = vpow.pop %v1541
    %v1543 = vmul.f32 %v1536, 1.442695
    %v1544 = vpow.pop %v1543
    %v1545 = vmul.f32 %v1525, %v1538
    %v1546 = vmul.f32 %v1526, %v1540
    %v1547 = vmul.f32 %v1527, %v1542
    %v1548 = vmul.f32 %v1528, %v1544
    %v1549 = vsub.f32 1.0, %v1545
    %v1550 = vsub.f32 1.0, %v1546
    %v1551 = vsub.f32 1.0, %v1547
    %v1552 = vsub.f32 1.0, %v1548
    %vm1553 = vcmp.ge.f32.partialorder %v1469, 0.0
    %vm1554 = vcmp.ge.f32.partialorder %v1470, 0.0
    %vm1555 = vcmp.ge.f32.partialorder %v1471, 0.0
    %vm1556 = vcmp.ge.f32.partialorder %v1472, 0.0
    %v1557 = vsub.f32 0.0, %v1549
    %v1558 = vsub.f32 0.0, %v1550
    %v1559 = vsub.f32 0.0, %v1551
    %v1560 = vsub.f32 0.0, %v1552
    %v1561 = vsel %vm1553, %v1549, %v1557
    %v1562 = vsel %vm1554, %v1550, %v1558
    %v1563 = vsel %vm1555, %v1551, %v1559
    %v1564 = vsel %vm1556, %v1552, %v1560
    %v1565 = vadd.f32 %v1561, 1.0
    %v1566 = vadd.f32 %v1562, 1.0
    %v1567 = vadd.f32 %v1563, 1.0
    %v1568 = vadd.f32 %v1564, 1.0
    %v1569 = vmul.f32 %v1465, %v1565
    %v1570 = vmul.f32 %v1466, %v1566
    %v1571 = vmul.f32 %v1467, %v1567
    %v1572 = vmul.f32 %v1468, %v1568
    %v1573 = vld [vmem:[#allocation7] sm:$0xff]
    %v1574 = vld [vmem:[#allocation7 + $0x8] sm:$0xff]
    %v1575 = vld [vmem:[#allocation7 + $0x10] sm:$0xff]
    %v1576 = vld [vmem:[#allocation7 + $0x18] sm:$0xff]
    %v1577 = vld [vmem:[#allocation7 + $0x20] sm:$0xff]
    %v1578 = vld [vmem:[#allocation7 + $0x28] sm:$0xff]
    %v1579 = vld [vmem:[#allocation7 + $0x30] sm:$0xff]
    %v1580 = vld [vmem:[#allocation7 + $0x38] sm:$0xff]
    %v1581 = vld [vmem:[#allocation7 + $0x40] sm:$0xff]
    %v1582 = vld [vmem:[#allocation7 + $0x48] sm:$0xff]
    %v1583 = vld [vmem:[#allocation7 + $0x50] sm:$0xff]
    %v1584 = vld [vmem:[#allocation7 + $0x58] sm:$0xff]
    %v1585 = vld [vmem:[#allocation7 + $0x60] sm:$0xff]
    %v1586 = vld [vmem:[#allocation7 + $0x68] sm:$0xff]
    %v1587 = vld [vmem:[#allocation7 + $0x70] sm:$0xff]
    %v1588 = vld [vmem:[#allocation7 + $0x78] sm:$0xff]
    %v1589 = vld [vmem:[#allocation7 + $0x80] sm:$0xff]
    %v1590 = vld [vmem:[#allocation7 + $0x88] sm:$0xff]
    %v1591 = vld [vmem:[#allocation7 + $0x90] sm:$0xff]
    %v1592 = vld [vmem:[#allocation7 + $0x98] sm:$0xff]
    %v1593 = vld [vmem:[#allocation7 + $0xa0] sm:$0xff]
    %v1594 = vld [vmem:[#allocation7 + $0xa8] sm:$0xff]
    %v1595 = vld [vmem:[#allocation7 + $0xb0] sm:$0xff]
    %v1596 = vld [vmem:[#allocation7 + $0xb8] sm:$0xff]
    %v1597 = vld [vmem:[#allocation7 + $0xc0] sm:$0xff]
    %v1598 = vld [vmem:[#allocation7 + $0xc8] sm:$0xff]
    %v1599 = vld [vmem:[#allocation7 + $0xd0] sm:$0xff]
    %v1600 = vld [vmem:[#allocation7 + $0xd8] sm:$0xff]
    %v1601 = vld [vmem:[#allocation7 + $0xe0] sm:$0xff]
    %v1602 = vld [vmem:[#allocation7 + $0xe8] sm:$0xff]
    %v1603 = vld [vmem:[#allocation7 + $0xf0] sm:$0xff]
    %v1604 = vld [vmem:[#allocation7 + $0xf8] sm:$0xff]
    %1605 = vmatprep.subr.mxu0 0.0
    %1606 = vmatpush1.msra.mxu0 %v1588
    %1607 = vmatprep.subr.mxu0 0.0
    %1608 = vmatpush1.msra.mxu0 %v1587
    %1609 = vmatprep.subr.mxu0 0.0
    %1610 = vmatpush1.msra.mxu0 %v1586
    %1611 = vmatprep.subr.mxu0 0.0
    %1612 = vmatpush1.msra.mxu0 %v1585
    %1613 = vmatprep.subr.mxu0 0.0
    %1614 = vmatpush1.msra.mxu0 %v1584
    %1615 = vmatprep.subr.mxu0 0.0
    %1616 = vmatpush1.msra.mxu0 %v1583
    %1617 = vmatprep.subr.mxu0 0.0
    %1618 = vmatpush1.msra.mxu0 %v1582
    %1619 = vmatprep.subr.mxu0 0.0
    %1620 = vmatpush1.msra.mxu0 %v1581
    %1621 = vmatprep.subr.mxu0 0.0
    %1622 = vmatpush1.msra.mxu0 %v1580
    %1623 = vmatprep.subr.mxu0 0.0
    %1624 = vmatpush1.msra.mxu0 %v1579
    %1625 = vmatprep.subr.mxu0 0.0
    %1626 = vmatpush1.msra.mxu0 %v1578
    %1627 = vmatprep.subr.mxu0 0.0
    %1628 = vmatpush1.msra.mxu0 %v1577
    %1629 = vmatprep.subr.mxu0 0.0
    %1630 = vmatpush1.msra.mxu0 %v1576
    %1631 = vmatprep.subr.mxu0 0.0
    %1632 = vmatpush1.msra.mxu0 %v1575
    %1633 = vmatprep.subr.mxu0 0.0
    %1634 = vmatpush1.msra.mxu0 %v1574
    %1635 = vmatprep.subr.mxu0 0.0
    %1636 = vmatpush1.msra.mxu0 %v1573
    %1637 = vmatprep.subr.mxu0 0.0
    %1638 = vmatpush2.msra.mxu0 %v1604
    %1639 = vmatprep.subr.mxu0 0.0
    %1640 = vmatpush2.msra.mxu0 %v1603
    %1641 = vmatprep.subr.mxu0 0.0
    %1642 = vmatpush2.msra.mxu0 %v1602
    %1643 = vmatprep.subr.mxu0 0.0
    %1644 = vmatpush2.msra.mxu0 %v1601
    %1645 = vmatprep.subr.mxu0 0.0
    %1646 = vmatpush2.msra.mxu0 %v1600
    %1647 = vmatprep.subr.mxu0 0.0
    %1648 = vmatpush2.msra.mxu0 %v1599
    %1649 = vmatprep.subr.mxu0 0.0
    %1650 = vmatpush2.msra.mxu0 %v1598
    %1651 = vmatprep.subr.mxu0 0.0
    %1652 = vmatpush2.msra.mxu0 %v1597
    %1653 = vmatprep.subr.mxu0 0.0
    %1654 = vmatpush2.msra.mxu0 %v1596
    %1655 = vmatprep.subr.mxu0 0.0
    %1656 = vmatpush2.msra.mxu0 %v1595
    %1657 = vmatprep.subr.mxu0 0.0
    %1658 = vmatpush2.msra.mxu0 %v1594
    %1659 = vmatprep.subr.mxu0 0.0
    %1660 = vmatpush2.msra.mxu0 %v1593
    %1661 = vmatprep.subr.mxu0 0.0
    %1662 = vmatpush2.msra.mxu0 %v1592
    %1663 = vmatprep.subr.mxu0 0.0
    %1664 = vmatpush2.msra.mxu0 %v1591
    %1665 = vmatprep.subr.mxu0 0.0
    %1666 = vmatpush2.msra.mxu0 %v1590
    %1667 = vmatprep.subr.mxu0 0.0
    %1668 = vmatpush2.msra.mxu0 %v1589
    %1669 = vmatprep.mubr.f32.mxu0 %v1570
    %1670 = vmatmul.mubr.f32.gmra.mxu0 %v1569
    %v1671 = vpop.f32.mrf.mxu0
    %v1672 = vadd.f32 0.0, %v1671
    %v1673 = vpop.f32.mrf.mxu0
    %1674 = vmatprep.mubr.f32.mxu0 %v1572
    %1675 = vmatmul.mubr.f32.gmra.mxu0 %v1571
    %v1676 = vpop.f32.mrf.mxu0
    %v1677 = vadd.f32 0.0, %v1676
    %v1678 = vpop.f32.mrf.mxu0
    %1679 = vdwg.mxu0
    %v1680 = vadd.f32 %v1302, %v1672
    %v1681 = vadd.f32 %v1303, %v1677
    %v1682 = vld [vmem:[%s13] sm:$0x1]
    %v1684 = vlaneseq
    %v1685 = vshrl.u32 %v1684, 7
    %v1686 = vsub.s32 0, %v1685
    %v1687 = vrot.slane %v1682, %v1686
    %v1689 = vadd.f32 %v1680, %v1687
    %v1690 = vadd.f32 %v1681, %v1687
    %s1691 = scalar_lea.vmem %s2, 1
    %v1692 = vld [vmem:[%s1691] sm:$0x1]
    %s1693 = scalar_lea.vmem %s3, 1
    %v1694 = vld [vmem:[%s1693] sm:$0x1]
    %1695 = vadd.xlane.f32.xlu0 %v1689
    %v1696 = vpop.xlane.xlu0 %1695
    %1697 = vadd.xlane.f32.xlu0 %v1690
    %v1698 = vpop.xlane.xlu0 %1697
    %v1699 = vmul.f32 %v1696, %v108
    %v1700 = vmul.f32 %v1698, %v108
    %v1701 = vsub.f32 %v1689, %v1699
    %v1702 = vsub.f32 %v1690, %v1700
    %v1703 = vmul.f32 %v1701, %v1701
    %v1704 = vmul.f32 %v1702, %v1702
    %1705 = vadd.xlane.f32.xlu0 %v1703
    %v1706 = vpop.xlane.xlu0 %1705
    %1707 = vadd.xlane.f32.xlu0 %v1704
    %v1708 = vpop.xlane.xlu0 %1707
    %v1709 = vmul.f32 %v1706, %v108
    %v1710 = vmul.f32 %v1708, %v108
    %v1711 = vadd.f32 %v1709, 1e-05
    %v1712 = vadd.f32 %v1710, 1e-05
    %v1713 = vrsqrt.pop %v1711
    %v1714 = vrsqrt.pop %v1712
    %v1715 = vmul.f32 %v1701, %v1713
    %v1716 = vmul.f32 %v1702, %v1714
    %v1718 = vlaneseq
    %v1719 = vshrl.u32 %v1718, 7
    %v1720 = vsub.s32 0, %v1719
    %v1721 = vrot.slane %v1692, %v1720
    %v1723 = vmul.f32 %v1715, %v1721
    %v1724 = vmul.f32 %v1716, %v1721
    %v1726 = vlaneseq
    %v1727 = vshrl.u32 %v1726, 7
    %v1728 = vsub.s32 0, %v1727
    %v1729 = vrot.slane %v1694, %v1728
    %v1731 = vadd.f32 %v1723, %v1729
    %v1732 = vadd.f32 %v1724, %v1729
    %s1733 = scalar_lea.vmem [#allocation2], 384
    %v1734 = vld [vmem:[%s1733] sm:$0xff]
    %v1735 = vld [vmem:[%s1733 + $0x8] sm:$0xff]
    %v1736 = vld [vmem:[%s1733 + $0x10] sm:$0xff]
    %v1737 = vld [vmem:[%s1733 + $0x18] sm:$0xff]
    %v1738 = vld [vmem:[%s1733 + $0x20] sm:$0xff]
    %v1739 = vld [vmem:[%s1733 + $0x28] sm:$0xff]
    %v1740 = vld [vmem:[%s1733 + $0x30] sm:$0xff]
    %v1741 = vld [vmem:[%s1733 + $0x38] sm:$0xff]
    %v1742 = vld [vmem:[%s1733 + $0x40] sm:$0xff]
    %v1743 = vld [vmem:[%s1733 + $0x48] sm:$0xff]
    %v1744 = vld [vmem:[%s1733 + $0x50] sm:$0xff]
    %v1745 = vld [vmem:[%s1733 + $0x58] sm:$0xff]
    %v1746 = vld [vmem:[%s1733 + $0x60] sm:$0xff]
    %v1747 = vld [vmem:[%s1733 + $0x68] sm:$0xff]
    %v1748 = vld [vmem:[%s1733 + $0x70] sm:$0xff]
    %v1749 = vld [vmem:[%s1733 + $0x78] sm:$0xff]
    %v1750 = vld [vmem:[%s1733 + $0x80] sm:$0xff]
    %v1751 = vld [vmem:[%s1733 + $0x88] sm:$0xff]
    %v1752 = vld [vmem:[%s1733 + $0x90] sm:$0xff]
    %v1753 = vld [vmem:[%s1733 + $0x98] sm:$0xff]
    %v1754 = vld [vmem:[%s1733 + $0xa0] sm:$0xff]
    %v1755 = vld [vmem:[%s1733 + $0xa8] sm:$0xff]
    %v1756 = vld [vmem:[%s1733 + $0xb0] sm:$0xff]
    %v1757 = vld [vmem:[%s1733 + $0xb8] sm:$0xff]
    %v1758 = vld [vmem:[%s1733 + $0xc0] sm:$0xff]
    %v1759 = vld [vmem:[%s1733 + $0xc8] sm:$0xff]
    %v1760 = vld [vmem:[%s1733 + $0xd0] sm:$0xff]
    %v1761 = vld [vmem:[%s1733 + $0xd8] sm:$0xff]
    %v1762 = vld [vmem:[%s1733 + $0xe0] sm:$0xff]
    %v1763 = vld [vmem:[%s1733 + $0xe8] sm:$0xff]
    %v1764 = vld [vmem:[%s1733 + $0xf0] sm:$0xff]
    %v1765 = vld [vmem:[%s1733 + $0xf8] sm:$0xff]
    %v1766 = vld [vmem:[%s1733 + $0x100] sm:$0xff]
    %v1767 = vld [vmem:[%s1733 + $0x108] sm:$0xff]
    %v1768 = vld [vmem:[%s1733 + $0x110] sm:$0xff]
    %v1769 = vld [vmem:[%s1733 + $0x118] sm:$0xff]
    %v1770 = vld [vmem:[%s1733 + $0x120] sm:$0xff]
    %v1771 = vld [vmem:[%s1733 + $0x128] sm:$0xff]
    %v1772 = vld [vmem:[%s1733 + $0x130] sm:$0xff]
    %v1773 = vld [vmem:[%s1733 + $0x138] sm:$0xff]
    %v1774 = vld [vmem:[%s1733 + $0x140] sm:$0xff]
    %v1775 = vld [vmem:[%s1733 + $0x148] sm:$0xff]
    %v1776 = vld [vmem:[%s1733 + $0x150] sm:$0xff]
    %v1777 = vld [vmem:[%s1733 + $0x158] sm:$0xff]
    %v1778 = vld [vmem:[%s1733 + $0x160] sm:$0xff]
    %v1779 = vld [vmem:[%s1733 + $0x168] sm:$0xff]
    %v1780 = vld [vmem:[%s1733 + $0x170] sm:$0xff]
    %v1781 = vld [vmem:[%s1733 + $0x178] sm:$0xff]
    %s1782 = scalar_lea.vmem %s5, 3
    %v1783 = vld [vmem:[%s1782] sm:$0x7]
    %v1785 = vlaneseq
    %v1786 = vshrl.u32 %v1785, 7
    %v1787 = vsub.s32 0, %v1786
    %v1788 = vrot.slane %v1783, %v1787
    %v1789 = vlaneseq
    %v1790 = vshrl.u32 %v1789, 7
    %v1791 = vsub.s32 1, %v1790
    %v1792 = vrot.slane %v1783, %v1791
    %v1793 = vlaneseq
    %v1794 = vshrl.u32 %v1793, 7
    %v1795 = vsub.s32 2, %v1794
    %v1796 = vrot.slane %v1783, %v1795
    %1800 = vmatprep.subr.mxu0 %v1780
    %1801 = vmatpush1.msra.mxu0 %v1779
    %1802 = vmatprep.subr.mxu0 %v1777
    %1803 = vmatpush1.msra.mxu0 %v1776
    %1804 = vmatprep.subr.mxu0 %v1774
    %1805 = vmatpush1.msra.mxu0 %v1773
    %1806 = vmatprep.subr.mxu0 %v1771
    %1807 = vmatpush1.msra.mxu0 %v1770
    %1808 = vmatprep.subr.mxu0 %v1768
    %1809 = vmatpush1.msra.mxu0 %v1767
    %1810 = vmatprep.subr.mxu0 %v1765
    %1811 = vmatpush1.msra.mxu0 %v1764
    %1812 = vmatprep.subr.mxu0 %v1762
    %1813 = vmatpush1.msra.mxu0 %v1761
    %1814 = vmatprep.subr.mxu0 %v1759
    %1815 = vmatpush1.msra.mxu0 %v1758
    %1816 = vmatprep.subr.mxu0 %v1756
    %1817 = vmatpush1.msra.mxu0 %v1755
    %1818 = vmatprep.subr.mxu0 %v1753
    %1819 = vmatpush1.msra.mxu0 %v1752
    %1820 = vmatprep.subr.mxu0 %v1750
    %1821 = vmatpush1.msra.mxu0 %v1749
    %1822 = vmatprep.subr.mxu0 %v1747
    %1823 = vmatpush1.msra.mxu0 %v1746
    %1824 = vmatprep.subr.mxu0 %v1744
    %1825 = vmatpush1.msra.mxu0 %v1743
    %1826 = vmatprep.subr.mxu0 %v1741
    %1827 = vmatpush1.msra.mxu0 %v1740
    %1828 = vmatprep.subr.mxu0 %v1738
    %1829 = vmatpush1.msra.mxu0 %v1737
    %1830 = vmatprep.subr.mxu0 %v1735
    %1831 = vmatpush1.msra.mxu0 %v1734
    %1832 = vmatprep.subr.mxu0 0.0
    %1833 = vmatpush2.msra.mxu0 0.0
    %1834 = vmatprep.subr.mxu0 0.0
    %1835 = vmatpush2.msra.mxu0 0.0
    %1836 = vmatprep.subr.mxu0 0.0
    %1837 = vmatpush2.msra.mxu0 0.0
    %1838 = vmatprep.subr.mxu0 0.0
    %1839 = vmatpush2.msra.mxu0 0.0
    %1840 = vmatprep.subr.mxu0 0.0
    %1841 = vmatpush2.msra.mxu0 0.0
    %1842 = vmatprep.subr.mxu0 0.0
    %1843 = vmatpush2.msra.mxu0 0.0
    %1844 = vmatprep.subr.mxu0 0.0
    %1845 = vmatpush2.msra.mxu0 0.0
    %1846 = vmatprep.subr.mxu0 0.0
    %1847 = vmatpush2.msra.mxu0 0.0
    %1848 = vmatprep.subr.mxu0 0.0
    %1849 = vmatpush2.msra.mxu0 0.0
    %1850 = vmatprep.subr.mxu0 0.0
    %1851 = vmatpush2.msra.mxu0 0.0
    %1852 = vmatprep.subr.mxu0 0.0
    %1853 = vmatpush2.msra.mxu0 0.0
    %1854 = vmatprep.subr.mxu0 0.0
    %1855 = vmatpush2.msra.mxu0 0.0
    %1856 = vmatprep.subr.mxu0 0.0
    %1857 = vmatpush2.msra.mxu0 0.0
    %1858 = vmatprep.subr.mxu0 0.0
    %1859 = vmatpush2.msra.mxu0 0.0
    %1860 = vmatprep.subr.mxu0 0.0
    %1861 = vmatpush2.msra.mxu0 0.0
    %1862 = vmatprep.subr.mxu0 0.0
    %1863 = vmatpush2.msra.mxu0 0.0
    %1864 = vmatprep.mubr.f32.mxu0 0.0
    %1865 = vmatmul.mubr.f32.gmra.mxu0 %v1731
    %v1866 = vpop.f32.mrf.mxu0
    %v1867 = vadd.f32 %v1788, %v1866
    %v1868 = vpop.f32.mrf.mxu0
    %v1869 = vadd.f32 %v1792, %v1868
    %1870 = vmatprep.mubr.f32.mxu0 0.0
    %1871 = vmatmul.mubr.f32.gmra.mxu0 %v1732
    %v1872 = vpop.f32.mrf.mxu0
    %v1873 = vadd.f32 %v1788, %v1872
    %v1874 = vpop.f32.mrf.mxu0
    %v1875 = vadd.f32 %v1792, %v1874
    %1876 = vdwg.mxu0
    %1877 = vmatprep.subr.mxu0 0.0
    %1878 = vmatpush1.msra.mxu0 %v1781
    %1879 = vmatprep.subr.mxu0 0.0
    %1880 = vmatpush1.msra.mxu0 %v1778
    %1881 = vmatprep.subr.mxu0 0.0
    %1882 = vmatpush1.msra.mxu0 %v1775
    %1883 = vmatprep.subr.mxu0 0.0
    %1884 = vmatpush1.msra.mxu0 %v1772
    %1885 = vmatprep.subr.mxu0 0.0
    %1886 = vmatpush1.msra.mxu0 %v1769
    %1887 = vmatprep.subr.mxu0 0.0
    %1888 = vmatpush1.msra.mxu0 %v1766
    %1889 = vmatprep.subr.mxu0 0.0
    %1890 = vmatpush1.msra.mxu0 %v1763
    %1891 = vmatprep.subr.mxu0 0.0
    %1892 = vmatpush1.msra.mxu0 %v1760
    %1893 = vmatprep.subr.mxu0 0.0
    %1894 = vmatpush1.msra.mxu0 %v1757
    %1895 = vmatprep.subr.mxu0 0.0
    %1896 = vmatpush1.msra.mxu0 %v1754
    %1897 = vmatprep.subr.mxu0 0.0
    %1898 = vmatpush1.msra.mxu0 %v1751
    %1899 = vmatprep.subr.mxu0 0.0
    %1900 = vmatpush1.msra.mxu0 %v1748
    %1901 = vmatprep.subr.mxu0 0.0
    %1902 = vmatpush1.msra.mxu0 %v1745
    %1903 = vmatprep.subr.mxu0 0.0
    %1904 = vmatpush1.msra.mxu0 %v1742
    %1905 = vmatprep.subr.mxu0 0.0
    %1906 = vmatpush1.msra.mxu0 %v1739
    %1907 = vmatprep.subr.mxu0 0.0
    %1908 = vmatpush1.msra.mxu0 %v1736
    %1909 = vmatprep.subr.mxu0 0.0
    %1910 = vmatpush2.msra.mxu0 0.0
    %1911 = vmatprep.subr.mxu0 0.0
    %1912 = vmatpush2.msra.mxu0 0.0
    %1913 = vmatprep.subr.mxu0 0.0
    %1914 = vmatpush2.msra.mxu0 0.0
    %1915 = vmatprep.subr.mxu0 0.0
    %1916 = vmatpush2.msra.mxu0 0.0
    %1917 = vmatprep.subr.mxu0 0.0
    %1918 = vmatpush2.msra.mxu0 0.0
    %1919 = vmatprep.subr.mxu0 0.0
    %1920 = vmatpush2.msra.mxu0 0.0
    %1921 = vmatprep.subr.mxu0 0.0
    %1922 = vmatpush2.msra.mxu0 0.0
    %1923 = vmatprep.subr.mxu0 0.0
    %1924 = vmatpush2.msra.mxu0 0.0
    %1925 = vmatprep.subr.mxu0 0.0
    %1926 = vmatpush2.msra.mxu0 0.0
    %1927 = vmatprep.subr.mxu0 0.0
    %1928 = vmatpush2.msra.mxu0 0.0
    %1929 = vmatprep.subr.mxu0 0.0
    %1930 = vmatpush2.msra.mxu0 0.0
    %1931 = vmatprep.subr.mxu0 0.0
    %1932 = vmatpush2.msra.mxu0 0.0
    %1933 = vmatprep.subr.mxu0 0.0
    %1934 = vmatpush2.msra.mxu0 0.0
    %1935 = vmatprep.subr.mxu0 0.0
    %1936 = vmatpush2.msra.mxu0 0.0
    %1937 = vmatprep.subr.mxu0 0.0
    %1938 = vmatpush2.msra.mxu0 0.0
    %1939 = vmatprep.subr.mxu0 0.0
    %1940 = vmatpush2.msra.mxu0 0.0
    %1941 = vmatprep.mubr.f32.mxu0 0.0
    %1942 = vmatmul.mubr.f32.gmra.mxu0 %v1731
    %v1943 = vpop.f32.mrf.mxu0
    %v1944 = vadd.f32 %v1796, %v1943
    %v1945 = vpop.f32.mrf.mxu0
    %1946 = vmatprep.mubr.f32.mxu0 0.0
    %1947 = vmatmul.mubr.f32.gmra.mxu0 %v1732
    %v1948 = vpop.f32.mrf.mxu0
    %v1949 = vadd.f32 %v1796, %v1948
    %v1950 = vpop.f32.mrf.mxu0
    %1951 = vdwg.mxu0
    %1954 = vrot.lane.b32.xlu0 %v1867, 96
    %v1955 = vpop.permute.xlu0 %1954
    %1956 = vrot.lane.b32.xlu0 %v1873, 96
    %v1957 = vpop.permute.xlu0 %1956
    %1958 = vrot.lane.b32.xlu0 %v1867, 64
    %v1959 = vpop.permute.xlu0 %1958
    %1960 = vrot.lane.b32.xlu0 %v1873, 64
    %v1961 = vpop.permute.xlu0 %1960
    %1962 = vrot.lane.b32.xlu0 %v1867, 32
    %v1963 = vpop.permute.xlu0 %1962
    %1964 = vrot.lane.b32.xlu0 %v1873, 32
    %v1965 = vpop.permute.xlu0 %1964
    %1968 = vrot.lane.b32.xlu0 %v1869, 96
    %v1969 = vpop.permute.xlu0 %1968
    %1970 = vrot.lane.b32.xlu0 %v1875, 96
    %v1971 = vpop.permute.xlu0 %1970
    %1972 = vrot.lane.b32.xlu0 %v1869, 64
    %v1973 = vpop.permute.xlu0 %1972
    %1974 = vrot.lane.b32.xlu0 %v1875, 64
    %v1975 = vpop.permute.xlu0 %1974
    %1976 = vrot.lane.b32.xlu0 %v1869, 32
    %v1977 = vpop.permute.xlu0 %1976
    %1978 = vrot.lane.b32.xlu0 %v1875, 32
    %v1979 = vpop.permute.xlu0 %1978
    %1982 = vrot.lane.b32.xlu0 %v1944, 96
    %v1983 = vpop.permute.xlu0 %1982
    %1984 = vrot.lane.b32.xlu0 %v1949, 96
    %v1985 = vpop.permute.xlu0 %1984
    %1988 = vrot.lane.b32.xlu0 %v1944, 64
    %v1989 = vpop.permute.xlu0 %1988
    %1990 = vrot.lane.b32.xlu0 %v1949, 64
    %v1991 = vpop.permute.xlu0 %1990
    %1994 = vrot.lane.b32.xlu0 %v1944, 32
    %v1995 = vpop.permute.xlu0 %1994
    %1996 = vrot.lane.b32.xlu0 %v1949, 32
    %v1997 = vpop.permute.xlu0 %1996
    %v2000 = vsel %vm408, %v1867, 0
    %v2002 = vsel %vm408, %v1873, 0
    %v2004 = vsel %vm408, %v1869, 0
    %v2006 = vsel %vm408, %v1875, 0
    %2008 = vmatprep.subr.mxu0 0.0
    %2009 = vmatpush1.xpose.msra.mxu0 0.0
    %2010 = vmatprep.subr.mxu0 0.0
    %2011 = vmatpush1.xpose.msra.mxu0 0.0
    %2012 = vmatprep.subr.mxu0 0.0
    %2013 = vmatpush1.xpose.msra.mxu0 0.0
    %2014 = vmatprep.subr.mxu0 0.0
    %2015 = vmatpush1.xpose.msra.mxu0 0.0
    %2016 = vmatprep.subr.mxu0 0.0
    %2017 = vmatpush1.xpose.msra.mxu0 0.0
    %2018 = vmatprep.subr.mxu0 0.0
    %2019 = vmatpush1.xpose.msra.mxu0 0.0
    %2020 = vmatprep.subr.mxu0 0.0
    %2021 = vmatpush1.xpose.msra.mxu0 0.0
    %2022 = vmatprep.subr.mxu0 0.0
    %2023 = vmatpush1.xpose.msra.mxu0 0.0
    %2024 = vmatprep.subr.mxu0 0.0
    %2025 = vmatpush1.xpose.msra.mxu0 0.0
    %2026 = vmatprep.subr.mxu0 0.0
    %2027 = vmatpush1.xpose.msra.mxu0 0.0
    %2028 = vmatprep.subr.mxu0 0.0
    %2029 = vmatpush1.xpose.msra.mxu0 0.0
    %2030 = vmatprep.subr.mxu0 0.0
    %2031 = vmatpush1.xpose.msra.mxu0 0.0
    %2032 = vmatprep.subr.mxu0 0.0
    %2033 = vmatpush1.xpose.msra.mxu0 0.0
    %2034 = vmatprep.subr.mxu0 0.0
    %2035 = vmatpush1.xpose.msra.mxu0 0.0
    %2036 = vmatprep.subr.mxu0 0.0
    %2037 = vmatpush1.xpose.msra.mxu0 %v2006
    %2038 = vmatprep.subr.mxu0 0.0
    %2039 = vmatpush1.xpose.msra.mxu0 %v2004
    %2040 = vmatprep.subr.mxu0 0.0
    %2041 = vmatpush2.xpose.msra.mxu0 0.0
    %2042 = vmatprep.subr.mxu0 0.0
    %2043 = vmatpush2.xpose.msra.mxu0 0.0
    %2044 = vmatprep.subr.mxu0 0.0
    %2045 = vmatpush2.xpose.msra.mxu0 0.0
    %2046 = vmatprep.subr.mxu0 0.0
    %2047 = vmatpush2.xpose.msra.mxu0 0.0
    %2048 = vmatprep.subr.mxu0 0.0
    %2049 = vmatpush2.xpose.msra.mxu0 0.0
    %2050 = vmatprep.subr.mxu0 0.0
    %2051 = vmatpush2.xpose.msra.mxu0 0.0
    %2052 = vmatprep.subr.mxu0 0.0
    %2053 = vmatpush2.xpose.msra.mxu0 0.0
    %2054 = vmatprep.subr.mxu0 0.0
    %2055 = vmatpush2.xpose.msra.mxu0 0.0
    %2056 = vmatprep.subr.mxu0 0.0
    %2057 = vmatpush2.xpose.msra.mxu0 0.0
    %2058 = vmatprep.subr.mxu0 0.0
    %2059 = vmatpush2.xpose.msra.mxu0 0.0
    %2060 = vmatprep.subr.mxu0 0.0
    %2061 = vmatpush2.xpose.msra.mxu0 0.0
    %2062 = vmatprep.subr.mxu0 0.0
    %2063 = vmatpush2.xpose.msra.mxu0 0.0
    %2064 = vmatprep.subr.mxu0 0.0
    %2065 = vmatpush2.xpose.msra.mxu0 0.0
    %2066 = vmatprep.subr.mxu0 0.0
    %2067 = vmatpush2.xpose.msra.mxu0 0.0
    %2068 = vmatprep.subr.mxu0 0.0
    %2069 = vmatpush2.xpose.msra.mxu0 0.0
    %2070 = vmatprep.subr.mxu0 0.0
    %2071 = vmatpush2.xpose.msra.mxu0 0.0
    %2072 = vmatprep.mubr.f32.mxu0 0.0
    %2073 = vmatmul.mubr.f32.gmra.mxu0 %v2000
    %v2074 = vpop.f32.mrf.mxu0
    %v2075 = vadd.f32 0.0, %v2074
    %v2076 = vpop.f32.mrf.mxu0
    %2077 = vmatprep.mubr.f32.mxu0 0.0
    %2078 = vmatmul.mubr.f32.gmra.mxu0 %v2002
    %v2079 = vpop.f32.mrf.mxu0
    %v2080 = vadd.f32 0.0, %v2079
    %v2081 = vpop.f32.mrf.mxu0
    %2082 = vdwg.mxu0
    %v2083 = vsel %vm408, %v1955, 0
    %v2085 = vsel %vm408, %v1957, 0
    %v2087 = vsel %vm408, %v1969, 0
    %v2089 = vsel %vm408, %v1971, 0
    %2091 = vmatprep.subr.mxu0 0.0
    %2092 = vmatpush1.xpose.msra.mxu0 0.0
    %2093 = vmatprep.subr.mxu0 0.0
    %2094 = vmatpush1.xpose.msra.mxu0 0.0
    %2095 = vmatprep.subr.mxu0 0.0
    %2096 = vmatpush1.xpose.msra.mxu0 0.0
    %2097 = vmatprep.subr.mxu0 0.0
    %2098 = vmatpush1.xpose.msra.mxu0 0.0
    %2099 = vmatprep.subr.mxu0 0.0
    %2100 = vmatpush1.xpose.msra.mxu0 0.0
    %2101 = vmatprep.subr.mxu0 0.0
    %2102 = vmatpush1.xpose.msra.mxu0 0.0
    %2103 = vmatprep.subr.mxu0 0.0
    %2104 = vmatpush1.xpose.msra.mxu0 0.0
    %2105 = vmatprep.subr.mxu0 0.0
    %2106 = vmatpush1.xpose.msra.mxu0 0.0
    %2107 = vmatprep.subr.mxu0 0.0
    %2108 = vmatpush1.xpose.msra.mxu0 0.0
    %2109 = vmatprep.subr.mxu0 0.0
    %2110 = vmatpush1.xpose.msra.mxu0 0.0
    %2111 = vmatprep.subr.mxu0 0.0
    %2112 = vmatpush1.xpose.msra.mxu0 0.0
    %2113 = vmatprep.subr.mxu0 0.0
    %2114 = vmatpush1.xpose.msra.mxu0 0.0
    %2115 = vmatprep.subr.mxu0 0.0
    %2116 = vmatpush1.xpose.msra.mxu0 0.0
    %2117 = vmatprep.subr.mxu0 0.0
    %2118 = vmatpush1.xpose.msra.mxu0 0.0
    %2119 = vmatprep.subr.mxu0 0.0
    %2120 = vmatpush1.xpose.msra.mxu0 %v2089
    %2121 = vmatprep.subr.mxu0 0.0
    %2122 = vmatpush1.xpose.msra.mxu0 %v2087
    %2123 = vmatprep.subr.mxu0 0.0
    %2124 = vmatpush2.xpose.msra.mxu0 0.0
    %2125 = vmatprep.subr.mxu0 0.0
    %2126 = vmatpush2.xpose.msra.mxu0 0.0
    %2127 = vmatprep.subr.mxu0 0.0
    %2128 = vmatpush2.xpose.msra.mxu0 0.0
    %2129 = vmatprep.subr.mxu0 0.0
    %2130 = vmatpush2.xpose.msra.mxu0 0.0
    %2131 = vmatprep.subr.mxu0 0.0
    %2132 = vmatpush2.xpose.msra.mxu0 0.0
    %2133 = vmatprep.subr.mxu0 0.0
    %2134 = vmatpush2.xpose.msra.mxu0 0.0
    %2135 = vmatprep.subr.mxu0 0.0
    %2136 = vmatpush2.xpose.msra.mxu0 0.0
    %2137 = vmatprep.subr.mxu0 0.0
    %2138 = vmatpush2.xpose.msra.mxu0 0.0
    %2139 = vmatprep.subr.mxu0 0.0
    %2140 = vmatpush2.xpose.msra.mxu0 0.0
    %2141 = vmatprep.subr.mxu0 0.0
    %2142 = vmatpush2.xpose.msra.mxu0 0.0
    %2143 = vmatprep.subr.mxu0 0.0
    %2144 = vmatpush2.xpose.msra.mxu0 0.0
    %2145 = vmatprep.subr.mxu0 0.0
    %2146 = vmatpush2.xpose.msra.mxu0 0.0
    %2147 = vmatprep.subr.mxu0 0.0
    %2148 = vmatpush2.xpose.msra.mxu0 0.0
    %2149 = vmatprep.subr.mxu0 0.0
    %2150 = vmatpush2.xpose.msra.mxu0 0.0
    %2151 = vmatprep.subr.mxu0 0.0
    %2152 = vmatpush2.xpose.msra.mxu0 0.0
    %2153 = vmatprep.subr.mxu0 0.0
    %2154 = vmatpush2.xpose.msra.mxu0 0.0
    %2155 = vmatprep.mubr.f32.mxu0 0.0
    %2156 = vmatmul.mubr.f32.gmra.mxu0 %v2083
    %v2157 = vpop.f32.mrf.mxu0
    %v2158 = vadd.f32 0.0, %v2157
    %v2159 = vpop.f32.mrf.mxu0
    %2160 = vmatprep.mubr.f32.mxu0 0.0
    %2161 = vmatmul.mubr.f32.gmra.mxu0 %v2085
    %v2162 = vpop.f32.mrf.mxu0
    %v2163 = vadd.f32 0.0, %v2162
    %v2164 = vpop.f32.mrf.mxu0
    %2165 = vdwg.mxu0
    %v2166 = vsel %vm408, %v1959, 0
    %v2168 = vsel %vm408, %v1961, 0
    %v2170 = vsel %vm408, %v1973, 0
    %v2172 = vsel %vm408, %v1975, 0
    %2174 = vmatprep.subr.mxu0 0.0
    %2175 = vmatpush1.xpose.msra.mxu0 0.0
    %2176 = vmatprep.subr.mxu0 0.0
    %2177 = vmatpush1.xpose.msra.mxu0 0.0
    %2178 = vmatprep.subr.mxu0 0.0
    %2179 = vmatpush1.xpose.msra.mxu0 0.0
    %2180 = vmatprep.subr.mxu0 0.0
    %2181 = vmatpush1.xpose.msra.mxu0 0.0
    %2182 = vmatprep.subr.mxu0 0.0
    %2183 = vmatpush1.xpose.msra.mxu0 0.0
    %2184 = vmatprep.subr.mxu0 0.0
    %2185 = vmatpush1.xpose.msra.mxu0 0.0
    %2186 = vmatprep.subr.mxu0 0.0
    %2187 = vmatpush1.xpose.msra.mxu0 0.0
    %2188 = vmatprep.subr.mxu0 0.0
    %2189 = vmatpush1.xpose.msra.mxu0 0.0
    %2190 = vmatprep.subr.mxu0 0.0
    %2191 = vmatpush1.xpose.msra.mxu0 0.0
    %2192 = vmatprep.subr.mxu0 0.0
    %2193 = vmatpush1.xpose.msra.mxu0 0.0
    %2194 = vmatprep.subr.mxu0 0.0
    %2195 = vmatpush1.xpose.msra.mxu0 0.0
    %2196 = vmatprep.subr.mxu0 0.0
    %2197 = vmatpush1.xpose.msra.mxu0 0.0
    %2198 = vmatprep.subr.mxu0 0.0
    %2199 = vmatpush1.xpose.msra.mxu0 0.0
    %2200 = vmatprep.subr.mxu0 0.0
    %2201 = vmatpush1.xpose.msra.mxu0 0.0
    %2202 = vmatprep.subr.mxu0 0.0
    %2203 = vmatpush1.xpose.msra.mxu0 %v2172
    %2204 = vmatprep.subr.mxu0 0.0
    %2205 = vmatpush1.xpose.msra.mxu0 %v2170
    %2206 = vmatprep.subr.mxu0 0.0
    %2207 = vmatpush2.xpose.msra.mxu0 0.0
    %2208 = vmatprep.subr.mxu0 0.0
    %2209 = vmatpush2.xpose.msra.mxu0 0.0
    %2210 = vmatprep.subr.mxu0 0.0
    %2211 = vmatpush2.xpose.msra.mxu0 0.0
    %2212 = vmatprep.subr.mxu0 0.0
    %2213 = vmatpush2.xpose.msra.mxu0 0.0
    %2214 = vmatprep.subr.mxu0 0.0
    %2215 = vmatpush2.xpose.msra.mxu0 0.0
    %2216 = vmatprep.subr.mxu0 0.0
    %2217 = vmatpush2.xpose.msra.mxu0 0.0
    %2218 = vmatprep.subr.mxu0 0.0
    %2219 = vmatpush2.xpose.msra.mxu0 0.0
    %2220 = vmatprep.subr.mxu0 0.0
    %2221 = vmatpush2.xpose.msra.mxu0 0.0
    %2222 = vmatprep.subr.mxu0 0.0
    %2223 = vmatpush2.xpose.msra.mxu0 0.0
    %2224 = vmatprep.subr.mxu0 0.0
    %2225 = vmatpush2.xpose.msra.mxu0 0.0
    %2226 = vmatprep.subr.mxu0 0.0
    %2227 = vmatpush2.xpose.msra.mxu0 0.0
    %2228 = vmatprep.subr.mxu0 0.0
    %2229 = vmatpush2.xpose.msra.mxu0 0.0
    %2230 = vmatprep.subr.mxu0 0.0
    %2231 = vmatpush2.xpose.msra.mxu0 0.0
    %2232 = vmatprep.subr.mxu0 0.0
    %2233 = vmatpush2.xpose.msra.mxu0 0.0
    %2234 = vmatprep.subr.mxu0 0.0
    %2235 = vmatpush2.xpose.msra.mxu0 0.0
    %2236 = vmatprep.subr.mxu0 0.0
    %2237 = vmatpush2.xpose.msra.mxu0 0.0
    %2238 = vmatprep.mubr.f32.mxu0 0.0
    %2239 = vmatmul.mubr.f32.gmra.mxu0 %v2166
    %v2240 = vpop.f32.mrf.mxu0
    %v2241 = vadd.f32 0.0, %v2240
    %v2242 = vpop.f32.mrf.mxu0
    %2243 = vmatprep.mubr.f32.mxu0 0.0
    %2244 = vmatmul.mubr.f32.gmra.mxu0 %v2168
    %v2245 = vpop.f32.mrf.mxu0
    %v2246 = vadd.f32 0.0, %v2245
    %v2247 = vpop.f32.mrf.mxu0
    %2248 = vdwg.mxu0
    %v2249 = vsel %vm408, %v1963, 0
    %v2251 = vsel %vm408, %v1965, 0
    %v2253 = vsel %vm408, %v1977, 0
    %v2255 = vsel %vm408, %v1979, 0
    %2257 = vmatprep.subr.mxu0 0.0
    %2258 = vmatpush1.xpose.msra.mxu0 0.0
    %2259 = vmatprep.subr.mxu0 0.0
    %2260 = vmatpush1.xpose.msra.mxu0 0.0
    %2261 = vmatprep.subr.mxu0 0.0
    %2262 = vmatpush1.xpose.msra.mxu0 0.0
    %2263 = vmatprep.subr.mxu0 0.0
    %2264 = vmatpush1.xpose.msra.mxu0 0.0
    %2265 = vmatprep.subr.mxu0 0.0
    %2266 = vmatpush1.xpose.msra.mxu0 0.0
    %2267 = vmatprep.subr.mxu0 0.0
    %2268 = vmatpush1.xpose.msra.mxu0 0.0
    %2269 = vmatprep.subr.mxu0 0.0
    %2270 = vmatpush1.xpose.msra.mxu0 0.0
    %2271 = vmatprep.subr.mxu0 0.0
    %2272 = vmatpush1.xpose.msra.mxu0 0.0
    %2273 = vmatprep.subr.mxu0 0.0
    %2274 = vmatpush1.xpose.msra.mxu0 0.0
    %2275 = vmatprep.subr.mxu0 0.0
    %2276 = vmatpush1.xpose.msra.mxu0 0.0
    %2277 = vmatprep.subr.mxu0 0.0
    %2278 = vmatpush1.xpose.msra.mxu0 0.0
    %2279 = vmatprep.subr.mxu0 0.0
    %2280 = vmatpush1.xpose.msra.mxu0 0.0
    %2281 = vmatprep.subr.mxu0 0.0
    %2282 = vmatpush1.xpose.msra.mxu0 0.0
    %2283 = vmatprep.subr.mxu0 0.0
    %2284 = vmatpush1.xpose.msra.mxu0 0.0
    %2285 = vmatprep.subr.mxu0 0.0
    %2286 = vmatpush1.xpose.msra.mxu0 %v2255
    %2287 = vmatprep.subr.mxu0 0.0
    %2288 = vmatpush1.xpose.msra.mxu0 %v2253
    %2289 = vmatprep.subr.mxu0 0.0
    %2290 = vmatpush2.xpose.msra.mxu0 0.0
    %2291 = vmatprep.subr.mxu0 0.0
    %2292 = vmatpush2.xpose.msra.mxu0 0.0
    %2293 = vmatprep.subr.mxu0 0.0
    %2294 = vmatpush2.xpose.msra.mxu0 0.0
    %2295 = vmatprep.subr.mxu0 0.0
    %2296 = vmatpush2.xpose.msra.mxu0 0.0
    %2297 = vmatprep.subr.mxu0 0.0
    %2298 = vmatpush2.xpose.msra.mxu0 0.0
    %2299 = vmatprep.subr.mxu0 0.0
    %2300 = vmatpush2.xpose.msra.mxu0 0.0
    %2301 = vmatprep.subr.mxu0 0.0
    %2302 = vmatpush2.xpose.msra.mxu0 0.0
    %2303 = vmatprep.subr.mxu0 0.0
    %2304 = vmatpush2.xpose.msra.mxu0 0.0
    %2305 = vmatprep.subr.mxu0 0.0
    %2306 = vmatpush2.xpose.msra.mxu0 0.0
    %2307 = vmatprep.subr.mxu0 0.0
    %2308 = vmatpush2.xpose.msra.mxu0 0.0
    %2309 = vmatprep.subr.mxu0 0.0
    %2310 = vmatpush2.xpose.msra.mxu0 0.0
    %2311 = vmatprep.subr.mxu0 0.0
    %2312 = vmatpush2.xpose.msra.mxu0 0.0
    %2313 = vmatprep.subr.mxu0 0.0
    %2314 = vmatpush2.xpose.msra.mxu0 0.0
    %2315 = vmatprep.subr.mxu0 0.0
    %2316 = vmatpush2.xpose.msra.mxu0 0.0
    %2317 = vmatprep.subr.mxu0 0.0
    %2318 = vmatpush2.xpose.msra.mxu0 0.0
    %2319 = vmatprep.subr.mxu0 0.0
    %2320 = vmatpush2.xpose.msra.mxu0 0.0
    %2321 = vmatprep.mubr.f32.mxu0 0.0
    %2322 = vmatmul.mubr.f32.gmra.mxu0 %v2249
    %v2323 = vpop.f32.mrf.mxu0
    %v2324 = vadd.f32 0.0, %v2323
    %v2325 = vpop.f32.mrf.mxu0
    %2326 = vmatprep.mubr.f32.mxu0 0.0
    %2327 = vmatmul.mubr.f32.gmra.mxu0 %v2251
    %v2328 = vpop.f32.mrf.mxu0
    %v2329 = vadd.f32 0.0, %v2328
    %v2330 = vpop.f32.mrf.mxu0
    %2331 = vdwg.mxu0
    %v2332 = vmul.f32 %v2075, 0.17677669
    %v2333 = vmul.f32 %v2080, 0.17677669
    %v2334 = vmul.f32 %v2158, 0.17677669
    %v2335 = vmul.f32 %v2163, 0.17677669
    %v2336 = vmul.f32 %v2241, 0.17677669
    %v2337 = vmul.f32 %v2246, 0.17677669
    %v2338 = vmul.f32 %v2324, 0.17677669
    %v2339 = vmul.f32 %v2329, 0.17677669
    %v2340 = vadd.f32 %v2332, %v100
    %v2341 = vadd.f32 %v2333, %v101
    %v2342 = vadd.f32 %v2334, %v100
    %v2343 = vadd.f32 %v2335, %v101
    %v2344 = vadd.f32 %v2336, %v100
    %v2345 = vadd.f32 %v2337, %v101
    %v2346 = vadd.f32 %v2338, %v100
    %v2347 = vadd.f32 %v2339, %v101
    %v2348 = vsel %vm757, %v2340, -inf
    %2349 = vmax.xlane.f32.xlu0 %v2348
    %v2350 = vpop.xlane.xlu0 %2349
    %v2351 = vsel %vm757, %v2341, -inf
    %2352 = vmax.xlane.f32.xlu0 %v2351
    %v2353 = vpop.xlane.xlu0 %2352
    %v2354 = vsel %vm757, %v2342, -inf
    %2355 = vmax.xlane.f32.xlu0 %v2354
    %v2356 = vpop.xlane.xlu0 %2355
    %v2357 = vsel %vm757, %v2343, -inf
    %2358 = vmax.xlane.f32.xlu0 %v2357
    %v2359 = vpop.xlane.xlu0 %2358
    %v2360 = vsel %vm757, %v2344, -inf
    %2361 = vmax.xlane.f32.xlu0 %v2360
    %v2362 = vpop.xlane.xlu0 %2361
    %v2363 = vsel %vm757, %v2345, -inf
    %2364 = vmax.xlane.f32.xlu0 %v2363
    %v2365 = vpop.xlane.xlu0 %2364
    %v2366 = vsel %vm757, %v2346, -inf
    %2367 = vmax.xlane.f32.xlu0 %v2366
    %v2368 = vpop.xlane.xlu0 %2367
    %v2369 = vsel %vm757, %v2347, -inf
    %2370 = vmax.xlane.f32.xlu0 %v2369
    %v2371 = vpop.xlane.xlu0 %2370
    %v2372 = vsub.f32 %v2340, %v2350
    %v2373 = vsub.f32 %v2341, %v2353
    %v2374 = vsub.f32 %v2342, %v2356
    %v2375 = vsub.f32 %v2343, %v2359
    %v2376 = vsub.f32 %v2344, %v2362
    %v2377 = vsub.f32 %v2345, %v2365
    %v2378 = vsub.f32 %v2346, %v2368
    %v2379 = vsub.f32 %v2347, %v2371
    %v2380 = vmul.f32 %v2372, 1.442695
    %v2381 = vpow.pop %v2380
    %v2382 = vmul.f32 %v2373, 1.442695
    %v2383 = vpow.pop %v2382
    %v2384 = vmul.f32 %v2374, 1.442695
    %v2385 = vpow.pop %v2384
    %v2386 = vmul.f32 %v2375, 1.442695
    %v2387 = vpow.pop %v2386
    %v2388 = vmul.f32 %v2376, 1.442695
    %v2389 = vpow.pop %v2388
    %v2390 = vmul.f32 %v2377, 1.442695
    %v2391 = vpow.pop %v2390
    %v2392 = vmul.f32 %v2378, 1.442695
    %v2393 = vpow.pop %v2392
    %v2394 = vmul.f32 %v2379, 1.442695
    %v2395 = vpow.pop %v2394
    %v2396 = vsel %vm757, %v2381, 0.0
    %2397 = vadd.xlane.f32.xlu0 %v2396
    %v2398 = vpop.xlane.xlu0 %2397
    %v2399 = vsel %vm757, %v2383, 0.0
    %2400 = vadd.xlane.f32.xlu0 %v2399
    %v2401 = vpop.xlane.xlu0 %2400
    %v2402 = vsel %vm757, %v2385, 0.0
    %2403 = vadd.xlane.f32.xlu0 %v2402
    %v2404 = vpop.xlane.xlu0 %2403
    %v2405 = vsel %vm757, %v2387, 0.0
    %2406 = vadd.xlane.f32.xlu0 %v2405
    %v2407 = vpop.xlane.xlu0 %2406
    %v2408 = vsel %vm757, %v2389, 0.0
    %2409 = vadd.xlane.f32.xlu0 %v2408
    %v2410 = vpop.xlane.xlu0 %2409
    %v2411 = vsel %vm757, %v2391, 0.0
    %2412 = vadd.xlane.f32.xlu0 %v2411
    %v2413 = vpop.xlane.xlu0 %2412
    %v2414 = vsel %vm757, %v2393, 0.0
    %2415 = vadd.xlane.f32.xlu0 %v2414
    %v2416 = vpop.xlane.xlu0 %2415
    %v2417 = vsel %vm757, %v2395, 0.0
    %2418 = vadd.xlane.f32.xlu0 %v2417
    %v2419 = vpop.xlane.xlu0 %2418
    %v2420 = vrcp.pop %v2398
    %v2421 = vrcp.pop %v2401
    %v2422 = vrcp.pop %v2404
    %v2423 = vrcp.pop %v2407
    %v2424 = vrcp.pop %v2410
    %v2425 = vrcp.pop %v2413
    %v2426 = vrcp.pop %v2416
    %v2427 = vrcp.pop %v2419
    %v2428 = vmul.f32 %v2381, %v2420
    %v2429 = vmul.f32 %v2383, %v2421
    %v2430 = vmul.f32 %v2385, %v2422
    %v2431 = vmul.f32 %v2387, %v2423
    %v2432 = vmul.f32 %v2389, %v2424
    %v2433 = vmul.f32 %v2391, %v2425
    %v2434 = vmul.f32 %v2393, %v2426
    %v2435 = vmul.f32 %v2395, %v2427
    %v2437 = vsel %vm757, %v2428, 0
    %v2440 = vsel %vm757, %v2429, 0
    %2442 = vmatprep.subr.mxu0 0.0
    %2443 = vmatpush1.msra.mxu0 0.0
    %2444 = vmatprep.subr.mxu0 0.0
    %2445 = vmatpush1.msra.mxu0 0.0
    %2446 = vmatprep.subr.mxu0 0.0
    %2447 = vmatpush1.msra.mxu0 0.0
    %2448 = vmatprep.subr.mxu0 0.0
    %2449 = vmatpush1.msra.mxu0 0.0
    %2450 = vmatprep.subr.mxu0 0.0
    %2451 = vmatpush1.msra.mxu0 0.0
    %2452 = vmatprep.subr.mxu0 0.0
    %2453 = vmatpush1.msra.mxu0 0.0
    %2454 = vmatprep.subr.mxu0 0.0
    %2455 = vmatpush1.msra.mxu0 0.0
    %2456 = vmatprep.subr.mxu0 0.0
    %2457 = vmatpush1.msra.mxu0 0.0
    %2458 = vmatprep.subr.mxu0 0.0
    %2459 = vmatpush1.msra.mxu0 0.0
    %2460 = vmatprep.subr.mxu0 0.0
    %2461 = vmatpush1.msra.mxu0 0.0
    %2462 = vmatprep.subr.mxu0 0.0
    %2463 = vmatpush1.msra.mxu0 0.0
    %2464 = vmatprep.subr.mxu0 0.0
    %2465 = vmatpush1.msra.mxu0 0.0
    %2466 = vmatprep.subr.mxu0 0.0
    %2467 = vmatpush1.msra.mxu0 0.0
    %2468 = vmatprep.subr.mxu0 0.0
    %2469 = vmatpush1.msra.mxu0 0.0
    %2470 = vmatprep.subr.mxu0 0.0
    %2471 = vmatpush1.msra.mxu0 %v1949
    %2472 = vmatprep.subr.mxu0 0.0
    %2473 = vmatpush1.msra.mxu0 %v1944
    %2474 = vmatprep.subr.mxu0 0.0
    %2475 = vmatpush2.msra.mxu0 0.0
    %2476 = vmatprep.subr.mxu0 0.0
    %2477 = vmatpush2.msra.mxu0 0.0
    %2478 = vmatprep.subr.mxu0 0.0
    %2479 = vmatpush2.msra.mxu0 0.0
    %2480 = vmatprep.subr.mxu0 0.0
    %2481 = vmatpush2.msra.mxu0 0.0
    %2482 = vmatprep.subr.mxu0 0.0
    %2483 = vmatpush2.msra.mxu0 0.0
    %2484 = vmatprep.subr.mxu0 0.0
    %2485 = vmatpush2.msra.mxu0 0.0
    %2486 = vmatprep.subr.mxu0 0.0
    %2487 = vmatpush2.msra.mxu0 0.0
    %2488 = vmatprep.subr.mxu0 0.0
    %2489 = vmatpush2.msra.mxu0 0.0
    %2490 = vmatprep.subr.mxu0 0.0
    %2491 = vmatpush2.msra.mxu0 0.0
    %2492 = vmatprep.subr.mxu0 0.0
    %2493 = vmatpush2.msra.mxu0 0.0
    %2494 = vmatprep.subr.mxu0 0.0
    %2495 = vmatpush2.msra.mxu0 0.0
    %2496 = vmatprep.subr.mxu0 0.0
    %2497 = vmatpush2.msra.mxu0 0.0
    %2498 = vmatprep.subr.mxu0 0.0
    %2499 = vmatpush2.msra.mxu0 0.0
    %2500 = vmatprep.subr.mxu0 0.0
    %2501 = vmatpush2.msra.mxu0 0.0
    %2502 = vmatprep.subr.mxu0 0.0
    %2503 = vmatpush2.msra.mxu0 0.0
    %2504 = vmatprep.subr.mxu0 0.0
    %2505 = vmatpush2.msra.mxu0 0.0
    %2506 = vmatprep.mubr.f32.mxu0 0.0
    %2507 = vmatmul.mubr.f32.gmra.mxu0 %v2437
    %v2508 = vpop.f32.mrf.mxu0
    %v2509 = vadd.f32 0.0, %v2508
    %v2510 = vpop.f32.mrf.mxu0
    %2511 = vmatprep.mubr.f32.mxu0 0.0
    %2512 = vmatmul.mubr.f32.gmra.mxu0 %v2440
    %v2513 = vpop.f32.mrf.mxu0
    %v2514 = vadd.f32 0.0, %v2513
    %v2515 = vpop.f32.mrf.mxu0
    %2516 = vdwg.mxu0
    %v2518 = vsel %vm757, %v2430, 0
    %v2521 = vsel %vm757, %v2431, 0
    %2523 = vmatprep.subr.mxu0 0.0
    %2524 = vmatpush1.msra.mxu0 0.0
    %2525 = vmatprep.subr.mxu0 0.0
    %2526 = vmatpush1.msra.mxu0 0.0
    %2527 = vmatprep.subr.mxu0 0.0
    %2528 = vmatpush1.msra.mxu0 0.0
    %2529 = vmatprep.subr.mxu0 0.0
    %2530 = vmatpush1.msra.mxu0 0.0
    %2531 = vmatprep.subr.mxu0 0.0
    %2532 = vmatpush1.msra.mxu0 0.0
    %2533 = vmatprep.subr.mxu0 0.0
    %2534 = vmatpush1.msra.mxu0 0.0
    %2535 = vmatprep.subr.mxu0 0.0
    %2536 = vmatpush1.msra.mxu0 0.0
    %2537 = vmatprep.subr.mxu0 0.0
    %2538 = vmatpush1.msra.mxu0 0.0
    %2539 = vmatprep.subr.mxu0 0.0
    %2540 = vmatpush1.msra.mxu0 0.0
    %2541 = vmatprep.subr.mxu0 0.0
    %2542 = vmatpush1.msra.mxu0 0.0
    %2543 = vmatprep.subr.mxu0 0.0
    %2544 = vmatpush1.msra.mxu0 0.0
    %2545 = vmatprep.subr.mxu0 0.0
    %2546 = vmatpush1.msra.mxu0 0.0
    %2547 = vmatprep.subr.mxu0 0.0
    %2548 = vmatpush1.msra.mxu0 0.0
    %2549 = vmatprep.subr.mxu0 0.0
    %2550 = vmatpush1.msra.mxu0 0.0
    %2551 = vmatprep.subr.mxu0 0.0
    %2552 = vmatpush1.msra.mxu0 %v1985
    %2553 = vmatprep.subr.mxu0 0.0
    %2554 = vmatpush1.msra.mxu0 %v1983
    %2555 = vmatprep.subr.mxu0 0.0
    %2556 = vmatpush2.msra.mxu0 0.0
    %2557 = vmatprep.subr.mxu0 0.0
    %2558 = vmatpush2.msra.mxu0 0.0
    %2559 = vmatprep.subr.mxu0 0.0
    %2560 = vmatpush2.msra.mxu0 0.0
    %2561 = vmatprep.subr.mxu0 0.0
    %2562 = vmatpush2.msra.mxu0 0.0
    %2563 = vmatprep.subr.mxu0 0.0
    %2564 = vmatpush2.msra.mxu0 0.0
    %2565 = vmatprep.subr.mxu0 0.0
    %2566 = vmatpush2.msra.mxu0 0.0
    %2567 = vmatprep.subr.mxu0 0.0
    %2568 = vmatpush2.msra.mxu0 0.0
    %2569 = vmatprep.subr.mxu0 0.0
    %2570 = vmatpush2.msra.mxu0 0.0
    %2571 = vmatprep.subr.mxu0 0.0
    %2572 = vmatpush2.msra.mxu0 0.0
    %2573 = vmatprep.subr.mxu0 0.0
    %2574 = vmatpush2.msra.mxu0 0.0
    %2575 = vmatprep.subr.mxu0 0.0
    %2576 = vmatpush2.msra.mxu0 0.0
    %2577 = vmatprep.subr.mxu0 0.0
    %2578 = vmatpush2.msra.mxu0 0.0
    %2579 = vmatprep.subr.mxu0 0.0
    %2580 = vmatpush2.msra.mxu0 0.0
    %2581 = vmatprep.subr.mxu0 0.0
    %2582 = vmatpush2.msra.mxu0 0.0
    %2583 = vmatprep.subr.mxu0 0.0
    %2584 = vmatpush2.msra.mxu0 0.0
    %2585 = vmatprep.subr.mxu0 0.0
    %2586 = vmatpush2.msra.mxu0 0.0
    %2587 = vmatprep.mubr.f32.mxu0 0.0
    %2588 = vmatmul.mubr.f32.gmra.mxu0 %v2518
    %v2589 = vpop.f32.mrf.mxu0
    %v2590 = vadd.f32 0.0, %v2589
    %v2591 = vpop.f32.mrf.mxu0
    %2592 = vmatprep.mubr.f32.mxu0 0.0
    %2593 = vmatmul.mubr.f32.gmra.mxu0 %v2521
    %v2594 = vpop.f32.mrf.mxu0
    %v2595 = vadd.f32 0.0, %v2594
    %v2596 = vpop.f32.mrf.mxu0
    %2597 = vdwg.mxu0
    %v2599 = vsel %vm757, %v2432, 0
    %v2602 = vsel %vm757, %v2433, 0
    %2604 = vmatprep.subr.mxu0 0.0
    %2605 = vmatpush1.msra.mxu0 0.0
    %2606 = vmatprep.subr.mxu0 0.0
    %2607 = vmatpush1.msra.mxu0 0.0
    %2608 = vmatprep.subr.mxu0 0.0
    %2609 = vmatpush1.msra.mxu0 0.0
    %2610 = vmatprep.subr.mxu0 0.0
    %2611 = vmatpush1.msra.mxu0 0.0
    %2612 = vmatprep.subr.mxu0 0.0
    %2613 = vmatpush1.msra.mxu0 0.0
    %2614 = vmatprep.subr.mxu0 0.0
    %2615 = vmatpush1.msra.mxu0 0.0
    %2616 = vmatprep.subr.mxu0 0.0
    %2617 = vmatpush1.msra.mxu0 0.0
    %2618 = vmatprep.subr.mxu0 0.0
    %2619 = vmatpush1.msra.mxu0 0.0
    %2620 = vmatprep.subr.mxu0 0.0
    %2621 = vmatpush1.msra.mxu0 0.0
    %2622 = vmatprep.subr.mxu0 0.0
    %2623 = vmatpush1.msra.mxu0 0.0
    %2624 = vmatprep.subr.mxu0 0.0
    %2625 = vmatpush1.msra.mxu0 0.0
    %2626 = vmatprep.subr.mxu0 0.0
    %2627 = vmatpush1.msra.mxu0 0.0
    %2628 = vmatprep.subr.mxu0 0.0
    %2629 = vmatpush1.msra.mxu0 0.0
    %2630 = vmatprep.subr.mxu0 0.0
    %2631 = vmatpush1.msra.mxu0 0.0
    %2632 = vmatprep.subr.mxu0 0.0
    %2633 = vmatpush1.msra.mxu0 %v1991
    %2634 = vmatprep.subr.mxu0 0.0
    %2635 = vmatpush1.msra.mxu0 %v1989
    %2636 = vmatprep.subr.mxu0 0.0
    %2637 = vmatpush2.msra.mxu0 0.0
    %2638 = vmatprep.subr.mxu0 0.0
    %2639 = vmatpush2.msra.mxu0 0.0
    %2640 = vmatprep.subr.mxu0 0.0
    %2641 = vmatpush2.msra.mxu0 0.0
    %2642 = vmatprep.subr.mxu0 0.0
    %2643 = vmatpush2.msra.mxu0 0.0
    %2644 = vmatprep.subr.mxu0 0.0
    %2645 = vmatpush2.msra.mxu0 0.0
    %2646 = vmatprep.subr.mxu0 0.0
    %2647 = vmatpush2.msra.mxu0 0.0
    %2648 = vmatprep.subr.mxu0 0.0
    %2649 = vmatpush2.msra.mxu0 0.0
    %2650 = vmatprep.subr.mxu0 0.0
    %2651 = vmatpush2.msra.mxu0 0.0
    %2652 = vmatprep.subr.mxu0 0.0
    %2653 = vmatpush2.msra.mxu0 0.0
    %2654 = vmatprep.subr.mxu0 0.0
    %2655 = vmatpush2.msra.mxu0 0.0
    %2656 = vmatprep.subr.mxu0 0.0
    %2657 = vmatpush2.msra.mxu0 0.0
    %2658 = vmatprep.subr.mxu0 0.0
    %2659 = vmatpush2.msra.mxu0 0.0
    %2660 = vmatprep.subr.mxu0 0.0
    %2661 = vmatpush2.msra.mxu0 0.0
    %2662 = vmatprep.subr.mxu0 0.0
    %2663 = vmatpush2.msra.mxu0 0.0
    %2664 = vmatprep.subr.mxu0 0.0
    %2665 = vmatpush2.msra.mxu0 0.0
    %2666 = vmatprep.subr.mxu0 0.0
    %2667 = vmatpush2.msra.mxu0 0.0
    %2668 = vmatprep.mubr.f32.mxu0 0.0
    %2669 = vmatmul.mubr.f32.gmra.mxu0 %v2599
    %v2670 = vpop.f32.mrf.mxu0
    %v2671 = vadd.f32 0.0, %v2670
    %v2672 = vpop.f32.mrf.mxu0
    %2673 = vmatprep.mubr.f32.mxu0 0.0
    %2674 = vmatmul.mubr.f32.gmra.mxu0 %v2602
    %v2675 = vpop.f32.mrf.mxu0
    %v2676 = vadd.f32 0.0, %v2675
    %v2677 = vpop.f32.mrf.mxu0
    %2678 = vdwg.mxu0
    %v2680 = vsel %vm757, %v2434, 0
    %v2683 = vsel %vm757, %v2435, 0
    %2685 = vmatprep.subr.mxu0 0.0
    %2686 = vmatpush1.msra.mxu0 0.0
    %2687 = vmatprep.subr.mxu0 0.0
    %2688 = vmatpush1.msra.mxu0 0.0
    %2689 = vmatprep.subr.mxu0 0.0
    %2690 = vmatpush1.msra.mxu0 0.0
    %2691 = vmatprep.subr.mxu0 0.0
    %2692 = vmatpush1.msra.mxu0 0.0
    %2693 = vmatprep.subr.mxu0 0.0
    %2694 = vmatpush1.msra.mxu0 0.0
    %2695 = vmatprep.subr.mxu0 0.0
    %2696 = vmatpush1.msra.mxu0 0.0
    %2697 = vmatprep.subr.mxu0 0.0
    %2698 = vmatpush1.msra.mxu0 0.0
    %2699 = vmatprep.subr.mxu0 0.0
    %2700 = vmatpush1.msra.mxu0 0.0
    %2701 = vmatprep.subr.mxu0 0.0
    %2702 = vmatpush1.msra.mxu0 0.0
    %2703 = vmatprep.subr.mxu0 0.0
    %2704 = vmatpush1.msra.mxu0 0.0
    %2705 = vmatprep.subr.mxu0 0.0
    %2706 = vmatpush1.msra.mxu0 0.0
    %2707 = vmatprep.subr.mxu0 0.0
    %2708 = vmatpush1.msra.mxu0 0.0
    %2709 = vmatprep.subr.mxu0 0.0
    %2710 = vmatpush1.msra.mxu0 0.0
    %2711 = vmatprep.subr.mxu0 0.0
    %2712 = vmatpush1.msra.mxu0 0.0
    %2713 = vmatprep.subr.mxu0 0.0
    %2714 = vmatpush1.msra.mxu0 %v1997
    %2715 = vmatprep.subr.mxu0 0.0
    %2716 = vmatpush1.msra.mxu0 %v1995
    %2717 = vmatprep.subr.mxu0 0.0
    %2718 = vmatpush2.msra.mxu0 0.0
    %2719 = vmatprep.subr.mxu0 0.0
    %2720 = vmatpush2.msra.mxu0 0.0
    %2721 = vmatprep.subr.mxu0 0.0
    %2722 = vmatpush2.msra.mxu0 0.0
    %2723 = vmatprep.subr.mxu0 0.0
    %2724 = vmatpush2.msra.mxu0 0.0
    %2725 = vmatprep.subr.mxu0 0.0
    %2726 = vmatpush2.msra.mxu0 0.0
    %2727 = vmatprep.subr.mxu0 0.0
    %2728 = vmatpush2.msra.mxu0 0.0
    %2729 = vmatprep.subr.mxu0 0.0
    %2730 = vmatpush2.msra.mxu0 0.0
    %2731 = vmatprep.subr.mxu0 0.0
    %2732 = vmatpush2.msra.mxu0 0.0
    %2733 = vmatprep.subr.mxu0 0.0
    %2734 = vmatpush2.msra.mxu0 0.0
    %2735 = vmatprep.subr.mxu0 0.0
    %2736 = vmatpush2.msra.mxu0 0.0
    %2737 = vmatprep.subr.mxu0 0.0
    %2738 = vmatpush2.msra.mxu0 0.0
    %2739 = vmatprep.subr.mxu0 0.0
    %2740 = vmatpush2.msra.mxu0 0.0
    %2741 = vmatprep.subr.mxu0 0.0
    %2742 = vmatpush2.msra.mxu0 0.0
    %2743 = vmatprep.subr.mxu0 0.0
    %2744 = vmatpush2.msra.mxu0 0.0
    %2745 = vmatprep.subr.mxu0 0.0
    %2746 = vmatpush2.msra.mxu0 0.0
    %2747 = vmatprep.subr.mxu0 0.0
    %2748 = vmatpush2.msra.mxu0 0.0
    %2749 = vmatprep.mubr.f32.mxu0 0.0
    %2750 = vmatmul.mubr.f32.gmra.mxu0 %v2680
    %v2751 = vpop.f32.mrf.mxu0
    %v2752 = vadd.f32 0.0, %v2751
    %v2753 = vpop.f32.mrf.mxu0
    %2754 = vmatprep.mubr.f32.mxu0 0.0
    %2755 = vmatmul.mubr.f32.gmra.mxu0 %v2683
    %v2756 = vpop.f32.mrf.mxu0
    %v2757 = vadd.f32 0.0, %v2756
    %v2758 = vpop.f32.mrf.mxu0
    %2759 = vdwg.mxu0
    %2762 = vrot.lane.b32.xlu0 %v2590, 32
    %v2763 = vpop.permute.xlu0 %2762
    %2764 = vrot.lane.b32.xlu0 %v2595, 32
    %v2765 = vpop.permute.xlu0 %2764
    %2770 = vrot.lane.b32.xlu0 %v2671, 64
    %v2771 = vpop.permute.xlu0 %2770
    %2772 = vrot.lane.b32.xlu0 %v2676, 64
    %v2773 = vpop.permute.xlu0 %2772
    %2778 = vrot.lane.b32.xlu0 %v2752, 96
    %v2779 = vpop.permute.xlu0 %2778
    %2780 = vrot.lane.b32.xlu0 %v2757, 96
    %v2781 = vpop.permute.xlu0 %2780
    %v2784 = vsel %vm408, %v2509, %v2763
    %v2785 = vsel %vm408, %v2514, %v2765
    %v2786 = vsel %vm1196, %v2784, %v2771
    %v2787 = vsel %vm1196, %v2785, %v2773
    %v2788 = vsel %vm1199, %v2786, %v2779
    %v2789 = vsel %vm1199, %v2787, %v2781
    %s2790 = scalar_lea.vmem %s6, 128
    %v2791 = vld [vmem:[%s2790] sm:$0xff]
    %v2792 = vld [vmem:[%s2790 + $0x8] sm:$0xff]
    %v2793 = vld [vmem:[%s2790 + $0x10] sm:$0xff]
    %v2794 = vld [vmem:[%s2790 + $0x18] sm:$0xff]
    %v2795 = vld [vmem:[%s2790 + $0x20] sm:$0xff]
    %v2796 = vld [vmem:[%s2790 + $0x28] sm:$0xff]
    %v2797 = vld [vmem:[%s2790 + $0x30] sm:$0xff]
    %v2798 = vld [vmem:[%s2790 + $0x38] sm:$0xff]
    %v2799 = vld [vmem:[%s2790 + $0x40] sm:$0xff]
    %v2800 = vld [vmem:[%s2790 + $0x48] sm:$0xff]
    %v2801 = vld [vmem:[%s2790 + $0x50] sm:$0xff]
    %v2802 = vld [vmem:[%s2790 + $0x58] sm:$0xff]
    %v2803 = vld [vmem:[%s2790 + $0x60] sm:$0xff]
    %v2804 = vld [vmem:[%s2790 + $0x68] sm:$0xff]
    %v2805 = vld [vmem:[%s2790 + $0x70] sm:$0xff]
    %v2806 = vld [vmem:[%s2790 + $0x78] sm:$0xff]
    %2807 = vmatprep.subr.mxu0 0.0
    %2808 = vmatpush1.msra.mxu0 %v2806
    %2809 = vmatprep.subr.mxu0 0.0
    %2810 = vmatpush1.msra.mxu0 %v2805
    %2811 = vmatprep.subr.mxu0 0.0
    %2812 = vmatpush1.msra.mxu0 %v2804
    %2813 = vmatprep.subr.mxu0 0.0
    %2814 = vmatpush1.msra.mxu0 %v2803
    %2815 = vmatprep.subr.mxu0 0.0
    %2816 = vmatpush1.msra.mxu0 %v2802
    %2817 = vmatprep.subr.mxu0 0.0
    %2818 = vmatpush1.msra.mxu0 %v2801
    %2819 = vmatprep.subr.mxu0 0.0
    %2820 = vmatpush1.msra.mxu0 %v2800
    %2821 = vmatprep.subr.mxu0 0.0
    %2822 = vmatpush1.msra.mxu0 %v2799
    %2823 = vmatprep.subr.mxu0 0.0
    %2824 = vmatpush1.msra.mxu0 %v2798
    %2825 = vmatprep.subr.mxu0 0.0
    %2826 = vmatpush1.msra.mxu0 %v2797
    %2827 = vmatprep.subr.mxu0 0.0
    %2828 = vmatpush1.msra.mxu0 %v2796
    %2829 = vmatprep.subr.mxu0 0.0
    %2830 = vmatpush1.msra.mxu0 %v2795
    %2831 = vmatprep.subr.mxu0 0.0
    %2832 = vmatpush1.msra.mxu0 %v2794
    %2833 = vmatprep.subr.mxu0 0.0
    %2834 = vmatpush1.msra.mxu0 %v2793
    %2835 = vmatprep.subr.mxu0 0.0
    %2836 = vmatpush1.msra.mxu0 %v2792
    %2837 = vmatprep.subr.mxu0 0.0
    %2838 = vmatpush1.msra.mxu0 %v2791
    %2839 = vmatprep.subr.mxu0 0.0
    %2840 = vmatpush2.msra.mxu0 0.0
    %2841 = vmatprep.subr.mxu0 0.0
    %2842 = vmatpush2.msra.mxu0 0.0
    %2843 = vmatprep.subr.mxu0 0.0
    %2844 = vmatpush2.msra.mxu0 0.0
    %2845 = vmatprep.subr.mxu0 0.0
    %2846 = vmatpush2.msra.mxu0 0.0
    %2847 = vmatprep.subr.mxu0 0.0
    %2848 = vmatpush2.msra.mxu0 0.0
    %2849 = vmatprep.subr.mxu0 0.0
    %2850 = vmatpush2.msra.mxu0 0.0
    %2851 = vmatprep.subr.mxu0 0.0
    %2852 = vmatpush2.msra.mxu0 0.0
    %2853 = vmatprep.subr.mxu0 0.0
    %2854 = vmatpush2.msra.mxu0 0.0
    %2855 = vmatprep.subr.mxu0 0.0
    %2856 = vmatpush2.msra.mxu0 0.0
    %2857 = vmatprep.subr.mxu0 0.0
    %2858 = vmatpush2.msra.mxu0 0.0
    %2859 = vmatprep.subr.mxu0 0.0
    %2860 = vmatpush2.msra.mxu0 0.0
    %2861 = vmatprep.subr.mxu0 0.0
    %2862 = vmatpush2.msra.mxu0 0.0
    %2863 = vmatprep.subr.mxu0 0.0
    %2864 = vmatpush2.msra.mxu0 0.0
    %2865 = vmatprep.subr.mxu0 0.0
    %2866 = vmatpush2.msra.mxu0 0.0
    %2867 = vmatprep.subr.mxu0 0.0
    %2868 = vmatpush2.msra.mxu0 0.0
    %2869 = vmatprep.subr.mxu0 0.0
    %2870 = vmatpush2.msra.mxu0 0.0
    %2871 = vmatprep.mubr.f32.mxu0 0.0
    %2872 = vmatmul.mubr.f32.gmra.mxu0 %v2788
    %v2873 = vpop.f32.mrf.mxu0
    %v2874 = vadd.f32 0.0, %v2873
    %v2875 = vpop.f32.mrf.mxu0
    %2876 = vmatprep.mubr.f32.mxu0 0.0
    %2877 = vmatmul.mubr.f32.gmra.mxu0 %v2789
    %v2878 = vpop.f32.mrf.mxu0
    %v2879 = vadd.f32 0.0, %v2878
    %v2880 = vpop.f32.mrf.mxu0
    %2881 = vdwg.mxu0
    %v2882 = vadd.f32 %v1689, %v2874
    %v2883 = vadd.f32 %v1690, %v2879
    %s2884 = scalar_lea.vmem %s7, 1
    %v2885 = vld [vmem:[%s2884] sm:$0x1]
    %v2887 = vlaneseq
    %v2888 = vshrl.u32 %v2887, 7
    %v2889 = vsub.s32 0, %v2888
    %v2890 = vrot.slane %v2885, %v2889
    %v2892 = vadd.f32 %v2882, %v2890
    %v2893 = vadd.f32 %v2883, %v2890
    %s2894 = scalar_lea.vmem %s8, 1
    %v2895 = vld [vmem:[%s2894] sm:$0x1]
    %s2896 = scalar_lea.vmem %s9, 1
    %v2897 = vld [vmem:[%s2896] sm:$0x1]
    %2898 = vadd.xlane.f32.xlu0 %v2892
    %v2899 = vpop.xlane.xlu0 %2898
    %2900 = vadd.xlane.f32.xlu0 %v2893
    %v2901 = vpop.xlane.xlu0 %2900
    %v2902 = vmul.f32 %v2899, %v108
    %v2903 = vmul.f32 %v2901, %v108
    %v2904 = vsub.f32 %v2892, %v2902
    %v2905 = vsub.f32 %v2893, %v2903
    %v2906 = vmul.f32 %v2904, %v2904
    %v2907 = vmul.f32 %v2905, %v2905
    %2908 = vadd.xlane.f32.xlu0 %v2906
    %v2909 = vpop.xlane.xlu0 %2908
    %2910 = vadd.xlane.f32.xlu0 %v2907
    %v2911 = vpop.xlane.xlu0 %2910
    %v2912 = vmul.f32 %v2909, %v108
    %v2913 = vmul.f32 %v2911, %v108
    %v2914 = vadd.f32 %v2912, 1e-05
    %v2915 = vadd.f32 %v2913, 1e-05
    %v2916 = vrsqrt.pop %v2914
    %v2917 = vrsqrt.pop %v2915
    %v2918 = vmul.f32 %v2904, %v2916
    %v2919 = vmul.f32 %v2905, %v2917
    %v2921 = vlaneseq
    %v2922 = vshrl.u32 %v2921, 7
    %v2923 = vsub.s32 0, %v2922
    %v2924 = vrot.slane %v2895, %v2923
    %v2926 = vmul.f32 %v2918, %v2924
    %v2927 = vmul.f32 %v2919, %v2924
    %v2929 = vlaneseq
    %v2930 = vshrl.u32 %v2929, 7
    %v2931 = vsub.s32 0, %v2930
    %v2932 = vrot.slane %v2897, %v2931
    %v2934 = vadd.f32 %v2926, %v2932
    %v2935 = vadd.f32 %v2927, %v2932
    %s2936 = scalar_lea.vmem [#allocation5], 256
    %v2937 = vld [vmem:[%s2936] sm:$0xff]
    %v2938 = vld [vmem:[%s2936 + $0x8] sm:$0xff]
    %v2939 = vld [vmem:[%s2936 + $0x10] sm:$0xff]
    %v2940 = vld [vmem:[%s2936 + $0x18] sm:$0xff]
    %v2941 = vld [vmem:[%s2936 + $0x20] sm:$0xff]
    %v2942 = vld [vmem:[%s2936 + $0x28] sm:$0xff]
    %v2943 = vld [vmem:[%s2936 + $0x30] sm:$0xff]
    %v2944 = vld [vmem:[%s2936 + $0x38] sm:$0xff]
    %v2945 = vld [vmem:[%s2936 + $0x40] sm:$0xff]
    %v2946 = vld [vmem:[%s2936 + $0x48] sm:$0xff]
    %v2947 = vld [vmem:[%s2936 + $0x50] sm:$0xff]
    %v2948 = vld [vmem:[%s2936 + $0x58] sm:$0xff]
    %v2949 = vld [vmem:[%s2936 + $0x60] sm:$0xff]
    %v2950 = vld [vmem:[%s2936 + $0x68] sm:$0xff]
    %v2951 = vld [vmem:[%s2936 + $0x70] sm:$0xff]
    %v2952 = vld [vmem:[%s2936 + $0x78] sm:$0xff]
    %v2953 = vld [vmem:[%s2936 + $0x80] sm:$0xff]
    %v2954 = vld [vmem:[%s2936 + $0x88] sm:$0xff]
    %v2955 = vld [vmem:[%s2936 + $0x90] sm:$0xff]
    %v2956 = vld [vmem:[%s2936 + $0x98] sm:$0xff]
    %v2957 = vld [vmem:[%s2936 + $0xa0] sm:$0xff]
    %v2958 = vld [vmem:[%s2936 + $0xa8] sm:$0xff]
    %v2959 = vld [vmem:[%s2936 + $0xb0] sm:$0xff]
    %v2960 = vld [vmem:[%s2936 + $0xb8] sm:$0xff]
    %v2961 = vld [vmem:[%s2936 + $0xc0] sm:$0xff]
    %v2962 = vld [vmem:[%s2936 + $0xc8] sm:$0xff]
    %v2963 = vld [vmem:[%s2936 + $0xd0] sm:$0xff]
    %v2964 = vld [vmem:[%s2936 + $0xd8] sm:$0xff]
    %v2965 = vld [vmem:[%s2936 + $0xe0] sm:$0xff]
    %v2966 = vld [vmem:[%s2936 + $0xe8] sm:$0xff]
    %v2967 = vld [vmem:[%s2936 + $0xf0] sm:$0xff]
    %v2968 = vld [vmem:[%s2936 + $0xf8] sm:$0xff]
    %s2969 = scalar_lea.vmem %s11, 2
    %v2970 = vld [vmem:[%s2969] sm:$0x3]
    %v2972 = vlaneseq
    %v2973 = vshrl.u32 %v2972, 7
    %v2974 = vsub.s32 0, %v2973
    %v2975 = vrot.slane %v2970, %v2974
    %v2976 = vlaneseq
    %v2977 = vshrl.u32 %v2976, 7
    %v2978 = vsub.s32 1, %v2977
    %v2979 = vrot.slane %v2970, %v2978
    %2982 = vmatprep.subr.mxu0 %v2968
    %2983 = vmatpush1.msra.mxu0 %v2967
    %2984 = vmatprep.subr.mxu0 %v2966
    %2985 = vmatpush1.msra.mxu0 %v2965
    %2986 = vmatprep.subr.mxu0 %v2964
    %2987 = vmatpush1.msra.mxu0 %v2963
    %2988 = vmatprep.subr.mxu0 %v2962
    %2989 = vmatpush1.msra.mxu0 %v2961
    %2990 = vmatprep.subr.mxu0 %v2960
    %2991 = vmatpush1.msra.mxu0 %v2959
    %2992 = vmatprep.subr.mxu0 %v2958
    %2993 = vmatpush1.msra.mxu0 %v2957
    %2994 = vmatprep.subr.mxu0 %v2956
    %2995 = vmatpush1.msra.mxu0 %v2955
    %2996 = vmatprep.subr.mxu0 %v2954
    %2997 = vmatpush1.msra.mxu0 %v2953
    %2998 = vmatprep.subr.mxu0 %v2952
    %2999 = vmatpush1.msra.mxu0 %v2951
    %3000 = vmatprep.subr.mxu0 %v2950
    %3001 = vmatpush1.msra.mxu0 %v2949
    %3002 = vmatprep.subr.mxu0 %v2948
    %3003 = vmatpush1.msra.mxu0 %v2947
    %3004 = vmatprep.subr.mxu0 %v2946
    %3005 = vmatpush1.msra.mxu0 %v2945
    %3006 = vmatprep.subr.mxu0 %v2944
    %3007 = vmatpush1.msra.mxu0 %v2943
    %3008 = vmatprep.subr.mxu0 %v2942
    %3009 = vmatpush1.msra.mxu0 %v2941
    %3010 = vmatprep.subr.mxu0 %v2940
    %3011 = vmatpush1.msra.mxu0 %v2939
    %3012 = vmatprep.subr.mxu0 %v2938
    %3013 = vmatpush1.msra.mxu0 %v2937
    %3014 = vmatprep.subr.mxu0 0.0
    %3015 = vmatpush2.msra.mxu0 0.0
    %3016 = vmatprep.subr.mxu0 0.0
    %3017 = vmatpush2.msra.mxu0 0.0
    %3018 = vmatprep.subr.mxu0 0.0
    %3019 = vmatpush2.msra.mxu0 0.0
    %3020 = vmatprep.subr.mxu0 0.0
    %3021 = vmatpush2.msra.mxu0 0.0
    %3022 = vmatprep.subr.mxu0 0.0
    %3023 = vmatpush2.msra.mxu0 0.0
    %3024 = vmatprep.subr.mxu0 0.0
    %3025 = vmatpush2.msra.mxu0 0.0
    %3026 = vmatprep.subr.mxu0 0.0
    %3027 = vmatpush2.msra.mxu0 0.0
    %3028 = vmatprep.subr.mxu0 0.0
    %3029 = vmatpush2.msra.mxu0 0.0
    %3030 = vmatprep.subr.mxu0 0.0
    %3031 = vmatpush2.msra.mxu0 0.0
    %3032 = vmatprep.subr.mxu0 0.0
    %3033 = vmatpush2.msra.mxu0 0.0
    %3034 = vmatprep.subr.mxu0 0.0
    %3035 = vmatpush2.msra.mxu0 0.0
    %3036 = vmatprep.subr.mxu0 0.0
    %3037 = vmatpush2.msra.mxu0 0.0
    %3038 = vmatprep.subr.mxu0 0.0
    %3039 = vmatpush2.msra.mxu0 0.0
    %3040 = vmatprep.subr.mxu0 0.0
    %3041 = vmatpush2.msra.mxu0 0.0
    %3042 = vmatprep.subr.mxu0 0.0
    %3043 = vmatpush2.msra.mxu0 0.0
    %3044 = vmatprep.subr.mxu0 0.0
    %3045 = vmatpush2.msra.mxu0 0.0
    %3046 = vmatprep.mubr.f32.mxu0 0.0
    %3047 = vmatmul.mubr.f32.gmra.mxu0 %v2934
    %v3048 = vpop.f32.mrf.mxu0
    %v3049 = vadd.f32 %v2975, %v3048
    %v3050 = vpop.f32.mrf.mxu0
    %v3051 = vadd.f32 %v2979, %v3050
    %3052 = vmatprep.mubr.f32.mxu0 0.0
    %3053 = vmatmul.mubr.f32.gmra.mxu0 %v2935
    %v3054 = vpop.f32.mrf.mxu0
    %v3055 = vadd.f32 %v2975, %v3054
    %v3056 = vpop.f32.mrf.mxu0
    %v3057 = vadd.f32 %v2979, %v3056
    %3058 = vdwg.mxu0
    %v3059 = vmul.f32 %v3049, 0.5
    %v3060 = vmul.f32 %v3051, 0.5
    %v3061 = vmul.f32 %v3055, 0.5
    %v3062 = vmul.f32 %v3057, 0.5
    %v3063 = vmul.f32 %v3049, 0.70710677
    %v3064 = vmul.f32 %v3051, 0.70710677
    %v3065 = vmul.f32 %v3055, 0.70710677
    %v3066 = vmul.f32 %v3057, 0.70710677
    %v3067 = vand.u32 2147483647, %v3063
    %v3068 = vand.u32 2147483647, %v3064
    %v3069 = vand.u32 2147483647, %v3065
    %v3070 = vand.u32 2147483647, %v3066
    %v3071 = vmul.f32 %v3067, 0.3275911
    %v3072 = vmul.f32 %v3068, 0.3275911
    %v3073 = vmul.f32 %v3069, 0.3275911
    %v3074 = vmul.f32 %v3070, 0.3275911
    %v3075 = vadd.f32 %v3071, 1.0
    %v3076 = vadd.f32 %v3072, 1.0
    %v3077 = vadd.f32 %v3073, 1.0
    %v3078 = vadd.f32 %v3074, 1.0
    %v3079 = vrcp.pop %v3075
    %v3080 = vmul.f32 1.0, %v3079
    %v3081 = vrcp.pop %v3076
    %v3082 = vmul.f32 1.0, %v3081
    %v3083 = vrcp.pop %v3077
    %v3084 = vmul.f32 1.0, %v3083
    %v3085 = vrcp.pop %v3078
    %v3086 = vmul.f32 1.0, %v3085
    %v3087 = vmul.f32 %v3080, 1.0614054
    %v3088 = vmul.f32 %v3082, 1.0614054
    %v3089 = vmul.f32 %v3084, 1.0614054
    %v3090 = vmul.f32 %v3086, 1.0614054
    %v3091 = vadd.f32 %v3087, -1.4531521
    %v3092 = vadd.f32 %v3088, -1.4531521
    %v3093 = vadd.f32 %v3089, -1.4531521
    %v3094 = vadd.f32 %v3090, -1.4531521
    %v3095 = vmul.f32 %v3091, %v3080
    %v3096 = vmul.f32 %v3092, %v3082
    %v3097 = vmul.f32 %v3093, %v3084
    %v3098 = vmul.f32 %v3094, %v3086
    %v3099 = vadd.f32 %v3095, 1.4214138
    %v3100 = vadd.f32 %v3096, 1.4214138
    %v3101 = vadd.f32 %v3097, 1.4214138
    %v3102 = vadd.f32 %v3098, 1.4214138
    %v3103 = vmul.f32 %v3099, %v3080
    %v3104 = vmul.f32 %v3100, %v3082
    %v3105 = vmul.f32 %v3101, %v3084
    %v3106 = vmul.f32 %v3102, %v3086
    %v3107 = vadd.f32 %v3103, -0.28449672
    %v3108 = vadd.f32 %v3104, -0.28449672
    %v3109 = vadd.f32 %v3105, -0.28449672
    %v3110 = vadd.f32 %v3106, -0.28449672
    %v3111 = vmul.f32 %v3107, %v3080
    %v3112 = vmul.f32 %v3108, %v3082
    %v3113 = vmul.f32 %v3109, %v3084
    %v3114 = vmul.f32 %v3110, %v3086
    %v3115 = vadd.f32 %v3111, 0.2548296
    %v3116 = vadd.f32 %v3112, 0.2548296
    %v3117 = vadd.f32 %v3113, 0.2548296
    %v3118 = vadd.f32 %v3114, 0.2548296
    %v3119 = vmul.f32 %v3115, %v3080
    %v3120 = vmul.f32 %v3116, %v3082
    %v3121 = vmul.f32 %v3117, %v3084
    %v3122 = vmul.f32 %v3118, %v3086
    %v3123 = vsub.f32 0.0, %v3067
    %v3124 = vsub.f32 0.0, %v3068
    %v3125 = vsub.f32 0.0, %v3069
    %v3126 = vsub.f32 0.0, %v3070
    %v3127 = vmul.f32 %v3123, %v3067
    %v3128 = vmul.f32 %v3124, %v3068
    %v3129 = vmul.f32 %v3125, %v3069
    %v3130 = vmul.f32 %v3126, %v3070
    %v3131 = vmul.f32 %v3127, 1.442695
    %v3132 = vpow.pop %v3131
    %v3133 = vmul.f32 %v3128, 1.442695
    %v3134 = vpow.pop %v3133
    %v3135 = vmul.f32 %v3129, 1.442695
    %v3136 = vpow.pop %v3135
    %v3137 = vmul.f32 %v3130, 1.442695
    %v3138 = vpow.pop %v3137
    %v3139 = vmul.f32 %v3119, %v3132
    %v3140 = vmul.f32 %v3120, %v3134
    %v3141 = vmul.f32 %v3121, %v3136
    %v3142 = vmul.f32 %v3122, %v3138
    %v3143 = vsub.f32 1.0, %v3139
    %v3144 = vsub.f32 1.0, %v3140
    %v3145 = vsub.f32 1.0, %v3141
    %v3146 = vsub.f32 1.0, %v3142
    %vm3147 = vcmp.ge.f32.partialorder %v3063, 0.0
    %vm3148 = vcmp.ge.f32.partialorder %v3064, 0.0
    %vm3149 = vcmp.ge.f32.partialorder %v3065, 0.0
    %vm3150 = vcmp.ge.f32.partialorder %v3066, 0.0
    %v3151 = vsub.f32 0.0, %v3143
    %v3152 = vsub.f32 0.0, %v3144
    %v3153 = vsub.f32 0.0, %v3145
    %v3154 = vsub.f32 0.0, %v3146
    %v3155 = vsel %vm3147, %v3143, %v3151
    %v3156 = vsel %vm3148, %v3144, %v3152
    %v3157 = vsel %vm3149, %v3145, %v3153
    %v3158 = vsel %vm3150, %v3146, %v3154
    %v3159 = vadd.f32 %v3155, 1.0
    %v3160 = vadd.f32 %v3156, 1.0
    %v3161 = vadd.f32 %v3157, 1.0
    %v3162 = vadd.f32 %v3158, 1.0
    %v3163 = vmul.f32 %v3059, %v3159
    %v3164 = vmul.f32 %v3060, %v3160
    %v3165 = vmul.f32 %v3061, %v3161
    %v3166 = vmul.f32 %v3062, %v3162
    %s3167 = scalar_lea.vmem [#allocation7], 256
    %v3168 = vld [vmem:[%s3167] sm:$0xff]
    %v3169 = vld [vmem:[%s3167 + $0x8] sm:$0xff]
    %v3170 = vld [vmem:[%s3167 + $0x10] sm:$0xff]
    %v3171 = vld [vmem:[%s3167 + $0x18] sm:$0xff]
    %v3172 = vld [vmem:[%s3167 + $0x20] sm:$0xff]
    %v3173 = vld [vmem:[%s3167 + $0x28] sm:$0xff]
    %v3174 = vld [vmem:[%s3167 + $0x30] sm:$0xff]
    %v3175 = vld [vmem:[%s3167 + $0x38] sm:$0xff]
    %v3176 = vld [vmem:[%s3167 + $0x40] sm:$0xff]
    %v3177 = vld [vmem:[%s3167 + $0x48] sm:$0xff]
    %v3178 = vld [vmem:[%s3167 + $0x50] sm:$0xff]
    %v3179 = vld [vmem:[%s3167 + $0x58] sm:$0xff]
    %v3180 = vld [vmem:[%s3167 + $0x60] sm:$0xff]
    %v3181 = vld [vmem:[%s3167 + $0x68] sm:$0xff]
    %v3182 = vld [vmem:[%s3167 + $0x70] sm:$0xff]
    %v3183 = vld [vmem:[%s3167 + $0x78] sm:$0xff]
    %v3184 = vld [vmem:[%s3167 + $0x80] sm:$0xff]
    %v3185 = vld [vmem:[%s3167 + $0x88] sm:$0xff]
    %v3186 = vld [vmem:[%s3167 + $0x90] sm:$0xff]
    %v3187 = vld [vmem:[%s3167 + $0x98] sm:$0xff]
    %v3188 = vld [vmem:[%s3167 + $0xa0] sm:$0xff]
    %v3189 = vld [vmem:[%s3167 + $0xa8] sm:$0xff]
    %v3190 = vld [vmem:[%s3167 + $0xb0] sm:$0xff]
    %v3191 = vld [vmem:[%s3167 + $0xb8] sm:$0xff]
    %v3192 = vld [vmem:[%s3167 + $0xc0] sm:$0xff]
    %v3193 = vld [vmem:[%s3167 + $0xc8] sm:$0xff]
    %v3194 = vld [vmem:[%s3167 + $0xd0] sm:$0xff]
    %v3195 = vld [vmem:[%s3167 + $0xd8] sm:$0xff]
    %v3196 = vld [vmem:[%s3167 + $0xe0] sm:$0xff]
    %v3197 = vld [vmem:[%s3167 + $0xe8] sm:$0xff]
    %v3198 = vld [vmem:[%s3167 + $0xf0] sm:$0xff]
    %v3199 = vld [vmem:[%s3167 + $0xf8] sm:$0xff]
    %3200 = vmatprep.subr.mxu0 0.0
    %3201 = vmatpush1.msra.mxu0 %v3183
    %3202 = vmatprep.subr.mxu0 0.0
    %3203 = vmatpush1.msra.mxu0 %v3182
    %3204 = vmatprep.subr.mxu0 0.0
    %3205 = vmatpush1.msra.mxu0 %v3181
    %3206 = vmatprep.subr.mxu0 0.0
    %3207 = vmatpush1.msra.mxu0 %v3180
    %3208 = vmatprep.subr.mxu0 0.0
    %3209 = vmatpush1.msra.mxu0 %v3179
    %3210 = vmatprep.subr.mxu0 0.0
    %3211 = vmatpush1.msra.mxu0 %v3178
    %3212 = vmatprep.subr.mxu0 0.0
    %3213 = vmatpush1.msra.mxu0 %v3177
    %3214 = vmatprep.subr.mxu0 0.0
    %3215 = vmatpush1.msra.mxu0 %v3176
    %3216 = vmatprep.subr.mxu0 0.0
    %3217 = vmatpush1.msra.mxu0 %v3175
    %3218 = vmatprep.subr.mxu0 0.0
    %3219 = vmatpush1.msra.mxu0 %v3174
    %3220 = vmatprep.subr.mxu0 0.0
    %3221 = vmatpush1.msra.mxu0 %v3173
    %3222 = vmatprep.subr.mxu0 0.0
    %3223 = vmatpush1.msra.mxu0 %v3172
    %3224 = vmatprep.subr.mxu0 0.0
    %3225 = vmatpush1.msra.mxu0 %v3171
    %3226 = vmatprep.subr.mxu0 0.0
    %3227 = vmatpush1.msra.mxu0 %v3170
    %3228 = vmatprep.subr.mxu0 0.0
    %3229 = vmatpush1.msra.mxu0 %v3169
    %3230 = vmatprep.subr.mxu0 0.0
    %3231 = vmatpush1.msra.mxu0 %v3168
    %3232 = vmatprep.subr.mxu0 0.0
    %3233 = vmatpush2.msra.mxu0 %v3199
    %3234 = vmatprep.subr.mxu0 0.0
    %3235 = vmatpush2.msra.mxu0 %v3198
    %3236 = vmatprep.subr.mxu0 0.0
    %3237 = vmatpush2.msra.mxu0 %v3197
    %3238 = vmatprep.subr.mxu0 0.0
    %3239 = vmatpush2.msra.mxu0 %v3196
    %3240 = vmatprep.subr.mxu0 0.0
    %3241 = vmatpush2.msra.mxu0 %v3195
    %3242 = vmatprep.subr.mxu0 0.0
    %3243 = vmatpush2.msra.mxu0 %v3194
    %3244 = vmatprep.subr.mxu0 0.0
    %3245 = vmatpush2.msra.mxu0 %v3193
    %3246 = vmatprep.subr.mxu0 0.0
    %3247 = vmatpush2.msra.mxu0 %v3192
    %3248 = vmatprep.subr.mxu0 0.0
    %3249 = vmatpush2.msra.mxu0 %v3191
    %3250 = vmatprep.subr.mxu0 0.0
    %3251 = vmatpush2.msra.mxu0 %v3190
    %3252 = vmatprep.subr.mxu0 0.0
    %3253 = vmatpush2.msra.mxu0 %v3189
    %3254 = vmatprep.subr.mxu0 0.0
    %3255 = vmatpush2.msra.mxu0 %v3188
    %3256 = vmatprep.subr.mxu0 0.0
    %3257 = vmatpush2.msra.mxu0 %v3187
    %3258 = vmatprep.subr.mxu0 0.0
    %3259 = vmatpush2.msra.mxu0 %v3186
    %3260 = vmatprep.subr.mxu0 0.0
    %3261 = vmatpush2.msra.mxu0 %v3185
    %3262 = vmatprep.subr.mxu0 0.0
    %3263 = vmatpush2.msra.mxu0 %v3184
    %3264 = vmatprep.mubr.f32.mxu0 %v3164
    %3265 = vmatmul.mubr.f32.gmra.mxu0 %v3163
    %v3266 = vpop.f32.mrf.mxu0
    %v3267 = vadd.f32 0.0, %v3266
    %v3268 = vpop.f32.mrf.mxu0
    %3269 = vmatprep.mubr.f32.mxu0 %v3166
    %3270 = vmatmul.mubr.f32.gmra.mxu0 %v3165
    %v3271 = vpop.f32.mrf.mxu0
    %v3272 = vadd.f32 0.0, %v3271
    %v3273 = vpop.f32.mrf.mxu0
    %3274 = vdwg.mxu0
    %v3275 = vadd.f32 %v2892, %v3267
    %v3276 = vadd.f32 %v2893, %v3272
    %s3277 = scalar_lea.vmem %s13, 1
    %v3278 = vld [vmem:[%s3277] sm:$0x1]
    %v3280 = vlaneseq
    %v3281 = vshrl.u32 %v3280, 7
    %v3282 = vsub.s32 0, %v3281
    %v3283 = vrot.slane %v3278, %v3282
    %v3285 = vadd.f32 %v3275, %v3283
    %v3286 = vadd.f32 %v3276, %v3283
    %v3287 = vld [vmem:[%s14] sm:$0x1]
    %v3288 = vld [vmem:[%s15] sm:$0x1]
    %3289 = vadd.xlane.f32.xlu0 %v3285
    %v3290 = vpop.xlane.xlu0 %3289
    %3291 = vadd.xlane.f32.xlu0 %v3286
    %v3292 = vpop.xlane.xlu0 %3291
    %v3293 = vmul.f32 %v3290, %v108
    %v3294 = vmul.f32 %v3292, %v108
    %v3295 = vsub.f32 %v3285, %v3293
    %v3296 = vsub.f32 %v3286, %v3294
    %v3297 = vmul.f32 %v3295, %v3295
    %v3298 = vmul.f32 %v3296, %v3296
    %3299 = vadd.xlane.f32.xlu0 %v3297
    %v3300 = vpop.xlane.xlu0 %3299
    %3301 = vadd.xlane.f32.xlu0 %v3298
    %v3302 = vpop.xlane.xlu0 %3301
    %v3303 = vmul.f32 %v3300, %v108
    %v3304 = vmul.f32 %v3302, %v108
    %v3305 = vadd.f32 %v3303, 1e-05
    %v3306 = vadd.f32 %v3304, 1e-05
    %v3307 = vrsqrt.pop %v3305
    %v3308 = vrsqrt.pop %v3306
    %v3309 = vmul.f32 %v3295, %v3307
    %v3310 = vmul.f32 %v3296, %v3308
    %v3312 = vlaneseq
    %v3313 = vshrl.u32 %v3312, 7
    %v3314 = vsub.s32 0, %v3313
    %v3315 = vrot.slane %v3287, %v3314
    %v3317 = vmul.f32 %v3309, %v3315
    %v3318 = vmul.f32 %v3310, %v3315
    %v3320 = vlaneseq
    %v3321 = vshrl.u32 %v3320, 7
    %v3322 = vsub.s32 0, %v3321
    %v3323 = vrot.slane %v3288, %v3322
    %v3325 = vadd.f32 %v3317, %v3323
    %v3326 = vadd.f32 %v3318, %v3323
    %v3327 = vld [vmem:[%s16] sm:$0xff]
    %v3328 = vld [vmem:[%s16 + $0x8] sm:$0xff]
    %v3329 = vld [vmem:[%s16 + $0x10] sm:$0xff]
    %v3330 = vld [vmem:[%s16 + $0x18] sm:$0xff]
    %v3331 = vld [vmem:[%s16 + $0x20] sm:$0xff]
    %v3332 = vld [vmem:[%s16 + $0x28] sm:$0xff]
    %v3333 = vld [vmem:[%s16 + $0x30] sm:$0xff]
    %v3334 = vld [vmem:[%s16 + $0x38] sm:$0xff]
    %v3335 = vld [vmem:[%s16 + $0x40] sm:$0xff]
    %v3336 = vld [vmem:[%s16 + $0x48] sm:$0xff]
    %v3337 = vld [vmem:[%s16 + $0x50] sm:$0xff]
    %v3338 = vld [vmem:[%s16 + $0x58] sm:$0xff]
    %v3339 = vld [vmem:[%s16 + $0x60] sm:$0xff]
    %v3340 = vld [vmem:[%s16 + $0x68] sm:$0xff]
    %v3341 = vld [vmem:[%s16 + $0x70] sm:$0xff]
    %v3342 = vld [vmem:[%s16 + $0x78] sm:$0xff]
    %3343 = vmatprep.subr.mxu0 0.0
    %3344 = vmatpush1.xpose.msra.mxu0 %v3342
    %3345 = vmatprep.subr.mxu0 0.0
    %3346 = vmatpush1.xpose.msra.mxu0 %v3341
    %3347 = vmatprep.subr.mxu0 0.0
    %3348 = vmatpush1.xpose.msra.mxu0 %v3340
    %3349 = vmatprep.subr.mxu0 0.0
    %3350 = vmatpush1.xpose.msra.mxu0 %v3339
    %3351 = vmatprep.subr.mxu0 0.0
    %3352 = vmatpush1.xpose.msra.mxu0 %v3338
    %3353 = vmatprep.subr.mxu0 0.0
    %3354 = vmatpush1.xpose.msra.mxu0 %v3337
    %3355 = vmatprep.subr.mxu0 0.0
    %3356 = vmatpush1.xpose.msra.mxu0 %v3336
    %3357 = vmatprep.subr.mxu0 0.0
    %3358 = vmatpush1.xpose.msra.mxu0 %v3335
    %3359 = vmatprep.subr.mxu0 0.0
    %3360 = vmatpush1.xpose.msra.mxu0 %v3334
    %3361 = vmatprep.subr.mxu0 0.0
    %3362 = vmatpush1.xpose.msra.mxu0 %v3333
    %3363 = vmatprep.subr.mxu0 0.0
    %3364 = vmatpush1.xpose.msra.mxu0 %v3332
    %3365 = vmatprep.subr.mxu0 0.0
    %3366 = vmatpush1.xpose.msra.mxu0 %v3331
    %3367 = vmatprep.subr.mxu0 0.0
    %3368 = vmatpush1.xpose.msra.mxu0 %v3330
    %3369 = vmatprep.subr.mxu0 0.0
    %3370 = vmatpush1.xpose.msra.mxu0 %v3329
    %3371 = vmatprep.subr.mxu0 0.0
    %3372 = vmatpush1.xpose.msra.mxu0 %v3328
    %3373 = vmatprep.subr.mxu0 0.0
    %3374 = vmatpush1.xpose.msra.mxu0 %v3327
    %3375 = vmatprep.subr.mxu0 0.0
    %3376 = vmatpush2.xpose.msra.mxu0 0.0
    %3377 = vmatprep.subr.mxu0 0.0
    %3378 = vmatpush2.xpose.msra.mxu0 0.0
    %3379 = vmatprep.subr.mxu0 0.0
    %3380 = vmatpush2.xpose.msra.mxu0 0.0
    %3381 = vmatprep.subr.mxu0 0.0
    %3382 = vmatpush2.xpose.msra.mxu0 0.0
    %3383 = vmatprep.subr.mxu0 0.0
    %3384 = vmatpush2.xpose.msra.mxu0 0.0
    %3385 = vmatprep.subr.mxu0 0.0
    %3386 = vmatpush2.xpose.msra.mxu0 0.0
    %3387 = vmatprep.subr.mxu0 0.0
    %3388 = vmatpush2.xpose.msra.mxu0 0.0
    %3389 = vmatprep.subr.mxu0 0.0
    %3390 = vmatpush2.xpose.msra.mxu0 0.0
    %3391 = vmatprep.subr.mxu0 0.0
    %3392 = vmatpush2.xpose.msra.mxu0 0.0
    %3393 = vmatprep.subr.mxu0 0.0
    %3394 = vmatpush2.xpose.msra.mxu0 0.0
    %3395 = vmatprep.subr.mxu0 0.0
    %3396 = vmatpush2.xpose.msra.mxu0 0.0
    %3397 = vmatprep.subr.mxu0 0.0
    %3398 = vmatpush2.xpose.msra.mxu0 0.0
    %3399 = vmatprep.subr.mxu0 0.0
    %3400 = vmatpush2.xpose.msra.mxu0 0.0
    %3401 = vmatprep.subr.mxu0 0.0
    %3402 = vmatpush2.xpose.msra.mxu0 0.0
    %3403 = vmatprep.subr.mxu0 0.0
    %3404 = vmatpush2.xpose.msra.mxu0 0.0
    %3405 = vmatprep.subr.mxu0 0.0
    %3406 = vmatpush2.xpose.msra.mxu0 0.0
    %3407 = vmatprep.mubr.f32.mxu0 0.0
    %3408 = vmatmul.mubr.f32.gmra.mxu0 %v3325
    %v3409 = vpop.f32.mrf.mxu0
    %v3410 = vadd.f32 0.0, %v3409
    %v3411 = vpop.f32.mrf.mxu0
    %3412 = vmatprep.mubr.f32.mxu0 0.0
    %3413 = vmatmul.mubr.f32.gmra.mxu0 %v3326
    %v3414 = vpop.f32.mrf.mxu0
    %v3415 = vadd.f32 0.0, %v3414
    %v3416 = vpop.f32.mrf.mxu0
    %3417 = vdwg.mxu0
    %3418 = vst [vmem:[#allocation8] sm:$0xff] %v3410
    %3419 = vst [vmem:[#allocation8 + $0x8] sm:$0xff] %v3415
    // Predicated region
    $region82: #{gpt_forward.1} parent=1 // pred_check
      _
    $region83: #{gpt_forward.1} parent=1 // pred_check_branch
      %3421 = sbr.rel (0) target = $region85
    $region84: #{gpt_forward.1} parent=1 // pred_region
      %s3423 = ssub.s32 256, 256
      %3424 = vsyncadd [#allocation4], %s3423
      %s3425 = sshll.u32 [#allocation8], 4
      %s3426 = int_to_ptr.vmem [resolvable:$true] %s3425
      %3431 = dma.vmem_to_hbm [thread:$0]  %s3426, 256, %s17, [#allocation4], 128, 128, 8
    $region85: #{gpt_forward.1} parent=1 // pred_fallthru
      _
    // Predicated region
    $region86: #{gpt_forward.1} parent=1 // pred_check
      _
    $region87: #{gpt_forward.1} parent=1 // pred_check_branch
      %3433 = sbr.rel (0) target = $region89
    $region88: #{gpt_forward.1} parent=1 // pred_region
      %3434 = dma.done [#allocation4], 256
    $region89: #{gpt_forward.1} parent=1 // pred_fallthru
      _
    %3435 = vsyncpa [#allocation3], 1
    %3436 = vsyncpa [#allocation6], 1
    %3437 = vsyncpa [#allocation4], 1

</llo_original>
